<compile_context>
chip_gen: v6e
topology: v6e:2x2x1
jax: 0.10.0
libtpu: 0.0.40
codegen_flags: <defaults>
</compile_context>

<pallas_src>
import functools

import jax
import jax.numpy as jnp
from jax.experimental import pallas as pl
from jax.experimental.pallas import tpu as pltpu

EPS = 1e-5


# ----------------------------------------------------------------------------- kernel

def batch_net_kernel(x_ref,
                     w1_ref, g1_ref, be1_ref,
                     w2_ref, g2_ref, be2_ref,
                     w3_ref, b3_ref,
                     o_ref,
                     h1_cache, h2_cache,
                     s1a_ref, s1b_ref, s2a_ref, s2b_ref,
                     *, batch_size, tile_b):
    phase = pl.program_id(0)
    tile = pl.program_id(1)
    last_tile = pl.num_programs(1) - 1
    inv_b = 1.0 / float(batch_size)
    row0 = pl.multiple_of(tile * tile_b, tile_b)   # this tile's rows in the VMEM caches

    def finalize(sum_ref, sq_ref, g_ref, be_ref):
        # sum/sumsq -> folded BN (scale, shift), in place.
        mean = sum_ref[...] * inv_b
        var = jnp.maximum(sq_ref[...] * inv_b - mean * mean, 0.0)   # clamp: no NaN rsqrt
        scale = jax.lax.rsqrt(var + EPS) * g_ref[...]
        sum_ref[...] = scale                          # sum   -> scale
        sq_ref[...] = be_ref[...] - mean * scale      # sumsq -> shift

    def bn_relu(h, scale_ref, shift_ref):
        # single f32 FMA + max (v5e-friendly: f32-only VPU path)
        return jnp.maximum(h * scale_ref[...] + shift_ref[...], 0.0)

    # ---------------- phase 0: layer-1 matmul, cache h1, BN1 statistics ----------------
    @pl.when(phase == 0)
    def _():
        @pl.when(tile == 0)
        def _():
            s1a_ref[...] = jnp.zeros_like(s1a_ref)
            s1b_ref[...] = jnp.zeros_like(s1b_ref)

        h1 = jnp.dot(x_ref[...], w1_ref[...], preferred_element_type=jnp.float32)
        h1_cache[pl.ds(row0, tile_b), :] = h1
        s1a_ref[...] += jnp.sum(h1, axis=0, keepdims=True)
        s1b_ref[...] += jnp.sum(h1 * h1, axis=0, keepdims=True)

        @pl.when(tile == last_tile)
        def _():
            finalize(s1a_ref, s1b_ref, g1_ref, be1_ref)

    # ---------------- phase 1: BN1+ReLU from cache, layer-2 matmul, BN2 statistics -----
    @pl.when(phase == 1)
    def _():
        @pl.when(tile == 0)
        def _():
            s2a_ref[...] = jnp.zeros_like(s2a_ref)
            s2b_ref[...] = jnp.zeros_like(s2b_ref)

        h1 = h1_cache[pl.ds(row0, tile_b), :]
        a1 = bn_relu(h1, s1a_ref, s1b_ref).astype(jnp.bfloat16)
        h2 = jnp.dot(a1, w2_ref[...], preferred_element_type=jnp.float32)
        h2_cache[pl.ds(row0, tile_b), :] = h2
        s2a_ref[...] += jnp.sum(h2, axis=0, keepdims=True)
        s2b_ref[...] += jnp.sum(h2 * h2, axis=0, keepdims=True)

        @pl.when(tile == last_tile)
        def _():
            finalize(s2a_ref, s2b_ref, g2_ref, be2_ref)

    # ---------------- phase 2: BN2+ReLU from cache, final linear, write output ---------
    @pl.when(phase == 2)
    def _():
        h2 = h2_cache[pl.ds(row0, tile_b), :]
        a2 = bn_relu(h2, s2a_ref, s2b_ref).astype(jnp.bfloat16)
        out = jnp.dot(a2, w3_ref[...], preferred_element_type=jnp.float32) + b3_ref[...]
        o_ref[...] = out.astype(o_ref.dtype)


# ----------------------------------------------------------------------------- wrapper

def _pad_to_multiple(n, m=128):
    return ((n + m - 1) // m) * m


def _pad2(a, rows, cols, value=0.0):
    return jnp.pad(a, ((0, rows - a.shape[0]), (0, cols - a.shape[1])),
                   constant_values=value)


def _pick_batch_tile(batch):
    # Largest divisor of B that is a multiple of 16 (bf16 sublane packing) and <= 1024
    # (fills the 256-row MXU on v6e/v7x, amortizes grid-step overhead); fall back to the
    # full batch (block == full dim is always legal).
    best = None
    for d in range(16, min(batch, 1024) + 1, 16):
        if batch % d == 0:
            best = d
    return best if best is not None else batch


def _vmem_cap_bytes():
    # Generation-aware cap (~3/4 of physical VMEM); conservative v7x fallback.
    try:
        return int(pltpu.get_tpu_info().vmem_capacity_bytes) * 3 // 4
    except Exception:
        return 48 << 20


def _vmem_budget_bytes(batch, tile_b, inp, h1p, h2p, outp, cap):
    bf, f32 = 2, 4
    cache = batch * (h1p + h2p) * f32                         # persistent h1/h2 caches
    stream = 2 * (tile_b * inp * bf + tile_b * outp * f32)    # double-buffered x / out
    # NOTE: constant-index weight blocks still get double-buffered; at realistic hidden
    # dims mark them pipeline_mode=pl.Buffered(1) to halve their residency.
    weights = 2 * bf * (inp * h1p + h1p * h2p + h2p * outp)
    vectors = 2 * f32 * (2 * h1p + 2 * h2p + outp)            # gammas/betas/b3
    stats = 2 * f32 * (h1p + h2p)                             # scale/shift scratch
    est = cache + stream + weights + vectors + stats
    return min(cap, max(2 * int(est) + (16 << 20), 32 << 20))


def batch_net_forward(x, params, *, tile_b=None):
    (w1, _b1, g1, be1, w2, _b2, g2, be2, w3, b3) = params
    B, in_dim = x.shape
    h1_dim, h2_dim, out_dim = w1.shape[1], w2.shape[1], w3.shape[1]

    INp = _pad_to_multiple(in_dim)
    H1p = _pad_to_multiple(h1_dim)
    H2p = _pad_to_multiple(h2_dim)
    OUTp = _pad_to_multiple(out_dim)

    if tile_b is None:
        tile_b = _pick_batch_tile(B)
    assert B % tile_b == 0, "batch tile must divide the batch"
    num_tiles = B // tile_b

    vmem_cap = _vmem_cap_bytes()
    cache_bytes = B * (H1p + H2p) * 4
    assert cache_bytes <= vmem_cap // 2, (
        "activation caches too large to stay VMEM-resident; spill h2 to HBM scratch")

    # pad feature dims to 128 (lane-dense stores / full MXU tiles); bf16 matmul operands.
    # padded columns stay exactly 0 through the whole network and are sliced off at the end.
    xp = _pad2(x, B, INp).astype(jnp.bfloat16)
    w1p = _pad2(w1, INp, H1p).astype(jnp.bfloat16)
    w2p = _pad2(w2, H1p, H2p).astype(jnp.bfloat16)
    w3p = _pad2(w3, H2p, OUTp).astype(jnp.bfloat16)
    b3p = _pad2(b3, 1, OUTp)
    g1p = _pad2(g1, 1, H1p, value=1.0)
    g2p = _pad2(g2, 1, H2p, value=1.0)
    be1p = _pad2(be1, 1, H1p)
    be2p = _pad2(be2, 1, H2p)
    # NOTE: b1/b2 are intentionally NOT passed: a bias immediately before BatchNorm
    # cancels exactly in (h - mean) and does not change the variance.

    # phase-aware streams: x is only fetched during phase 0; out only advances in phase 2.
    x_map = lambda p, i: (jnp.where(p == 0, i, num_tiles - 1), 0)
    out_map = lambda p, i: (jnp.where(p == 2, i, 0), 0)
    const_map = lambda p, i: (0, 0)    # params fetched once, stay VMEM-resident

    kernel = functools.partial(batch_net_kernel, batch_size=B, tile_b=tile_b)

    out_padded = pl.pallas_call(
        kernel,
        out_shape=jax.ShapeDtypeStruct((B, OUTp), jnp.float32),
        grid_spec=pltpu.PrefetchScalarGridSpec(
            num_scalar_prefetch=0,
            grid=(3, num_tiles),
            in_specs=[
                pl.BlockSpec((tile_b, INp), x_map),        # x (streamed, phase 0 only)
                pl.BlockSpec((INp, H1p), const_map),       # w1
                pl.BlockSpec((1, H1p), const_map),         # gamma1
                pl.BlockSpec((1, H1p), const_map),         # beta1
                pl.BlockSpec((H1p, H2p), const_map),       # w2
                pl.BlockSpec((1, H2p), const_map),         # gamma2
                pl.BlockSpec((1, H2p), const_map),         # beta2
                pl.BlockSpec((H2p, OUTp), const_map),      # w3
                pl.BlockSpec((1, OUTp), const_map),        # b3
            ],
            out_specs=pl.BlockSpec((tile_b, OUTp), out_map),
            scratch_shapes=[
                pltpu.VMEM((B, H1p), jnp.float32),   # cached pre-BN layer-1 activations
                pltpu.VMEM((B, H2p), jnp.float32),   # cached pre-BN layer-2 activations
                pltpu.VMEM((1, H1p), jnp.float32),   # layer-1 sum   -> BN1 scale
                pltpu.VMEM((1, H1p), jnp.float32),   # layer-1 sumsq -> BN1 shift
                pltpu.VMEM((1, H2p), jnp.float32),   # layer-2 sum   -> BN2 scale
                pltpu.VMEM((1, H2p), jnp.float32),   # layer-2 sumsq -> BN2 shift
            ],
        ),
        compiler_params=pltpu.CompilerParams(
            dimension_semantics=("arbitrary", "arbitrary"),
            vmem_limit_bytes=_vmem_budget_bytes(B, tile_b, INp, H1p, H2p, OUTp, vmem_cap),
        ),
    )(xp, w1p, g1p, be1p, w2p, g2p, be2p, w3p, b3p)

    return out_padded[:, :out_dim]


# ----------------------------------------------------------------------------- setup / reference

def init_params(key, in_dim, h1, h2, out_dim):
    ks = jax.random.split(key, 6)

    def linear_init(kw, kb, fan_in, fan_out):
        bound = 1.0 / (fan_in ** 0.5)
        w = jax.random.uniform(kw, (fan_in, fan_out), jnp.float32, -bound, bound)
        b = jax.random.uniform(kb, (1, fan_out), jnp.float32, -bound, bound)
        return w, b

    w1, b1 = linear_init(ks[0], ks[1], in_dim, h1)
    w2, b2 = linear_init(ks[2], ks[3], h1, h2)
    w3, b3 = linear_init(ks[4], ks[5], h2, out_dim)
    # BatchNorm1d defaults: gamma=1, beta=0
    g1, be1 = jnp.ones((1, h1), jnp.float32), jnp.zeros((1, h1), jnp.float32)
    g2, be2 = jnp.ones((1, h2), jnp.float32), jnp.zeros((1, h2), jnp.float32)
    return (w1, b1, g1, be1, w2, b2, g2, be2, w3, b3)


def reference_forward(x, params):
    """Pure-JAX reference mirroring PyTorch semantics and the kernel precision policy
    (bf16 matmul operands, f32 accumulation, f32 training-mode BatchNorm). The reference
    keeps b1/b2 -- they cancel inside BatchNorm, which the kernel exploits by dropping them."""
    (w1, b1, g1, be1, w2, b2, g2, be2, w3, b3) = params

    def dot_bf16(a, w):
        return jnp.dot(a.astype(jnp.bfloat16), w.astype(jnp.bfloat16),
                       preferred_element_type=jnp.float32)

    def bn(h, g, be):
        m = h.mean(axis=0, keepdims=True)
        v = ((h - m) ** 2).mean(axis=0, keepdims=True)   # biased, like PyTorch normalization
        return (h - m) / jnp.sqrt(v + EPS) * g + be

    h = jnp.maximum(bn(dot_bf16(x, w1) + b1, g1, be1), 0.0)
    h = jnp.maximum(bn(dot_bf16(h, w2) + b2, g2, be2), 0.0)
    return dot_bf16(h, w3) + b3


# ----------------------------------------------------------------------------- main

if __name__ == "__main__":
    # Feature dims stay small (padded to 128 lanes); the batch is large enough that the
    # auto-picked 1024-row tile yields 2 tiles, exercising cross-tile BN accumulation.
    B, in_dim, h1, h2, out_dim = 2048, 16, 32, 32, 16
    key = jax.random.PRNGKey(0)
    kx, kp = jax.random.split(key)
    x = jax.random.normal(kx, (B, in_dim), jnp.float32)
    params = init_params(kp, in_dim, h1, h2, out_dim)

    out = batch_net_forward(x, params)
    out = jax.block_until_ready(out)

    ref = reference_forward(x, params)
    assert out.shape == (B, out_dim)
    max_err = float(jnp.max(jnp.abs(out - ref)))
    assert jnp.allclose(out, ref, atol=5e-2, rtol=5e-2), (
        f"mismatch vs reference (max abs err {max_err})")
    print("KERNEL_OK")
</pallas_src>

<mosaic_0001>
module attributes {stable_mosaic.version = 11 : i64} {
  func.func @batch_net_kernel(%arg0: i32, %arg1: i32, %arg2: memref<1024x128xbf16, #tpu.memory_space<vmem>>, %arg3: memref<128x128xbf16, #tpu.memory_space<vmem>>, %arg4: memref<1x128xf32, #tpu.memory_space<vmem>>, %arg5: memref<1x128xf32, #tpu.memory_space<vmem>>, %arg6: memref<128x128xbf16, #tpu.memory_space<vmem>>, %arg7: memref<1x128xf32, #tpu.memory_space<vmem>>, %arg8: memref<1x128xf32, #tpu.memory_space<vmem>>, %arg9: memref<128x128xbf16, #tpu.memory_space<vmem>>, %arg10: memref<1x128xf32, #tpu.memory_space<vmem>>, %arg11: memref<1024x128xf32, #tpu.memory_space<vmem>>, %arg12: memref<2048x128xf32, #tpu.memory_space<vmem>>, %arg13: memref<2048x128xf32, #tpu.memory_space<vmem>>, %arg14: memref<1x128xf32, #tpu.memory_space<vmem>>, %arg15: memref<1x128xf32, #tpu.memory_space<vmem>>, %arg16: memref<1x128xf32, #tpu.memory_space<vmem>>, %arg17: memref<1x128xf32, #tpu.memory_space<vmem>>) attributes {dimension_semantics = [#tpu.dimension_semantics<arbitrary>, #tpu.dimension_semantics<arbitrary>], iteration_bounds = array<i64: 3, 2>, scalar_prefetch = 0 : i64, scratch_operands = 6 : i64, tpu.core_type = #tpu.core_type<tc>, window_params = [{transform_indices = @transform_0, window_bounds = array<i64: 1024, 128>}, {pipeline_mode = #tpu.pipeline_mode<synchronous>, transform_indices = @transform_1, window_bounds = array<i64: 128, 128>}, {pipeline_mode = #tpu.pipeline_mode<synchronous>, transform_indices = @transform_2, window_bounds = array<i64: 1, 128>}, {pipeline_mode = #tpu.pipeline_mode<synchronous>, transform_indices = @transform_3, window_bounds = array<i64: 1, 128>}, {pipeline_mode = #tpu.pipeline_mode<synchronous>, transform_indices = @transform_4, window_bounds = array<i64: 128, 128>}, {pipeline_mode = #tpu.pipeline_mode<synchronous>, transform_indices = @transform_5, window_bounds = array<i64: 1, 128>}, {pipeline_mode = #tpu.pipeline_mode<synchronous>, transform_indices = @transform_6, window_bounds = array<i64: 1, 128>}, {pipeline_mode = #tpu.pipeline_mode<synchronous>, transform_indices = @transform_7, window_bounds = array<i64: 128, 128>}, {pipeline_mode = #tpu.pipeline_mode<synchronous>, transform_indices = @transform_8, window_bounds = array<i64: 1, 128>}, {transform_indices = @transform_9, window_bounds = array<i64: 1024, 128>}]} {
    %c1024_i32 = arith.constant 1024 : i32
    %0 = arith.muli %arg1, %c1024_i32 : i32
    %1 = tpu.assume_multiple %0, 1024 : i32
    %c0_i32 = arith.constant 0 : i32
    %2 = arith.cmpi eq, %arg0, %c0_i32 : i32
    %3 = arith.extui %2 : i1 to i32
    %c0_i32_0 = arith.constant 0 : i32
    %4 = arith.cmpi ne, %3, %c0_i32_0 : i32
    scf.if %4 {
      %c0_i32_3 = arith.constant 0 : i32
      %11 = arith.cmpi eq, %arg1, %c0_i32_3 : i32
      %12 = arith.extui %11 : i1 to i32
      %c0_i32_4 = arith.constant 0 : i32
      %13 = arith.cmpi ne, %12, %c0_i32_4 : i32
      scf.if %13 {
        %cst_21 = arith.constant 0.000000e+00 : f32
        %33 = vector.broadcast %cst_21 : f32 to vector<1x128xf32>
        %c0_22 = arith.constant 0 : index
        %c0_23 = arith.constant 0 : index
        %34 = vector.load %arg14[%c0_22, %c0_23] : memref<1x128xf32, #tpu.memory_space<vmem>>, vector<1x128xf32>
        tpu.vector_store %arg14[%c0_22, %c0_23], %33 {strides = array<i32>} : memref<1x128xf32, #tpu.memory_space<vmem>>, vector<1x128xf32>,
        %cst_24 = arith.constant 0.000000e+00 : f32
        %35 = vector.broadcast %cst_24 : f32 to vector<1x128xf32>
        %c0_25 = arith.constant 0 : index
        %c0_26 = arith.constant 0 : index
        %36 = vector.load %arg15[%c0_25, %c0_26] : memref<1x128xf32, #tpu.memory_space<vmem>>, vector<1x128xf32>
        tpu.vector_store %arg15[%c0_25, %c0_26], %35 {strides = array<i32>} : memref<1x128xf32, #tpu.memory_space<vmem>>, vector<1x128xf32>,
      } else {
      }
      %c0 = arith.constant 0 : index
      %c0_5 = arith.constant 0 : index
      %14 = vector.load %arg2[%c0, %c0_5] : memref<1024x128xbf16, #tpu.memory_space<vmem>>, vector<1024x128xbf16>
      %c0_6 = arith.constant 0 : index
      %c0_7 = arith.constant 0 : index
      %15 = vector.load %arg3[%c0_6, %c0_7] : memref<128x128xbf16, #tpu.memory_space<vmem>>, vector<128x128xbf16>
      %cst = arith.constant dense<0.000000e+00> : vector<1024x128xf32>
      %16 = tpu.matmul %14, %15, %cst {dimension_numbers = #tpu.dot_dimension_numbers<[1], [0], [0], [1], [0, 0, 1, 1], [], []>} : vector<1024x128xbf16>, vector<128x128xbf16>, vector<1024x128xf32> -> vector<1024x128xf32>
      %17 = arith.index_cast %1 : i32 to index
      %c0_8 = arith.constant 0 : index
      %18 = vector.load %arg12[%17, %c0_8] : memref<2048x128xf32, #tpu.memory_space<vmem>>, vector<1024x128xf32>
      tpu.vector_store %arg12[%17, %c0_8], %16 {strides = array<i32>} : memref<2048x128xf32, #tpu.memory_space<vmem>>, vector<1024x128xf32>,
      %c0_9 = arith.constant 0 : index
      %c0_10 = arith.constant 0 : index
      %19 = vector.load %arg14[%c0_9, %c0_10] : memref<1x128xf32, #tpu.memory_space<vmem>>, vector<1x128xf32>
      %cst_11 = arith.constant dense<0.000000e+00> : vector<128xf32>
      %20 = vector.multi_reduction <add>, %16, %cst_11 [0] : vector<1024x128xf32> to vector<128xf32>
      %21 = vector.shape_cast %20 : vector<128xf32> to vector<1x128xf32>
      %22 = arith.addf %19, %21 : vector<1x128xf32>
      %c0_12 = arith.constant 0 : index
      %c0_13 = arith.constant 0 : index
      %23 = vector.load %arg14[%c0_12, %c0_13] : memref<1x128xf32, #tpu.memory_space<vmem>>, vector<1x128xf32>
      tpu.vector_store %arg14[%c0_12, %c0_13], %22 {strides = array<i32>} : memref<1x128xf32, #tpu.memory_space<vmem>>, vector<1x128xf32>,
      %c0_14 = arith.constant 0 : index
      %c0_15 = arith.constant 0 : index
      %24 = vector.load %arg15[%c0_14, %c0_15] : memref<1x128xf32, #tpu.memory_space<vmem>>, vector<1x128xf32>
      %25 = arith.mulf %16, %16 : vector<1024x128xf32>
      %cst_16 = arith.constant dense<0.000000e+00> : vector<128xf32>
      %26 = vector.multi_reduction <add>, %25, %cst_16 [0] : vector<1024x128xf32> to vector<128xf32>
      %27 = vector.shape_cast %26 : vector<128xf32> to vector<1x128xf32>
      %28 = arith.addf %24, %27 : vector<1x128xf32>
      %c0_17 = arith.constant 0 : index
      %c0_18 = arith.constant 0 : index
      %29 = vector.load %arg15[%c0_17, %c0_18] : memref<1x128xf32, #tpu.memory_space<vmem>>, vector<1x128xf32>
      tpu.vector_store %arg15[%c0_17, %c0_18], %28 {strides = array<i32>} : memref<1x128xf32, #tpu.memory_space<vmem>>, vector<1x128xf32>,
      %c1_i32_19 = arith.constant 1 : i32
      %30 = arith.cmpi eq, %arg1, %c1_i32_19 : i32
      %31 = arith.extui %30 : i1 to i32
      %c0_i32_20 = arith.constant 0 : i32
      %32 = arith.cmpi ne, %31, %c0_i32_20 : i32
      scf.if %32 {
        %c0_21 = arith.constant 0 : index
        %c0_22 = arith.constant 0 : index
        %33 = vector.load %arg14[%c0_21, %c0_22] : memref<1x128xf32, #tpu.memory_space<vmem>>, vector<1x128xf32>
        %cst_23 = arith.constant 4.8828125E-4 : f32
        %34 = vector.broadcast %cst_23 : f32 to vector<1x128xf32>
        %35 = arith.mulf %33, %34 : vector<1x128xf32>
        %c0_24 = arith.constant 0 : index
        %c0_25 = arith.constant 0 : index
        %36 = vector.load %arg15[%c0_24, %c0_25] : memref<1x128xf32, #tpu.memory_space<vmem>>, vector<1x128xf32>
        %cst_26 = arith.constant 4.8828125E-4 : f32
        %37 = vector.broadcast %cst_26 : f32 to vector<1x128xf32>
        %38 = arith.mulf %36, %37 : vector<1x128xf32>
        %39 = arith.mulf %35, %35 : vector<1x128xf32>
        %40 = arith.subf %38, %39 : vector<1x128xf32>
        %cst_27 = arith.constant 0.000000e+00 : f32
        %41 = vector.broadcast %cst_27 : f32 to vector<1x128xf32>
        %42 = arith.maximumf %40, %41 : vector<1x128xf32>
        %cst_28 = arith.constant 9.99999974E-6 : f32
        %43 = vector.broadcast %cst_28 : f32 to vector<1x128xf32>
        %44 = arith.addf %42, %43 : vector<1x128xf32>
        %45 = math.rsqrt %44 : vector<1x128xf32>
        %c0_29 = arith.constant 0 : index
        %c0_30 = arith.constant 0 : index
        %46 = vector.load %arg4[%c0_29, %c0_30] : memref<1x128xf32, #tpu.memory_space<vmem>>, vector<1x128xf32>
        %47 = arith.mulf %45, %46 : vector<1x128xf32>
        %c0_31 = arith.constant 0 : index
        %c0_32 = arith.constant 0 : index
        %48 = vector.load %arg14[%c0_31, %c0_32] : memref<1x128xf32, #tpu.memory_space<vmem>>, vector<1x128xf32>
        tpu.vector_store %arg14[%c0_31, %c0_32], %47 {strides = array<i32>} : memref<1x128xf32, #tpu.memory_space<vmem>>, vector<1x128xf32>,
        %c0_33 = arith.constant 0 : index
        %c0_34 = arith.constant 0 : index
        %49 = vector.load %arg5[%c0_33, %c0_34] : memref<1x128xf32, #tpu.memory_space<vmem>>, vector<1x128xf32>
        %50 = arith.mulf %35, %47 : vector<1x128xf32>
        %51 = arith.subf %49, %50 : vector<1x128xf32>
        %c0_35 = arith.constant 0 : index
        %c0_36 = arith.constant 0 : index
        %52 = vector.load %arg15[%c0_35, %c0_36] : memref<1x128xf32, #tpu.memory_space<vmem>>, vector<1x128xf32>
        tpu.vector_store %arg15[%c0_35, %c0_36], %51 {strides = array<i32>} : memref<1x128xf32, #tpu.memory_space<vmem>>, vector<1x128xf32>,
      } else {
      }
    } else {
    }
    %c1_i32 = arith.constant 1 : i32
    %5 = arith.cmpi eq, %arg0, %c1_i32 : i32
    %6 = arith.extui %5 : i1 to i32
    %c0_i32_1 = arith.constant 0 : i32
    %7 = arith.cmpi ne, %6, %c0_i32_1 : i32
    scf.if %7 {
      %c0_i32_3 = arith.constant 0 : i32
      %11 = arith.cmpi eq, %arg1, %c0_i32_3 : i32
      %12 = arith.extui %11 : i1 to i32
      %c0_i32_4 = arith.constant 0 : i32
      %13 = arith.cmpi ne, %12, %c0_i32_4 : i32
      scf.if %13 {
        %cst_25 = arith.constant 0.000000e+00 : f32
        %43 = vector.broadcast %cst_25 : f32 to vector<1x128xf32>
        %c0_26 = arith.constant 0 : index
        %c0_27 = arith.constant 0 : index
        %44 = vector.load %arg16[%c0_26, %c0_27] : memref<1x128xf32, #tpu.memory_space<vmem>>, vector<1x128xf32>
        tpu.vector_store %arg16[%c0_26, %c0_27], %43 {strides = array<i32>} : memref<1x128xf32, #tpu.memory_space<vmem>>, vector<1x128xf32>,
        %cst_28 = arith.constant 0.000000e+00 : f32
        %45 = vector.broadcast %cst_28 : f32 to vector<1x128xf32>
        %c0_29 = arith.constant 0 : index
        %c0_30 = arith.constant 0 : index
        %46 = vector.load %arg17[%c0_29, %c0_30] : memref<1x128xf32, #tpu.memory_space<vmem>>, vector<1x128xf32>
        tpu.vector_store %arg17[%c0_29, %c0_30], %45 {strides = array<i32>} : memref<1x128xf32, #tpu.memory_space<vmem>>, vector<1x128xf32>,
      } else {
      }
      %14 = arith.index_cast %1 : i32 to index
      %c0 = arith.constant 0 : index
      %15 = vector.load %arg12[%14, %c0] : memref<2048x128xf32, #tpu.memory_space<vmem>>, vector<1024x128xf32>
      %c0_5 = arith.constant 0 : index
      %c0_6 = arith.constant 0 : index
      %16 = vector.load %arg14[%c0_5, %c0_6] : memref<1x128xf32, #tpu.memory_space<vmem>>, vector<1x128xf32>
      %17 = vector.broadcast %16 : vector<1x128xf32> to vector<1024x128xf32>
      %18 = arith.mulf %15, %17 : vector<1024x128xf32>
      %c0_7 = arith.constant 0 : index
      %c0_8 = arith.constant 0 : index
      %19 = vector.load %arg15[%c0_7, %c0_8] : memref<1x128xf32, #tpu.memory_space<vmem>>, vector<1x128xf32>
      %20 = vector.broadcast %19 : vector<1x128xf32> to vector<1024x128xf32>
      %21 = arith.addf %18, %20 : vector<1024x128xf32>
      %cst = arith.constant 0.000000e+00 : f32
      %22 = vector.broadcast %cst : f32 to vector<1024x128xf32>
      %23 = arith.maximumf %21, %22 : vector<1024x128xf32>
      %24 = arith.truncf %23 : vector<1024x128xf32> to vector<1024x128xbf16>
      %c0_9 = arith.constant 0 : index
      %c0_10 = arith.constant 0 : index
      %25 = vector.load %arg6[%c0_9, %c0_10] : memref<128x128xbf16, #tpu.memory_space<vmem>>, vector<128x128xbf16>
      %cst_11 = arith.constant dense<0.000000e+00> : vector<1024x128xf32>
      %26 = tpu.matmul %24, %25, %cst_11 {dimension_numbers = #tpu.dot_dimension_numbers<[1], [0], [0], [1], [0, 0, 1, 1], [], []>} : vector<1024x128xbf16>, vector<128x128xbf16>, vector<1024x128xf32> -> vector<1024x128xf32>
      %27 = arith.index_cast %1 : i32 to index
      %c0_12 = arith.constant 0 : index
      %28 = vector.load %arg13[%27, %c0_12] : memref<2048x128xf32, #tpu.memory_space<vmem>>, vector<1024x128xf32>
      tpu.vector_store %arg13[%27, %c0_12], %26 {strides = array<i32>} : memref<2048x128xf32, #tpu.memory_space<vmem>>, vector<1024x128xf32>,
      %c0_13 = arith.constant 0 : index
      %c0_14 = arith.constant 0 : index
      %29 = vector.load %arg16[%c0_13, %c0_14] : memref<1x128xf32, #tpu.memory_space<vmem>>, vector<1x128xf32>
      %cst_15 = arith.constant dense<0.000000e+00> : vector<128xf32>
      %30 = vector.multi_reduction <add>, %26, %cst_15 [0] : vector<1024x128xf32> to vector<128xf32>
      %31 = vector.shape_cast %30 : vector<128xf32> to vector<1x128xf32>
      %32 = arith.addf %29, %31 : vector<1x128xf32>
      %c0_16 = arith.constant 0 : index
      %c0_17 = arith.constant 0 : index
      %33 = vector.load %arg16[%c0_16, %c0_17] : memref<1x128xf32, #tpu.memory_space<vmem>>, vector<1x128xf32>
      tpu.vector_store %arg16[%c0_16, %c0_17], %32 {strides = array<i32>} : memref<1x128xf32, #tpu.memory_space<vmem>>, vector<1x128xf32>,
      %c0_18 = arith.constant 0 : index
      %c0_19 = arith.constant 0 : index
      %34 = vector.load %arg17[%c0_18, %c0_19] : memref<1x128xf32, #tpu.memory_space<vmem>>, vector<1x128xf32>
      %35 = arith.mulf %26, %26 : vector<1024x128xf32>
      %cst_20 = arith.constant dense<0.000000e+00> : vector<128xf32>
      %36 = vector.multi_reduction <add>, %35, %cst_20 [0] : vector<1024x128xf32> to vector<128xf32>
      %37 = vector.shape_cast %36 : vector<128xf32> to vector<1x128xf32>
      %38 = arith.addf %34, %37 : vector<1x128xf32>
      %c0_21 = arith.constant 0 : index
      %c0_22 = arith.constant 0 : index
      %39 = vector.load %arg17[%c0_21, %c0_22] : memref<1x128xf32, #tpu.memory_space<vmem>>, vector<1x128xf32>
      tpu.vector_store %arg17[%c0_21, %c0_22], %38 {strides = array<i32>} : memref<1x128xf32, #tpu.memory_space<vmem>>, vector<1x128xf32>,
      %c1_i32_23 = arith.constant 1 : i32
      %40 = arith.cmpi eq, %arg1, %c1_i32_23 : i32
      %41 = arith.extui %40 : i1 to i32
      %c0_i32_24 = arith.constant 0 : i32
      %42 = arith.cmpi ne, %41, %c0_i32_24 : i32
      scf.if %42 {
        %c0_25 = arith.constant 0 : index
        %c0_26 = arith.constant 0 : index
        %43 = vector.load %arg16[%c0_25, %c0_26] : memref<1x128xf32, #tpu.memory_space<vmem>>, vector<1x128xf32>
        %cst_27 = arith.constant 4.8828125E-4 : f32
        %44 = vector.broadcast %cst_27 : f32 to vector<1x128xf32>
        %45 = arith.mulf %43, %44 : vector<1x128xf32>
        %c0_28 = arith.constant 0 : index
        %c0_29 = arith.constant 0 : index
        %46 = vector.load %arg17[%c0_28, %c0_29] : memref<1x128xf32, #tpu.memory_space<vmem>>, vector<1x128xf32>
        %cst_30 = arith.constant 4.8828125E-4 : f32
        %47 = vector.broadcast %cst_30 : f32 to vector<1x128xf32>
        %48 = arith.mulf %46, %47 : vector<1x128xf32>
        %49 = arith.mulf %45, %45 : vector<1x128xf32>
        %50 = arith.subf %48, %49 : vector<1x128xf32>
        %cst_31 = arith.constant 0.000000e+00 : f32
        %51 = vector.broadcast %cst_31 : f32 to vector<1x128xf32>
        %52 = arith.maximumf %50, %51 : vector<1x128xf32>
        %cst_32 = arith.constant 9.99999974E-6 : f32
        %53 = vector.broadcast %cst_32 : f32 to vector<1x128xf32>
        %54 = arith.addf %52, %53 : vector<1x128xf32>
        %55 = math.rsqrt %54 : vector<1x128xf32>
        %c0_33 = arith.constant 0 : index
        %c0_34 = arith.constant 0 : index
        %56 = vector.load %arg7[%c0_33, %c0_34] : memref<1x128xf32, #tpu.memory_space<vmem>>, vector<1x128xf32>
        %57 = arith.mulf %55, %56 : vector<1x128xf32>
        %c0_35 = arith.constant 0 : index
        %c0_36 = arith.constant 0 : index
        %58 = vector.load %arg16[%c0_35, %c0_36] : memref<1x128xf32, #tpu.memory_space<vmem>>, vector<1x128xf32>
        tpu.vector_store %arg16[%c0_35, %c0_36], %57 {strides = array<i32>} : memref<1x128xf32, #tpu.memory_space<vmem>>, vector<1x128xf32>,
        %c0_37 = arith.constant 0 : index
        %c0_38 = arith.constant 0 : index
        %59 = vector.load %arg8[%c0_37, %c0_38] : memref<1x128xf32, #tpu.memory_space<vmem>>, vector<1x128xf32>
        %60 = arith.mulf %45, %57 : vector<1x128xf32>
        %61 = arith.subf %59, %60 : vector<1x128xf32>
        %c0_39 = arith.constant 0 : index
        %c0_40 = arith.constant 0 : index
        %62 = vector.load %arg17[%c0_39, %c0_40] : memref<1x128xf32, #tpu.memory_space<vmem>>, vector<1x128xf32>
        tpu.vector_store %arg17[%c0_39, %c0_40], %61 {strides = array<i32>} : memref<1x128xf32, #tpu.memory_space<vmem>>, vector<1x128xf32>,
      } else {
      }
    } else {
    }
    %c2_i32 = arith.constant 2 : i32
    %8 = arith.cmpi eq, %arg0, %c2_i32 : i32
    %9 = arith.extui %8 : i1 to i32
    %c0_i32_2 = arith.constant 0 : i32
    %10 = arith.cmpi ne, %9, %c0_i32_2 : i32
    scf.if %10 {
      %11 = arith.index_cast %1 : i32 to index
      %c0 = arith.constant 0 : index
      %12 = vector.load %arg13[%11, %c0] : memref<2048x128xf32, #tpu.memory_space<vmem>>, vector<1024x128xf32>
      %c0_3 = arith.constant 0 : index
      %c0_4 = arith.constant 0 : index
      %13 = vector.load %arg16[%c0_3, %c0_4] : memref<1x128xf32, #tpu.memory_space<vmem>>, vector<1x128xf32>
      %14 = vector.broadcast %13 : vector<1x128xf32> to vector<1024x128xf32>
      %15 = arith.mulf %12, %14 : vector<1024x128xf32>
      %c0_5 = arith.constant 0 : index
      %c0_6 = arith.constant 0 : index
      %16 = vector.load %arg17[%c0_5, %c0_6] : memref<1x128xf32, #tpu.memory_space<vmem>>, vector<1x128xf32>
      %17 = vector.broadcast %16 : vector<1x128xf32> to vector<1024x128xf32>
      %18 = arith.addf %15, %17 : vector<1024x128xf32>
      %cst = arith.constant 0.000000e+00 : f32
      %19 = vector.broadcast %cst : f32 to vector<1024x128xf32>
      %20 = arith.maximumf %18, %19 : vector<1024x128xf32>
      %21 = arith.truncf %20 : vector<1024x128xf32> to vector<1024x128xbf16>
      %c0_7 = arith.constant 0 : index
      %c0_8 = arith.constant 0 : index
      %22 = vector.load %arg9[%c0_7, %c0_8] : memref<128x128xbf16, #tpu.memory_space<vmem>>, vector<128x128xbf16>
      %cst_9 = arith.constant dense<0.000000e+00> : vector<1024x128xf32>
      %23 = tpu.matmul %21, %22, %cst_9 {dimension_numbers = #tpu.dot_dimension_numbers<[1], [0], [0], [1], [0, 0, 1, 1], [], []>} : vector<1024x128xbf16>, vector<128x128xbf16>, vector<1024x128xf32> -> vector<1024x128xf32>
      %c0_10 = arith.constant 0 : index
      %c0_11 = arith.constant 0 : index
      %24 = vector.load %arg10[%c0_10, %c0_11] : memref<1x128xf32, #tpu.memory_space<vmem>>, vector<1x128xf32>
      %25 = vector.broadcast %24 : vector<1x128xf32> to vector<1024x128xf32>
      %26 = arith.addf %23, %25 : vector<1024x128xf32>
      %c0_12 = arith.constant 0 : index
      %c0_13 = arith.constant 0 : index
      %27 = vector.load %arg11[%c0_12, %c0_13] : memref<1024x128xf32, #tpu.memory_space<vmem>>, vector<1024x128xf32>
      tpu.vector_store %arg11[%c0_12, %c0_13], %26 {strides = array<i32>} : memref<1024x128xf32, #tpu.memory_space<vmem>>, vector<1024x128xf32>,
    } else {
    }
    return
  }
  func.func @transform_0(%arg0: i32, %arg1: i32) -> (i32, i32) {
    %c0_i32 = arith.constant 0 : i32
    %0 = arith.cmpi eq, %arg0, %c0_i32 : i32
    %c1_i32 = arith.constant 1 : i32
    %1 = arith.select %0, %arg1, %c1_i32 : i32
    %c0_i32_0 = arith.constant 0 : i32
    %c0_i32_1 = arith.constant 0 : i32
    return %1, %c0_i32_0 : i32, i32
  }
  func.func @transform_1(%arg0: i32, %arg1: i32) -> (i32, i32) {
    %c0_i32 = arith.constant 0 : i32
    %c0_i32_0 = arith.constant 0 : i32
    %c0_i32_1 = arith.constant 0 : i32
    return %c0_i32, %c0_i32_0 : i32, i32
  }
  func.func @transform_2(%arg0: i32, %arg1: i32) -> (i32, i32) {
    %c0_i32 = arith.constant 0 : i32
    %c0_i32_0 = arith.constant 0 : i32
    %c0_i32_1 = arith.constant 0 : i32
    return %c0_i32, %c0_i32_0 : i32, i32
  }
  func.func @transform_3(%arg0: i32, %arg1: i32) -> (i32, i32) {
    %c0_i32 = arith.constant 0 : i32
    %c0_i32_0 = arith.constant 0 : i32
    %c0_i32_1 = arith.constant 0 : i32
    return %c0_i32, %c0_i32_0 : i32, i32
  }
  func.func @transform_4(%arg0: i32, %arg1: i32) -> (i32, i32) {
    %c0_i32 = arith.constant 0 : i32
    %c0_i32_0 = arith.constant 0 : i32
    %c0_i32_1 = arith.constant 0 : i32
    return %c0_i32, %c0_i32_0 : i32, i32
  }
  func.func @transform_5(%arg0: i32, %arg1: i32) -> (i32, i32) {
    %c0_i32 = arith.constant 0 : i32
    %c0_i32_0 = arith.constant 0 : i32
    %c0_i32_1 = arith.constant 0 : i32
    return %c0_i32, %c0_i32_0 : i32, i32
  }
  func.func @transform_6(%arg0: i32, %arg1: i32) -> (i32, i32) {
    %c0_i32 = arith.constant 0 : i32
    %c0_i32_0 = arith.constant 0 : i32
    %c0_i32_1 = arith.constant 0 : i32
    return %c0_i32, %c0_i32_0 : i32, i32
  }
  func.func @transform_7(%arg0: i32, %arg1: i32) -> (i32, i32) {
    %c0_i32 = arith.constant 0 : i32
    %c0_i32_0 = arith.constant 0 : i32
    %c0_i32_1 = arith.constant 0 : i32
    return %c0_i32, %c0_i32_0 : i32, i32
  }
  func.func @transform_8(%arg0: i32, %arg1: i32) -> (i32, i32) {
    %c0_i32 = arith.constant 0 : i32
    %c0_i32_0 = arith.constant 0 : i32
    %c0_i32_1 = arith.constant 0 : i32
    return %c0_i32, %c0_i32_0 : i32, i32
  }
  func.func @transform_9(%arg0: i32, %arg1: i32) -> (i32, i32) {
    %c2_i32 = arith.constant 2 : i32
    %0 = arith.cmpi eq, %arg0, %c2_i32 : i32
    %c0_i32 = arith.constant 0 : i32
    %1 = arith.select %0, %arg1, %c0_i32 : i32
    %c0_i32_0 = arith.constant 0 : i32
    %c0_i32_1 = arith.constant 0 : i32
    return %1, %c0_i32_0 : i32, i32
  }
}

</mosaic_0001>

<llo_original>
// kernel: tpu_custom_call.1
$region0: #{tpu_custom_call.1}
  #allocation0 [shape = 'u32[]', space=smem, size = 0x4, offset = 0x4, fixed_abs, tag = 'smem constant byte address 0x4 - core index']
  #allocation1 [shape = 'u32[144,128]{1,0:T(1,128)}', space=vmem, size = 0x12000, scoped, tag = 'internal scratch']
  #allocation2 [shape = 'f32[2048,128]{1,0:T(8,128)}', space=vmem, size = 0x100000, scoped, tag = 'scratch operand']
  #allocation3 [shape = 'f32[2048,128]{1,0:T(8,128)}', space=vmem, size = 0x100000, scoped, tag = 'scratch operand']
  #allocation4 [shape = 'f32[1,128]{1,0:T(1,128)}', space=vmem, size = 0x200, scoped, tag = 'scratch operand']
  #allocation5 [shape = 'f32[1,128]{1,0:T(1,128)}', space=vmem, size = 0x200, scoped, tag = 'scratch operand']
  #allocation6 [shape = 'f32[1,128]{1,0:T(1,128)}', space=vmem, size = 0x200, scoped, tag = 'scratch operand']
  #allocation7 [shape = 'f32[1,128]{1,0:T(1,128)}', space=vmem, size = 0x200, scoped, tag = 'scratch operand']
  %s0 = inlined_call_operand.hbm [shape: bf16[2048,128], index: 0, kind: input, shape index: {}]
  %s1 = inlined_call_operand.hbm [shape: bf16[128,128], index: 1, kind: input, shape index: {}]
  %s2 = inlined_call_operand.vmem [shape: f32[1,128], index: 2, kind: input, shape index: {}]
  %s3 = inlined_call_operand.vmem [shape: f32[1,128], index: 3, kind: input, shape index: {}]
  %s4 = inlined_call_operand.hbm [shape: bf16[128,128], index: 4, kind: input, shape index: {}]
  %s5 = inlined_call_operand.vmem [shape: f32[1,128], index: 5, kind: input, shape index: {}]
  %s6 = inlined_call_operand.vmem [shape: f32[1,128], index: 6, kind: input, shape index: {}]
  %s7 = inlined_call_operand.hbm [shape: bf16[128,128], index: 7, kind: input, shape index: {}]
  %s8 = inlined_call_operand.vmem [shape: f32[1,128], index: 8, kind: input, shape index: {}]
  %s9 = inlined_call_operand.hbm [shape: f32[2048,128], index: 9, kind: output, shape index: {}]
  %s10 = sld [smem:[#allocation0]]
  $region113: #{tpu_custom_call.1} parent=0
    _
  %s12 = ssub.s32 1, %s10
  %s13 = scalar_select 0, %s12, %s10
  $region1: #{tpu_custom_call.1} parent=0
    #allocation8 [shape = 'u8[524288]{0}', space=vmem, size = 0x80000, scoped, tag = 'input window, operand 0']
    #allocation9 [shape = 's32[2]{0}', space=sflag, size = 0x8, scoped, tag = 'scoped memory for tpu_custom_call.1']
    #allocation10 [shape = 's32[2]{0}', space=sflag, size = 0x8, scoped, tag = 'scoped memory for tpu_custom_call.1']
    #allocation11 [shape = 'u8[32768]{0}', space=vmem, size = 0x8000, scoped, tag = 'input window, operand 1, single buffered']
    #allocation12 [shape = 's32[1]{0}', space=sflag, size = 0x4, scoped, tag = 'scoped memory for tpu_custom_call.1']
    #allocation13 [shape = 'u8[32768]{0}', space=vmem, size = 0x8000, scoped, tag = 'input window, operand 4, single buffered']
    #allocation14 [shape = 'u8[32768]{0}', space=vmem, size = 0x8000, scoped, tag = 'input window, operand 7, single buffered']
    #allocation15 [shape = 's32[1]{0}', space=sflag, size = 0x4, scoped, tag = 'scoped memory for tpu_custom_call.1']
    #allocation16 [shape = 'u8[1048576]{0}', space=vmem, size = 0x100000, scoped, tag = 'output window, operand 0']
    %14 = vsyncpa [#allocation9], 0
    %s15 = scalar_lea.sflag [#allocation9], 1
    %16 = vsyncpa %s15, 0
    %17 = vsyncpa [#allocation12], 0
    %18 = vsyncpa [#allocation15], 0
    %19 = vsyncpa [#allocation10], 0
    %s20 = scalar_lea.sflag [#allocation10], 1
    %21 = vsyncpa %s20, 0
    loop: start=0, step=1, limit=8
    $region2: #{tpu_custom_call.1} parent=1 // loop_pre_header
      _
    $region3: #{tpu_custom_call.1} parent=1 // loop_header
      %s23 = sphi 0, %s27
      %p24 = scmp.ge.s32.totalorder %s23, 8
      %s30 = sphi 0, %s42
      %s31 = sphi 0, %s38
      %s32 = sphi 0, %s30
      %s33 = sphi 0, %s31
      %s34 = sphi 0, %s32
      %s35 = sphi 0, %s33
      %s49 = sphi 0, %s51
      %s52 = sphi 0, %s49
      %s53 = sphi 0, %s52
      %s69 = sphi 0, %s53
      %s73 = sphi 0, %s73
      %s75 = sphi 0, %s73
      %s76 = sphi 0, %s75
      %s90 = sphi 0, %s76
      %s94 = sphi 0, %s94
      %s96 = sphi 0, %s94
      %s97 = sphi 0, %s96
      %s111 = sphi 0, %s97
      %s115 = sphi 0, %s115
      %s117 = sphi 0, %s115
      %s118 = sphi 0, %s117
      %s132 = sphi 0, %s118
      %s136 = sphi 0, %s136
      %s138 = sphi 0, %s136
      %s139 = sphi 0, %s138
      %s153 = sphi 0, %s139
      %s157 = sphi 0, %s157
      %s159 = sphi 0, %s157
      %s160 = sphi 0, %s159
      %s174 = sphi 0, %s160
      %s178 = sphi 0, %s178
      %s180 = sphi 0, %s178
      %s181 = sphi 0, %s180
      %s195 = sphi 0, %s181
      %s199 = sphi 0, %s199
      %s201 = sphi 0, %s199
      %s202 = sphi 0, %s201
      %s216 = sphi 0, %s202
      %s220 = sphi 0, %s220
      %s222 = sphi 0, %s220
      %s223 = sphi 0, %s222
      %s237 = sphi 0, %s223
      %s247 = sphi 0, %s249
      %s250 = sphi 0, %s247
      %s251 = sphi 0, %s250
      %s267 = sphi 0, %s251
    $region4: #{tpu_custom_call.1} parent=1 // loop_header_branch
      %26 = sbr.rel (%p24) target = $region8
    $region5: #{tpu_custom_call.1} parent=1 // loop_body
      %s28 = ssub.s32 %s23, 1
      %s29 = ssub.s32 %s23, 2
      %s36 = sadd.s32 1, %s31
      %p37 = scmp.ge.s32.totalorder %s36, 2
      %s38 = scalar_select %p37, 0, %s36
      %s39 = sadd.s32 1, %s30
      %s40 = scalar_select %p37, %s39, %s30
      %p41 = scmp.ge.s32.totalorder %s40, 3
      %s42 = scalar_select %p41, 0, %s40
      %p43 = scmp.eq.s32.totalorder %s30, 0
      %s44 = scalar_select %p43, %s31, 1
      %p45 = scmp.eq.s32.totalorder %s42, 0
      %s46 = scalar_select %p45, %s38, 1
      %s47 = ssub.s32 %s44, %s46
      %p48 = scmp.eq.s32.totalorder %s47, 0
      %s50 = sadd.s32 %s49, 1
      %s51 = scalar_select %p48, %s49, %s50
      %p54 = pneg %p48
      %p55 = scmp.eq.s32.totalorder %s23, 5
      %p56 = por %p54, %p55
      %p57 = scmp.ne.s32.totalorder %s49, %s52
      %p58 = scmp.eq.s32.totalorder %s23, 0
      %p59 = por %p57, %p58
      %p60 = scmp.ne.s32.totalorder %s49, %s52
      %p61 = scmp.eq.s32.totalorder %s28, 5
      %p62 = por %p60, %p61
      %p63 = scmp.ne.s32.totalorder %s52, %s53
      %p64 = scmp.eq.s32.totalorder %s28, 0
      %p65 = por %p63, %p64
      %p66 = scmp.ne.s32.totalorder %s52, %s53
      %p67 = scmp.eq.s32.totalorder %s29, 5
      %p68 = por %p66, %p67
      %p70 = scmp.ne.s32.totalorder %s53, %s69
      %p71 = scmp.eq.s32.totalorder %s29, 0
      %p72 = por %p70, %p71
      %s74 = sadd.s32 %s73, 1
      %p77 = scmp.eq.s32.totalorder %s23, 5
      %p78 = scmp.ne.s32.totalorder %s73, %s75
      %p79 = scmp.eq.s32.totalorder %s23, 0
      %p80 = por %p78, %p79
      %p81 = scmp.ne.s32.totalorder %s73, %s75
      %p82 = scmp.eq.s32.totalorder %s28, 5
      %p83 = por %p81, %p82
      %p84 = scmp.ne.s32.totalorder %s75, %s76
      %p85 = scmp.eq.s32.totalorder %s28, 0
      %p86 = por %p84, %p85
      %p87 = scmp.ne.s32.totalorder %s75, %s76
      %p88 = scmp.eq.s32.totalorder %s29, 5
      %p89 = por %p87, %p88
      %p91 = scmp.ne.s32.totalorder %s76, %s90
      %p92 = scmp.eq.s32.totalorder %s29, 0
      %p93 = por %p91, %p92
      %s95 = sadd.s32 %s94, 1
      %p98 = scmp.eq.s32.totalorder %s23, 5
      %p99 = scmp.ne.s32.totalorder %s94, %s96
      %p100 = scmp.eq.s32.totalorder %s23, 0
      %p101 = por %p99, %p100
      %p102 = scmp.ne.s32.totalorder %s94, %s96
      %p103 = scmp.eq.s32.totalorder %s28, 5
      %p104 = por %p102, %p103
      %p105 = scmp.ne.s32.totalorder %s96, %s97
      %p106 = scmp.eq.s32.totalorder %s28, 0
      %p107 = por %p105, %p106
      %p108 = scmp.ne.s32.totalorder %s96, %s97
      %p109 = scmp.eq.s32.totalorder %s29, 5
      %p110 = por %p108, %p109
      %p112 = scmp.ne.s32.totalorder %s97, %s111
      %p113 = scmp.eq.s32.totalorder %s29, 0
      %p114 = por %p112, %p113
      %s116 = sadd.s32 %s115, 1
      %p119 = scmp.eq.s32.totalorder %s23, 5
      %p120 = scmp.ne.s32.totalorder %s115, %s117
      %p121 = scmp.eq.s32.totalorder %s23, 0
      %p122 = por %p120, %p121
      %p123 = scmp.ne.s32.totalorder %s115, %s117
      %p124 = scmp.eq.s32.totalorder %s28, 5
      %p125 = por %p123, %p124
      %p126 = scmp.ne.s32.totalorder %s117, %s118
      %p127 = scmp.eq.s32.totalorder %s28, 0
      %p128 = por %p126, %p127
      %p129 = scmp.ne.s32.totalorder %s117, %s118
      %p130 = scmp.eq.s32.totalorder %s29, 5
      %p131 = por %p129, %p130
      %p133 = scmp.ne.s32.totalorder %s118, %s132
      %p134 = scmp.eq.s32.totalorder %s29, 0
      %p135 = por %p133, %p134
      %s137 = sadd.s32 %s136, 1
      %p140 = scmp.eq.s32.totalorder %s23, 5
      %p141 = scmp.ne.s32.totalorder %s136, %s138
      %p142 = scmp.eq.s32.totalorder %s23, 0
      %p143 = por %p141, %p142
      %p144 = scmp.ne.s32.totalorder %s136, %s138
      %p145 = scmp.eq.s32.totalorder %s28, 5
      %p146 = por %p144, %p145
      %p147 = scmp.ne.s32.totalorder %s138, %s139
      %p148 = scmp.eq.s32.totalorder %s28, 0
      %p149 = por %p147, %p148
      %p150 = scmp.ne.s32.totalorder %s138, %s139
      %p151 = scmp.eq.s32.totalorder %s29, 5
      %p152 = por %p150, %p151
      %p154 = scmp.ne.s32.totalorder %s139, %s153
      %p155 = scmp.eq.s32.totalorder %s29, 0
      %p156 = por %p154, %p155
      %s158 = sadd.s32 %s157, 1
      %p161 = scmp.eq.s32.totalorder %s23, 5
      %p162 = scmp.ne.s32.totalorder %s157, %s159
      %p163 = scmp.eq.s32.totalorder %s23, 0
      %p164 = por %p162, %p163
      %p165 = scmp.ne.s32.totalorder %s157, %s159
      %p166 = scmp.eq.s32.totalorder %s28, 5
      %p167 = por %p165, %p166
      %p168 = scmp.ne.s32.totalorder %s159, %s160
      %p169 = scmp.eq.s32.totalorder %s28, 0
      %p170 = por %p168, %p169
      %p171 = scmp.ne.s32.totalorder %s159, %s160
      %p172 = scmp.eq.s32.totalorder %s29, 5
      %p173 = por %p171, %p172
      %p175 = scmp.ne.s32.totalorder %s160, %s174
      %p176 = scmp.eq.s32.totalorder %s29, 0
      %p177 = por %p175, %p176
      %s179 = sadd.s32 %s178, 1
      %p182 = scmp.eq.s32.totalorder %s23, 5
      %p183 = scmp.ne.s32.totalorder %s178, %s180
      %p184 = scmp.eq.s32.totalorder %s23, 0
      %p185 = por %p183, %p184
      %p186 = scmp.ne.s32.totalorder %s178, %s180
      %p187 = scmp.eq.s32.totalorder %s28, 5
      %p188 = por %p186, %p187
      %p189 = scmp.ne.s32.totalorder %s180, %s181
      %p190 = scmp.eq.s32.totalorder %s28, 0
      %p191 = por %p189, %p190
      %p192 = scmp.ne.s32.totalorder %s180, %s181
      %p193 = scmp.eq.s32.totalorder %s29, 5
      %p194 = por %p192, %p193
      %p196 = scmp.ne.s32.totalorder %s181, %s195
      %p197 = scmp.eq.s32.totalorder %s29, 0
      %p198 = por %p196, %p197
      %s200 = sadd.s32 %s199, 1
      %p203 = scmp.eq.s32.totalorder %s23, 5
      %p204 = scmp.ne.s32.totalorder %s199, %s201
      %p205 = scmp.eq.s32.totalorder %s23, 0
      %p206 = por %p204, %p205
      %p207 = scmp.ne.s32.totalorder %s199, %s201
      %p208 = scmp.eq.s32.totalorder %s28, 5
      %p209 = por %p207, %p208
      %p210 = scmp.ne.s32.totalorder %s201, %s202
      %p211 = scmp.eq.s32.totalorder %s28, 0
      %p212 = por %p210, %p211
      %p213 = scmp.ne.s32.totalorder %s201, %s202
      %p214 = scmp.eq.s32.totalorder %s29, 5
      %p215 = por %p213, %p214
      %p217 = scmp.ne.s32.totalorder %s202, %s216
      %p218 = scmp.eq.s32.totalorder %s29, 0
      %p219 = por %p217, %p218
      %s221 = sadd.s32 %s220, 1
      %p224 = scmp.eq.s32.totalorder %s23, 5
      %p225 = scmp.ne.s32.totalorder %s220, %s222
      %p226 = scmp.eq.s32.totalorder %s23, 0
      %p227 = por %p225, %p226
      %p228 = scmp.ne.s32.totalorder %s220, %s222
      %p229 = scmp.eq.s32.totalorder %s28, 5
      %p230 = por %p228, %p229
      %p231 = scmp.ne.s32.totalorder %s222, %s223
      %p232 = scmp.eq.s32.totalorder %s28, 0
      %p233 = por %p231, %p232
      %p234 = scmp.ne.s32.totalorder %s222, %s223
      %p235 = scmp.eq.s32.totalorder %s29, 5
      %p236 = por %p234, %p235
      %p238 = scmp.ne.s32.totalorder %s223, %s237
      %p239 = scmp.eq.s32.totalorder %s29, 0
      %p240 = por %p238, %p239
      %p241 = scmp.eq.s32.totalorder %s30, 2
      %s242 = scalar_select %p241, %s31, 0
      %p243 = scmp.eq.s32.totalorder %s42, 2
      %s244 = scalar_select %p243, %s38, 0
      %s245 = ssub.s32 %s242, %s244
      %p246 = scmp.eq.s32.totalorder %s245, 0
      %s248 = sadd.s32 %s247, 1
      %s249 = scalar_select %p246, %s247, %s248
      %p252 = pneg %p246
      %p253 = scmp.eq.s32.totalorder %s23, 5
      %p254 = por %p252, %p253
      %p255 = scmp.ne.s32.totalorder %s247, %s250
      %p256 = scmp.eq.s32.totalorder %s23, 0
      %p257 = por %p255, %p256
      %p258 = scmp.ne.s32.totalorder %s247, %s250
      %p259 = scmp.eq.s32.totalorder %s28, 5
      %p260 = por %p258, %p259
      %p261 = scmp.ne.s32.totalorder %s250, %s251
      %p262 = scmp.eq.s32.totalorder %s28, 0
      %p263 = por %p261, %p262
      %p264 = scmp.ne.s32.totalorder %s250, %s251
      %p265 = scmp.eq.s32.totalorder %s29, 5
      %p266 = por %p264, %p265
      %p268 = scmp.ne.s32.totalorder %s251, %s267
      %p269 = scmp.eq.s32.totalorder %s29, 0
      %p270 = por %p268, %p269
      %p271 = scmp.le.s32.totalorder 1, %s23
      %p272 = scmp.lt.s32.totalorder %s23, 7
      %p273 = pnand %p271, %p272
      %p274 = pneg %p273
      // Predicated region
      $region9: #{tpu_custom_call.1} parent=5 // pred_check
        _
      $region10: #{tpu_custom_call.1} parent=5 // pred_check_branch
        %276 = sbr.rel (%p273) target = $region12
      $region11: #{tpu_custom_call.1} parent=5 // pred_region
        %s277 = ssub.s32 %s23, 1
        // Predicated region
        $region13: #{tpu_custom_call.1} parent=11 // pred_check
          %p278 = pneg %p86
        $region14: #{tpu_custom_call.1} parent=11 // pred_check_branch
          %280 = sbr.rel (%p278) target = $region16
        $region15: #{tpu_custom_call.1} parent=11 // pred_region
          %s282 = ssub.s32 1024, 1024
          %283 = vsyncadd [#allocation12], %s282
          %s284 = sshll.u32 [#allocation11], 4
          %s285 = int_to_ptr.vmem [resolvable:$true] %s284
          %290 = dma.hbm_to_vmem [thread:$0]  %s1, 1024, %s285, [#allocation12], 64, 64, 4
        $region16: #{tpu_custom_call.1} parent=11 // pred_fallthru
          _
        // Predicated region
        $region17: #{tpu_custom_call.1} parent=11 // pred_check
          %p291 = pneg %p107
        $region18: #{tpu_custom_call.1} parent=11 // pred_check_branch
          %293 = sbr.rel (%p291) target = $region20
        $region19: #{tpu_custom_call.1} parent=11 // pred_region
          _
        $region20: #{tpu_custom_call.1} parent=11 // pred_fallthru
          _
        // Predicated region
        $region21: #{tpu_custom_call.1} parent=11 // pred_check
          %p294 = pneg %p128
        $region22: #{tpu_custom_call.1} parent=11 // pred_check_branch
          %296 = sbr.rel (%p294) target = $region24
        $region23: #{tpu_custom_call.1} parent=11 // pred_region
          _
        $region24: #{tpu_custom_call.1} parent=11 // pred_fallthru
          _
        // Predicated region
        $region25: #{tpu_custom_call.1} parent=11 // pred_check
          %p297 = pneg %p149
        $region26: #{tpu_custom_call.1} parent=11 // pred_check_branch
          %299 = sbr.rel (%p297) target = $region28
        $region27: #{tpu_custom_call.1} parent=11 // pred_region
          %s301 = ssub.s32 1024, 1024
          %302 = vsyncadd [#allocation12], %s301
          %s303 = sshll.u32 [#allocation13], 4
          %s304 = int_to_ptr.vmem [resolvable:$true] %s303
          %309 = dma.hbm_to_vmem [thread:$0]  %s4, 1024, %s304, [#allocation12], 64, 64, 4
        $region28: #{tpu_custom_call.1} parent=11 // pred_fallthru
          _
        // Predicated region
        $region29: #{tpu_custom_call.1} parent=11 // pred_check
          %p310 = pneg %p170
        $region30: #{tpu_custom_call.1} parent=11 // pred_check_branch
          %312 = sbr.rel (%p310) target = $region32
        $region31: #{tpu_custom_call.1} parent=11 // pred_region
          _
        $region32: #{tpu_custom_call.1} parent=11 // pred_fallthru
          _
        // Predicated region
        $region33: #{tpu_custom_call.1} parent=11 // pred_check
          %p313 = pneg %p191
        $region34: #{tpu_custom_call.1} parent=11 // pred_check_branch
          %315 = sbr.rel (%p313) target = $region36
        $region35: #{tpu_custom_call.1} parent=11 // pred_region
          _
        $region36: #{tpu_custom_call.1} parent=11 // pred_fallthru
          _
        // Predicated region
        $region37: #{tpu_custom_call.1} parent=11 // pred_check
          %p316 = pneg %p212
        $region38: #{tpu_custom_call.1} parent=11 // pred_check_branch
          %318 = sbr.rel (%p316) target = $region40
        $region39: #{tpu_custom_call.1} parent=11 // pred_region
          %s320 = ssub.s32 1024, 1024
          %321 = vsyncadd [#allocation15], %s320
          %s322 = sshll.u32 [#allocation14], 4
          %s323 = int_to_ptr.vmem [resolvable:$true] %s322
          %328 = dma.hbm_to_vmem [thread:$0]  %s7, 1024, %s323, [#allocation15], 64, 64, 4
        $region40: #{tpu_custom_call.1} parent=11 // pred_fallthru
          _
        // Predicated region
        $region41: #{tpu_custom_call.1} parent=11 // pred_check
          %p329 = pneg %p233
        $region42: #{tpu_custom_call.1} parent=11 // pred_check_branch
          %331 = sbr.rel (%p329) target = $region44
        $region43: #{tpu_custom_call.1} parent=11 // pred_region
          _
        $region44: #{tpu_custom_call.1} parent=11 // pred_fallthru
          _
      $region12: #{tpu_custom_call.1} parent=5 // pred_fallthru
        _
      %p332 = scmp.lt.s32.totalorder %s23, 6
      // Predicated region
      $region45: #{tpu_custom_call.1} parent=5 // pred_check
        %p333 = pneg %p332
      $region46: #{tpu_custom_call.1} parent=5 // pred_check_branch
        %335 = sbr.rel (%p333) target = $region48
      $region47: #{tpu_custom_call.1} parent=5 // pred_region
        // Predicated region
        $region49: #{tpu_custom_call.1} parent=47 // pred_check
          %p336 = pneg %p59
        $region50: #{tpu_custom_call.1} parent=47 // pred_check_branch
          %338 = sbr.rel (%p336) target = $region52
        $region51: #{tpu_custom_call.1} parent=47 // pred_region
          %s339 = sand.u32 %s49, 1
          %s340 = scalar_lea.sflag [#allocation9], %s339
          %s341 = sand.u32 %s49, 1
          %s342 = smul.addr %s341, 512
          %s343 = scalar_lea.vmem [#allocation8], %s342
          %p344 = scmp.eq.s32.totalorder %s30, 0
          %s345 = scalar_select %p344, %s31, 1
          %s346 = smul.u32 128, %s345
          %s348 = ssub.s32 8192, 8192
          %349 = vsyncadd %s340, %s348
          %s350 = smul.addr %s346, 64
          %s351 = scalar_lea.hbm %s0, %s350
          %s352 = sshll.u32 %s343, 4
          %s353 = int_to_ptr.vmem [resolvable:$true] %s352
          %358 = dma.hbm_to_vmem [thread:$0]  %s351, 8192, %s353, %s340, 64, 64, 4
        $region52: #{tpu_custom_call.1} parent=47 // pred_fallthru
          _
      $region48: #{tpu_custom_call.1} parent=5 // pred_fallthru
        _
      %p359 = scmp.le.s32.totalorder 1, %s23
      %p360 = scmp.lt.s32.totalorder %s23, 7
      %p361 = pnand %p359, %p360
      %p362 = pneg %p361
      // Predicated region
      $region53: #{tpu_custom_call.1} parent=5 // pred_check
        _
      $region54: #{tpu_custom_call.1} parent=5 // pred_check_branch
        %364 = sbr.rel (%p361) target = $region56
      $region55: #{tpu_custom_call.1} parent=5 // pred_region
        %s365 = ssub.s32 %s23, 1
        %s366 = sand.u32 %s52, 1
        %s367 = scalar_lea.sflag [#allocation9], %s366
        %s368 = sand.u32 %s52, 1
        %s369 = smul.addr %s368, 512
        %s370 = scalar_lea.vmem [#allocation8], %s369
        // Predicated region
        $region57: #{tpu_custom_call.1} parent=55 // pred_check
          %p371 = pneg %p65
        $region58: #{tpu_custom_call.1} parent=55 // pred_check_branch
          %373 = sbr.rel (%p371) target = $region60
        $region59: #{tpu_custom_call.1} parent=55 // pred_region
          %374 = dma.done %s367, 8192
        $region60: #{tpu_custom_call.1} parent=55 // pred_fallthru
          _
        // Predicated region
        $region61: #{tpu_custom_call.1} parent=55 // pred_check
          %p375 = pneg %p86
        $region62: #{tpu_custom_call.1} parent=55 // pred_check_branch
          %377 = sbr.rel (%p375) target = $region64
        $region63: #{tpu_custom_call.1} parent=55 // pred_region
          %378 = dma.done [#allocation12], 1024
        $region64: #{tpu_custom_call.1} parent=55 // pred_fallthru
          _
        // Predicated region
        $region65: #{tpu_custom_call.1} parent=55 // pred_check
          %p379 = pneg %p149
        $region66: #{tpu_custom_call.1} parent=55 // pred_check_branch
          %381 = sbr.rel (%p379) target = $region68
        $region67: #{tpu_custom_call.1} parent=55 // pred_region
          %382 = dma.done [#allocation12], 1024
        $region68: #{tpu_custom_call.1} parent=55 // pred_fallthru
          _
        // Predicated region
        $region69: #{tpu_custom_call.1} parent=55 // pred_check
          %p383 = pneg %p212
        $region70: #{tpu_custom_call.1} parent=55 // pred_check_branch
          %385 = sbr.rel (%p383) target = $region72
        $region71: #{tpu_custom_call.1} parent=55 // pred_region
          %386 = dma.done [#allocation15], 1024
        $region72: #{tpu_custom_call.1} parent=55 // pred_fallthru
          _
        %s387 = sand.u32 %s52, 1
        %s388 = scalar_lea.sflag [#allocation9], %s387
        %s389 = sand.u32 %s52, 1
        %s390 = smul.addr %s389, 512
        %s391 = scalar_lea.vmem [#allocation8], %s390
        %p392 = pneg %p65
        %p393 = pneg %p62
        %p394 = pneg %p86
        %p395 = pneg %p83
        %p396 = pneg %p107
        %p397 = pneg %p104
        %p398 = pneg %p128
        %p399 = pneg %p125
        %p400 = pneg %p149
        %p401 = pneg %p146
        %p402 = pneg %p170
        %p403 = pneg %p167
        %p404 = pneg %p191
        %p405 = pneg %p188
        %p406 = pneg %p212
        %p407 = pneg %p209
        %p408 = pneg %p233
        %p409 = pneg %p230
        %p410 = pneg %p263
        %p411 = pneg %p260
        %s412 = sand.u32 %s250, 1
        %s413 = scalar_lea.sflag [#allocation10], %s412
        %s414 = sand.u32 %s250, 1
        %s415 = smul.addr %s414, 1024
        %s416 = scalar_lea.vmem [#allocation16], %s415
        %p417 = scmp.eq.s32.totalorder %s32, 0
        %s418 = scalar_select %p417, %s33, 1
        %s419 = smul.u32 128, %s418
        %p420 = scmp.eq.s32.totalorder %s32, 2
        %s421 = scalar_select %p420, %s33, 0
        %s422 = smul.u32 128, %s421
        %s424 = smul.u32 %s33, 1024
        %p425 = scmp.eq.s32.totalorder %s32, 0
        // Predicated region
        $region73: #{tpu_custom_call.1} parent=55 // pred_check
          %p426 = pneg %p425
        $region74: #{tpu_custom_call.1} parent=55 // pred_check_branch
          %428 = sbr.rel (%p426) target = $region76
        $region75: #{tpu_custom_call.1} parent=55 // pred_region
          %p429 = scmp.eq.s32.totalorder %s33, 0
          // Predicated region
          $region77: #{tpu_custom_call.1} parent=75 // pred_check
            %p430 = pneg %p429
          $region78: #{tpu_custom_call.1} parent=75 // pred_check_branch
            %432 = sbr.rel (%p430) target = $region80
          $region79: #{tpu_custom_call.1} parent=75 // pred_region
            %433 = vst [vmem:[#allocation4] sm:$0x1] 0.0
            %434 = vst [vmem:[#allocation5] sm:$0x1] 0.0
          $region80: #{tpu_custom_call.1} parent=75 // pred_fallthru
            _
          %v435 = vld [vmem:[%s370] sm:$0xf]
          %v436 = vld [vmem:[%s370 + $0x4] sm:$0xf]
          %v437 = vld [vmem:[%s370 + $0x8] sm:$0xf]
          %v438 = vld [vmem:[%s370 + $0xc] sm:$0xf]
          %v439 = vld [vmem:[%s370 + $0x10] sm:$0xf]
          %v440 = vld [vmem:[%s370 + $0x14] sm:$0xf]
          %v441 = vld [vmem:[%s370 + $0x18] sm:$0xf]
          %v442 = vld [vmem:[%s370 + $0x1c] sm:$0xf]
          %v443 = vld [vmem:[%s370 + $0x20] sm:$0xf]
          %v444 = vld [vmem:[%s370 + $0x24] sm:$0xf]
          %v445 = vld [vmem:[%s370 + $0x28] sm:$0xf]
          %v446 = vld [vmem:[%s370 + $0x2c] sm:$0xf]
          %v447 = vld [vmem:[%s370 + $0x30] sm:$0xf]
          %v448 = vld [vmem:[%s370 + $0x34] sm:$0xf]
          %v449 = vld [vmem:[%s370 + $0x38] sm:$0xf]
          %v450 = vld [vmem:[%s370 + $0x3c] sm:$0xf]
          %v451 = vld [vmem:[%s370 + $0x40] sm:$0xf]
          %v452 = vld [vmem:[%s370 + $0x44] sm:$0xf]
          %v453 = vld [vmem:[%s370 + $0x48] sm:$0xf]
          %v454 = vld [vmem:[%s370 + $0x4c] sm:$0xf]
          %v455 = vld [vmem:[%s370 + $0x50] sm:$0xf]
          %v456 = vld [vmem:[%s370 + $0x54] sm:$0xf]
          %v457 = vld [vmem:[%s370 + $0x58] sm:$0xf]
          %v458 = vld [vmem:[%s370 + $0x5c] sm:$0xf]
          %v459 = vld [vmem:[%s370 + $0x60] sm:$0xf]
          %v460 = vld [vmem:[%s370 + $0x64] sm:$0xf]
          %v461 = vld [vmem:[%s370 + $0x68] sm:$0xf]
          %v462 = vld [vmem:[%s370 + $0x6c] sm:$0xf]
          %v463 = vld [vmem:[%s370 + $0x70] sm:$0xf]
          %v464 = vld [vmem:[%s370 + $0x74] sm:$0xf]
          %v465 = vld [vmem:[%s370 + $0x78] sm:$0xf]
          %v466 = vld [vmem:[%s370 + $0x7c] sm:$0xf]
          %v467 = vld [vmem:[%s370 + $0x80] sm:$0xf]
          %v468 = vld [vmem:[%s370 + $0x84] sm:$0xf]
          %v469 = vld [vmem:[%s370 + $0x88] sm:$0xf]
          %v470 = vld [vmem:[%s370 + $0x8c] sm:$0xf]
          %v471 = vld [vmem:[%s370 + $0x90] sm:$0xf]
          %v472 = vld [vmem:[%s370 + $0x94] sm:$0xf]
          %v473 = vld [vmem:[%s370 + $0x98] sm:$0xf]
          %v474 = vld [vmem:[%s370 + $0x9c] sm:$0xf]
          %v475 = vld [vmem:[%s370 + $0xa0] sm:$0xf]
          %v476 = vld [vmem:[%s370 + $0xa4] sm:$0xf]
          %v477 = vld [vmem:[%s370 + $0xa8] sm:$0xf]
          %v478 = vld [vmem:[%s370 + $0xac] sm:$0xf]
          %v479 = vld [vmem:[%s370 + $0xb0] sm:$0xf]
          %v480 = vld [vmem:[%s370 + $0xb4] sm:$0xf]
          %v481 = vld [vmem:[%s370 + $0xb8] sm:$0xf]
          %v482 = vld [vmem:[%s370 + $0xbc] sm:$0xf]
          %v483 = vld [vmem:[%s370 + $0xc0] sm:$0xf]
          %v484 = vld [vmem:[%s370 + $0xc4] sm:$0xf]
          %v485 = vld [vmem:[%s370 + $0xc8] sm:$0xf]
          %v486 = vld [vmem:[%s370 + $0xcc] sm:$0xf]
          %v487 = vld [vmem:[%s370 + $0xd0] sm:$0xf]
          %v488 = vld [vmem:[%s370 + $0xd4] sm:$0xf]
          %v489 = vld [vmem:[%s370 + $0xd8] sm:$0xf]
          %v490 = vld [vmem:[%s370 + $0xdc] sm:$0xf]
          %v491 = vld [vmem:[%s370 + $0xe0] sm:$0xf]
          %v492 = vld [vmem:[%s370 + $0xe4] sm:$0xf]
          %v493 = vld [vmem:[%s370 + $0xe8] sm:$0xf]
          %v494 = vld [vmem:[%s370 + $0xec] sm:$0xf]
          %v495 = vld [vmem:[%s370 + $0xf0] sm:$0xf]
          %v496 = vld [vmem:[%s370 + $0xf4] sm:$0xf]
          %v497 = vld [vmem:[%s370 + $0xf8] sm:$0xf]
          %v498 = vld [vmem:[%s370 + $0xfc] sm:$0xf]
          %v499 = vld [vmem:[%s370 + $0x100] sm:$0xf]
          %v500 = vld [vmem:[%s370 + $0x104] sm:$0xf]
          %v501 = vld [vmem:[%s370 + $0x108] sm:$0xf]
          %v502 = vld [vmem:[%s370 + $0x10c] sm:$0xf]
          %v503 = vld [vmem:[%s370 + $0x110] sm:$0xf]
          %v504 = vld [vmem:[%s370 + $0x114] sm:$0xf]
          %v505 = vld [vmem:[%s370 + $0x118] sm:$0xf]
          %v506 = vld [vmem:[%s370 + $0x11c] sm:$0xf]
          %v507 = vld [vmem:[%s370 + $0x120] sm:$0xf]
          %v508 = vld [vmem:[%s370 + $0x124] sm:$0xf]
          %v509 = vld [vmem:[%s370 + $0x128] sm:$0xf]
          %v510 = vld [vmem:[%s370 + $0x12c] sm:$0xf]
          %v511 = vld [vmem:[%s370 + $0x130] sm:$0xf]
          %v512 = vld [vmem:[%s370 + $0x134] sm:$0xf]
          %v513 = vld [vmem:[%s370 + $0x138] sm:$0xf]
          %v514 = vld [vmem:[%s370 + $0x13c] sm:$0xf]
          %v515 = vld [vmem:[%s370 + $0x140] sm:$0xf]
          %v516 = vld [vmem:[%s370 + $0x144] sm:$0xf]
          %v517 = vld [vmem:[%s370 + $0x148] sm:$0xf]
          %v518 = vld [vmem:[%s370 + $0x14c] sm:$0xf]
          %v519 = vld [vmem:[%s370 + $0x150] sm:$0xf]
          %v520 = vld [vmem:[%s370 + $0x154] sm:$0xf]
          %v521 = vld [vmem:[%s370 + $0x158] sm:$0xf]
          %v522 = vld [vmem:[%s370 + $0x15c] sm:$0xf]
          %v523 = vld [vmem:[%s370 + $0x160] sm:$0xf]
          %v524 = vld [vmem:[%s370 + $0x164] sm:$0xf]
          %v525 = vld [vmem:[%s370 + $0x168] sm:$0xf]
          %v526 = vld [vmem:[%s370 + $0x16c] sm:$0xf]
          %v527 = vld [vmem:[%s370 + $0x170] sm:$0xf]
          %v528 = vld [vmem:[%s370 + $0x174] sm:$0xf]
          %v529 = vld [vmem:[%s370 + $0x178] sm:$0xf]
          %v530 = vld [vmem:[%s370 + $0x17c] sm:$0xf]
          %v531 = vld [vmem:[%s370 + $0x180] sm:$0xf]
          %v532 = vld [vmem:[%s370 + $0x184] sm:$0xf]
          %v533 = vld [vmem:[%s370 + $0x188] sm:$0xf]
          %v534 = vld [vmem:[%s370 + $0x18c] sm:$0xf]
          %v535 = vld [vmem:[%s370 + $0x190] sm:$0xf]
          %v536 = vld [vmem:[%s370 + $0x194] sm:$0xf]
          %v537 = vld [vmem:[%s370 + $0x198] sm:$0xf]
          %v538 = vld [vmem:[%s370 + $0x19c] sm:$0xf]
          %v539 = vld [vmem:[%s370 + $0x1a0] sm:$0xf]
          %v540 = vld [vmem:[%s370 + $0x1a4] sm:$0xf]
          %v541 = vld [vmem:[%s370 + $0x1a8] sm:$0xf]
          %v542 = vld [vmem:[%s370 + $0x1ac] sm:$0xf]
          %v543 = vld [vmem:[%s370 + $0x1b0] sm:$0xf]
          %v544 = vld [vmem:[%s370 + $0x1b4] sm:$0xf]
          %v545 = vld [vmem:[%s370 + $0x1b8] sm:$0xf]
          %v546 = vld [vmem:[%s370 + $0x1bc] sm:$0xf]
          %v547 = vld [vmem:[%s370 + $0x1c0] sm:$0xf]
          %v548 = vld [vmem:[%s370 + $0x1c4] sm:$0xf]
          %v549 = vld [vmem:[%s370 + $0x1c8] sm:$0xf]
          %v550 = vld [vmem:[%s370 + $0x1cc] sm:$0xf]
          %v551 = vld [vmem:[%s370 + $0x1d0] sm:$0xf]
          %v552 = vld [vmem:[%s370 + $0x1d4] sm:$0xf]
          %v553 = vld [vmem:[%s370 + $0x1d8] sm:$0xf]
          %v554 = vld [vmem:[%s370 + $0x1dc] sm:$0xf]
          %v555 = vld [vmem:[%s370 + $0x1e0] sm:$0xf]
          %v556 = vld [vmem:[%s370 + $0x1e4] sm:$0xf]
          %v557 = vld [vmem:[%s370 + $0x1e8] sm:$0xf]
          %v558 = vld [vmem:[%s370 + $0x1ec] sm:$0xf]
          %v559 = vld [vmem:[%s370 + $0x1f0] sm:$0xf]
          %v560 = vld [vmem:[%s370 + $0x1f4] sm:$0xf]
          %v561 = vld [vmem:[%s370 + $0x1f8] sm:$0xf]
          %v562 = vld [vmem:[%s370 + $0x1fc] sm:$0xf]
          %v563 = vld [vmem:[#allocation11] sm:$0xf]
          %v564 = vld [vmem:[#allocation11 + $0x4] sm:$0xf]
          %v565 = vld [vmem:[#allocation11 + $0x8] sm:$0xf]
          %v566 = vld [vmem:[#allocation11 + $0xc] sm:$0xf]
          %v567 = vld [vmem:[#allocation11 + $0x10] sm:$0xf]
          %v568 = vld [vmem:[#allocation11 + $0x14] sm:$0xf]
          %v569 = vld [vmem:[#allocation11 + $0x18] sm:$0xf]
          %v570 = vld [vmem:[#allocation11 + $0x1c] sm:$0xf]
          %v571 = vld [vmem:[#allocation11 + $0x20] sm:$0xf]
          %v572 = vld [vmem:[#allocation11 + $0x24] sm:$0xf]
          %v573 = vld [vmem:[#allocation11 + $0x28] sm:$0xf]
          %v574 = vld [vmem:[#allocation11 + $0x2c] sm:$0xf]
          %v575 = vld [vmem:[#allocation11 + $0x30] sm:$0xf]
          %v576 = vld [vmem:[#allocation11 + $0x34] sm:$0xf]
          %v577 = vld [vmem:[#allocation11 + $0x38] sm:$0xf]
          %v578 = vld [vmem:[#allocation11 + $0x3c] sm:$0xf]
          %v707 = vunpack.c.l.b16 %v435
          %v708 = vunpack.c.l.b16 %v436
          %v709 = vunpack.c.l.b16 %v437
          %v710 = vunpack.c.l.b16 %v438
          %v711 = vunpack.c.l.b16 %v439
          %v712 = vunpack.c.l.b16 %v440
          %v713 = vunpack.c.l.b16 %v441
          %v714 = vunpack.c.l.b16 %v442
          %v715 = vunpack.c.l.b16 %v443
          %v716 = vunpack.c.l.b16 %v444
          %v717 = vunpack.c.l.b16 %v445
          %v718 = vunpack.c.l.b16 %v446
          %v719 = vunpack.c.l.b16 %v447
          %v720 = vunpack.c.l.b16 %v448
          %v721 = vunpack.c.l.b16 %v449
          %v722 = vunpack.c.l.b16 %v450
          %v723 = vunpack.c.l.b16 %v451
          %v724 = vunpack.c.l.b16 %v452
          %v725 = vunpack.c.l.b16 %v453
          %v726 = vunpack.c.l.b16 %v454
          %v727 = vunpack.c.l.b16 %v455
          %v728 = vunpack.c.l.b16 %v456
          %v729 = vunpack.c.l.b16 %v457
          %v730 = vunpack.c.l.b16 %v458
          %v731 = vunpack.c.l.b16 %v459
          %v732 = vunpack.c.l.b16 %v460
          %v733 = vunpack.c.l.b16 %v461
          %v734 = vunpack.c.l.b16 %v462
          %v735 = vunpack.c.l.b16 %v463
          %v736 = vunpack.c.l.b16 %v464
          %v737 = vunpack.c.l.b16 %v465
          %v738 = vunpack.c.l.b16 %v466
          %v739 = vunpack.c.l.b16 %v467
          %v740 = vunpack.c.l.b16 %v468
          %v741 = vunpack.c.l.b16 %v469
          %v742 = vunpack.c.l.b16 %v470
          %v743 = vunpack.c.l.b16 %v471
          %v744 = vunpack.c.l.b16 %v472
          %v745 = vunpack.c.l.b16 %v473
          %v746 = vunpack.c.l.b16 %v474
          %v747 = vunpack.c.l.b16 %v475
          %v748 = vunpack.c.l.b16 %v476
          %v749 = vunpack.c.l.b16 %v477
          %v750 = vunpack.c.l.b16 %v478
          %v751 = vunpack.c.l.b16 %v479
          %v752 = vunpack.c.l.b16 %v480
          %v753 = vunpack.c.l.b16 %v481
          %v754 = vunpack.c.l.b16 %v482
          %v755 = vunpack.c.l.b16 %v483
          %v756 = vunpack.c.l.b16 %v484
          %v757 = vunpack.c.l.b16 %v485
          %v758 = vunpack.c.l.b16 %v486
          %v759 = vunpack.c.l.b16 %v487
          %v760 = vunpack.c.l.b16 %v488
          %v761 = vunpack.c.l.b16 %v489
          %v762 = vunpack.c.l.b16 %v490
          %v763 = vunpack.c.l.b16 %v491
          %v764 = vunpack.c.l.b16 %v492
          %v765 = vunpack.c.l.b16 %v493
          %v766 = vunpack.c.l.b16 %v494
          %v767 = vunpack.c.l.b16 %v495
          %v768 = vunpack.c.l.b16 %v496
          %v769 = vunpack.c.l.b16 %v497
          %v770 = vunpack.c.l.b16 %v498
          %v771 = vunpack.c.l.b16 %v499
          %v772 = vunpack.c.l.b16 %v500
          %v773 = vunpack.c.l.b16 %v501
          %v774 = vunpack.c.l.b16 %v502
          %v775 = vunpack.c.l.b16 %v503
          %v776 = vunpack.c.l.b16 %v504
          %v777 = vunpack.c.l.b16 %v505
          %v778 = vunpack.c.l.b16 %v506
          %v779 = vunpack.c.l.b16 %v507
          %v780 = vunpack.c.l.b16 %v508
          %v781 = vunpack.c.l.b16 %v509
          %v782 = vunpack.c.l.b16 %v510
          %v783 = vunpack.c.l.b16 %v511
          %v784 = vunpack.c.l.b16 %v512
          %v785 = vunpack.c.l.b16 %v513
          %v786 = vunpack.c.l.b16 %v514
          %v787 = vunpack.c.l.b16 %v515
          %v788 = vunpack.c.l.b16 %v516
          %v789 = vunpack.c.l.b16 %v517
          %v790 = vunpack.c.l.b16 %v518
          %v791 = vunpack.c.l.b16 %v519
          %v792 = vunpack.c.l.b16 %v520
          %v793 = vunpack.c.l.b16 %v521
          %v794 = vunpack.c.l.b16 %v522
          %v795 = vunpack.c.l.b16 %v523
          %v796 = vunpack.c.l.b16 %v524
          %v797 = vunpack.c.l.b16 %v525
          %v798 = vunpack.c.l.b16 %v526
          %v799 = vunpack.c.l.b16 %v527
          %v800 = vunpack.c.l.b16 %v528
          %v801 = vunpack.c.l.b16 %v529
          %v802 = vunpack.c.l.b16 %v530
          %v803 = vunpack.c.l.b16 %v531
          %v804 = vunpack.c.l.b16 %v532
          %v805 = vunpack.c.l.b16 %v533
          %v806 = vunpack.c.l.b16 %v534
          %v807 = vunpack.c.l.b16 %v535
          %v808 = vunpack.c.l.b16 %v536
          %v809 = vunpack.c.l.b16 %v537
          %v810 = vunpack.c.l.b16 %v538
          %v811 = vunpack.c.l.b16 %v539
          %v812 = vunpack.c.l.b16 %v540
          %v813 = vunpack.c.l.b16 %v541
          %v814 = vunpack.c.l.b16 %v542
          %v815 = vunpack.c.l.b16 %v543
          %v816 = vunpack.c.l.b16 %v544
          %v817 = vunpack.c.l.b16 %v545
          %v818 = vunpack.c.l.b16 %v546
          %v819 = vunpack.c.l.b16 %v547
          %v820 = vunpack.c.l.b16 %v548
          %v821 = vunpack.c.l.b16 %v549
          %v822 = vunpack.c.l.b16 %v550
          %v823 = vunpack.c.l.b16 %v551
          %v824 = vunpack.c.l.b16 %v552
          %v825 = vunpack.c.l.b16 %v553
          %v826 = vunpack.c.l.b16 %v554
          %v827 = vunpack.c.l.b16 %v555
          %v828 = vunpack.c.l.b16 %v556
          %v829 = vunpack.c.l.b16 %v557
          %v830 = vunpack.c.l.b16 %v558
          %v831 = vunpack.c.l.b16 %v559
          %v832 = vunpack.c.l.b16 %v560
          %v833 = vunpack.c.l.b16 %v561
          %v834 = vunpack.c.l.b16 %v562
          %v835 = vpack.c.b16 %v708, %v707
          %v836 = vpack.c.b16 %v710, %v709
          %v837 = vpack.c.b16 %v712, %v711
          %v838 = vpack.c.b16 %v714, %v713
          %v839 = vpack.c.b16 %v716, %v715
          %v840 = vpack.c.b16 %v718, %v717
          %v841 = vpack.c.b16 %v720, %v719
          %v842 = vpack.c.b16 %v722, %v721
          %v843 = vpack.c.b16 %v724, %v723
          %v844 = vpack.c.b16 %v726, %v725
          %v845 = vpack.c.b16 %v728, %v727
          %v846 = vpack.c.b16 %v730, %v729
          %v847 = vpack.c.b16 %v732, %v731
          %v848 = vpack.c.b16 %v734, %v733
          %v849 = vpack.c.b16 %v736, %v735
          %v850 = vpack.c.b16 %v738, %v737
          %v851 = vpack.c.b16 %v740, %v739
          %v852 = vpack.c.b16 %v742, %v741
          %v853 = vpack.c.b16 %v744, %v743
          %v854 = vpack.c.b16 %v746, %v745
          %v855 = vpack.c.b16 %v748, %v747
          %v856 = vpack.c.b16 %v750, %v749
          %v857 = vpack.c.b16 %v752, %v751
          %v858 = vpack.c.b16 %v754, %v753
          %v859 = vpack.c.b16 %v756, %v755
          %v860 = vpack.c.b16 %v758, %v757
          %v861 = vpack.c.b16 %v760, %v759
          %v862 = vpack.c.b16 %v762, %v761
          %v863 = vpack.c.b16 %v764, %v763
          %v864 = vpack.c.b16 %v766, %v765
          %v865 = vpack.c.b16 %v768, %v767
          %v866 = vpack.c.b16 %v770, %v769
          %v867 = vpack.c.b16 %v772, %v771
          %v868 = vpack.c.b16 %v774, %v773
          %v869 = vpack.c.b16 %v776, %v775
          %v870 = vpack.c.b16 %v778, %v777
          %v871 = vpack.c.b16 %v780, %v779
          %v872 = vpack.c.b16 %v782, %v781
          %v873 = vpack.c.b16 %v784, %v783
          %v874 = vpack.c.b16 %v786, %v785
          %v875 = vpack.c.b16 %v788, %v787
          %v876 = vpack.c.b16 %v790, %v789
          %v877 = vpack.c.b16 %v792, %v791
          %v878 = vpack.c.b16 %v794, %v793
          %v879 = vpack.c.b16 %v796, %v795
          %v880 = vpack.c.b16 %v798, %v797
          %v881 = vpack.c.b16 %v800, %v799
          %v882 = vpack.c.b16 %v802, %v801
          %v883 = vpack.c.b16 %v804, %v803
          %v884 = vpack.c.b16 %v806, %v805
          %v885 = vpack.c.b16 %v808, %v807
          %v886 = vpack.c.b16 %v810, %v809
          %v887 = vpack.c.b16 %v812, %v811
          %v888 = vpack.c.b16 %v814, %v813
          %v889 = vpack.c.b16 %v816, %v815
          %v890 = vpack.c.b16 %v818, %v817
          %v891 = vpack.c.b16 %v820, %v819
          %v892 = vpack.c.b16 %v822, %v821
          %v893 = vpack.c.b16 %v824, %v823
          %v894 = vpack.c.b16 %v826, %v825
          %v895 = vpack.c.b16 %v828, %v827
          %v896 = vpack.c.b16 %v830, %v829
          %v897 = vpack.c.b16 %v832, %v831
          %v898 = vpack.c.b16 %v834, %v833
          %v979 = vunpack.c.l.b16 %v563
          %v980 = vunpack.c.l.b16 %v564
          %v981 = vunpack.c.l.b16 %v565
          %v982 = vunpack.c.l.b16 %v566
          %v983 = vunpack.c.l.b16 %v567
          %v984 = vunpack.c.l.b16 %v568
          %v985 = vunpack.c.l.b16 %v569
          %v986 = vunpack.c.l.b16 %v570
          %v987 = vunpack.c.l.b16 %v571
          %v988 = vunpack.c.l.b16 %v572
          %v989 = vunpack.c.l.b16 %v573
          %v990 = vunpack.c.l.b16 %v574
          %v991 = vunpack.c.l.b16 %v575
          %v992 = vunpack.c.l.b16 %v576
          %v993 = vunpack.c.l.b16 %v577
          %v994 = vunpack.c.l.b16 %v578
          %v995 = vpack.c.b16 %v980, %v979
          %v996 = vpack.c.b16 %v982, %v981
          %v997 = vpack.c.b16 %v984, %v983
          %v998 = vpack.c.b16 %v986, %v985
          %v999 = vpack.c.b16 %v988, %v987
          %v1000 = vpack.c.b16 %v990, %v989
          %v1001 = vpack.c.b16 %v992, %v991
          %v1002 = vpack.c.b16 %v994, %v993
          %1011 = vmatprep.subr.bf16.mxu0 0
          %1012 = vmatpush1.bf16.msra.mxu0 %v1002
          %1013 = vmatprep.subr.bf16.mxu0 0
          %1014 = vmatpush1.bf16.msra.mxu0 %v1001
          %1015 = vmatprep.subr.bf16.mxu0 0
          %1016 = vmatpush1.bf16.msra.mxu0 %v1000
          %1017 = vmatprep.subr.bf16.mxu0 0
          %1018 = vmatpush1.bf16.msra.mxu0 %v999
          %1019 = vmatprep.subr.bf16.mxu0 0
          %1020 = vmatpush1.bf16.msra.mxu0 %v998
          %1021 = vmatprep.subr.bf16.mxu0 0
          %1022 = vmatpush1.bf16.msra.mxu0 %v997
          %1023 = vmatprep.subr.bf16.mxu0 0
          %1024 = vmatpush1.bf16.msra.mxu0 %v996
          %1025 = vmatprep.subr.bf16.mxu0 0
          %1026 = vmatpush1.bf16.msra.mxu0 %v995
          %1027 = vmatprep.subr.bf16.mxu0 0
          %1028 = vmatpush2.bf16.msra.mxu0 0
          %1029 = vmatprep.subr.bf16.mxu0 0
          %1030 = vmatpush2.bf16.msra.mxu0 0
          %1031 = vmatprep.subr.bf16.mxu0 0
          %1032 = vmatpush2.bf16.msra.mxu0 0
          %1033 = vmatprep.subr.bf16.mxu0 0
          %1034 = vmatpush2.bf16.msra.mxu0 0
          %1035 = vmatprep.subr.bf16.mxu0 0
          %1036 = vmatpush2.bf16.msra.mxu0 0
          %1037 = vmatprep.subr.bf16.mxu0 0
          %1038 = vmatpush2.bf16.msra.mxu0 0
          %1039 = vmatprep.subr.bf16.mxu0 0
          %1040 = vmatpush2.bf16.msra.mxu0 0
          %1041 = vmatprep.subr.bf16.mxu0 0
          %1042 = vmatpush2.bf16.msra.mxu0 0
          %1043 = vmatprep.mubr.bf16.mxu0 0
          %1044 = vmatmul.mubr.bf16.gmra.mxu0 %v835
          %v1045 = vpop.f32.mrf.mxu0
          %v1046 = vadd.f32 0.0, %v1045
          %v1047 = vpop.f32.mrf.mxu0
          %v1048 = vpop.f32.mrf.mxu0
          %v1049 = vadd.f32 0.0, %v1048
          %v1050 = vpop.f32.mrf.mxu0
          %1051 = vmatprep.mubr.bf16.mxu0 0
          %1052 = vmatmul.mubr.bf16.gmra.mxu0 %v836
          %v1053 = vpop.f32.mrf.mxu0
          %v1054 = vadd.f32 0.0, %v1053
          %v1055 = vpop.f32.mrf.mxu0
          %v1056 = vpop.f32.mrf.mxu0
          %v1057 = vadd.f32 0.0, %v1056
          %v1058 = vpop.f32.mrf.mxu0
          %1059 = vmatprep.mubr.bf16.mxu0 0
          %1060 = vmatmul.mubr.bf16.gmra.mxu0 %v837
          %v1061 = vpop.f32.mrf.mxu0
          %v1062 = vadd.f32 0.0, %v1061
          %v1063 = vpop.f32.mrf.mxu0
          %v1064 = vpop.f32.mrf.mxu0
          %v1065 = vadd.f32 0.0, %v1064
          %v1066 = vpop.f32.mrf.mxu0
          %1067 = vmatprep.mubr.bf16.mxu0 0
          %1068 = vmatmul.mubr.bf16.gmra.mxu0 %v838
          %v1069 = vpop.f32.mrf.mxu0
          %v1070 = vadd.f32 0.0, %v1069
          %v1071 = vpop.f32.mrf.mxu0
          %v1072 = vpop.f32.mrf.mxu0
          %v1073 = vadd.f32 0.0, %v1072
          %v1074 = vpop.f32.mrf.mxu0
          %1075 = vmatprep.mubr.bf16.mxu0 0
          %1076 = vmatmul.mubr.bf16.gmra.mxu0 %v839
          %v1077 = vpop.f32.mrf.mxu0
          %v1078 = vadd.f32 0.0, %v1077
          %v1079 = vpop.f32.mrf.mxu0
          %v1080 = vpop.f32.mrf.mxu0
          %v1081 = vadd.f32 0.0, %v1080
          %v1082 = vpop.f32.mrf.mxu0
          %1083 = vmatprep.mubr.bf16.mxu0 0
          %1084 = vmatmul.mubr.bf16.gmra.mxu0 %v840
          %v1085 = vpop.f32.mrf.mxu0
          %v1086 = vadd.f32 0.0, %v1085
          %v1087 = vpop.f32.mrf.mxu0
          %v1088 = vpop.f32.mrf.mxu0
          %v1089 = vadd.f32 0.0, %v1088
          %v1090 = vpop.f32.mrf.mxu0
          %1091 = vmatprep.mubr.bf16.mxu0 0
          %1092 = vmatmul.mubr.bf16.gmra.mxu0 %v841
          %v1093 = vpop.f32.mrf.mxu0
          %v1094 = vadd.f32 0.0, %v1093
          %v1095 = vpop.f32.mrf.mxu0
          %v1096 = vpop.f32.mrf.mxu0
          %v1097 = vadd.f32 0.0, %v1096
          %v1098 = vpop.f32.mrf.mxu0
          %1099 = vmatprep.mubr.bf16.mxu0 0
          %1100 = vmatmul.mubr.bf16.gmra.mxu0 %v842
          %v1101 = vpop.f32.mrf.mxu0
          %v1102 = vadd.f32 0.0, %v1101
          %v1103 = vpop.f32.mrf.mxu0
          %v1104 = vpop.f32.mrf.mxu0
          %v1105 = vadd.f32 0.0, %v1104
          %v1106 = vpop.f32.mrf.mxu0
          %1107 = vmatprep.mubr.bf16.mxu0 0
          %1108 = vmatmul.mubr.bf16.gmra.mxu0 %v843
          %v1109 = vpop.f32.mrf.mxu0
          %v1110 = vadd.f32 0.0, %v1109
          %v1111 = vpop.f32.mrf.mxu0
          %v1112 = vpop.f32.mrf.mxu0
          %v1113 = vadd.f32 0.0, %v1112
          %v1114 = vpop.f32.mrf.mxu0
          %1115 = vmatprep.mubr.bf16.mxu0 0
          %1116 = vmatmul.mubr.bf16.gmra.mxu0 %v844
          %v1117 = vpop.f32.mrf.mxu0
          %v1118 = vadd.f32 0.0, %v1117
          %v1119 = vpop.f32.mrf.mxu0
          %v1120 = vpop.f32.mrf.mxu0
          %v1121 = vadd.f32 0.0, %v1120
          %v1122 = vpop.f32.mrf.mxu0
          %1123 = vmatprep.mubr.bf16.mxu0 0
          %1124 = vmatmul.mubr.bf16.gmra.mxu0 %v845
          %v1125 = vpop.f32.mrf.mxu0
          %v1126 = vadd.f32 0.0, %v1125
          %v1127 = vpop.f32.mrf.mxu0
          %v1128 = vpop.f32.mrf.mxu0
          %v1129 = vadd.f32 0.0, %v1128
          %v1130 = vpop.f32.mrf.mxu0
          %1131 = vmatprep.mubr.bf16.mxu0 0
          %1132 = vmatmul.mubr.bf16.gmra.mxu0 %v846
          %v1133 = vpop.f32.mrf.mxu0
          %v1134 = vadd.f32 0.0, %v1133
          %v1135 = vpop.f32.mrf.mxu0
          %v1136 = vpop.f32.mrf.mxu0
          %v1137 = vadd.f32 0.0, %v1136
          %v1138 = vpop.f32.mrf.mxu0
          %1139 = vmatprep.mubr.bf16.mxu0 0
          %1140 = vmatmul.mubr.bf16.gmra.mxu0 %v847
          %v1141 = vpop.f32.mrf.mxu0
          %v1142 = vadd.f32 0.0, %v1141
          %v1143 = vpop.f32.mrf.mxu0
          %v1144 = vpop.f32.mrf.mxu0
          %v1145 = vadd.f32 0.0, %v1144
          %v1146 = vpop.f32.mrf.mxu0
          %1147 = vmatprep.mubr.bf16.mxu0 0
          %1148 = vmatmul.mubr.bf16.gmra.mxu0 %v848
          %v1149 = vpop.f32.mrf.mxu0
          %v1150 = vadd.f32 0.0, %v1149
          %v1151 = vpop.f32.mrf.mxu0
          %v1152 = vpop.f32.mrf.mxu0
          %v1153 = vadd.f32 0.0, %v1152
          %v1154 = vpop.f32.mrf.mxu0
          %1155 = vmatprep.mubr.bf16.mxu0 0
          %1156 = vmatmul.mubr.bf16.gmra.mxu0 %v849
          %v1157 = vpop.f32.mrf.mxu0
          %v1158 = vadd.f32 0.0, %v1157
          %v1159 = vpop.f32.mrf.mxu0
          %v1160 = vpop.f32.mrf.mxu0
          %v1161 = vadd.f32 0.0, %v1160
          %v1162 = vpop.f32.mrf.mxu0
          %1163 = vmatprep.mubr.bf16.mxu0 0
          %1164 = vmatmul.mubr.bf16.gmra.mxu0 %v850
          %v1165 = vpop.f32.mrf.mxu0
          %v1166 = vadd.f32 0.0, %v1165
          %v1167 = vpop.f32.mrf.mxu0
          %v1168 = vpop.f32.mrf.mxu0
          %v1169 = vadd.f32 0.0, %v1168
          %v1170 = vpop.f32.mrf.mxu0
          %1171 = vmatprep.mubr.bf16.mxu0 0
          %1172 = vmatmul.mubr.bf16.gmra.mxu0 %v851
          %v1173 = vpop.f32.mrf.mxu0
          %v1174 = vadd.f32 0.0, %v1173
          %v1175 = vpop.f32.mrf.mxu0
          %v1176 = vpop.f32.mrf.mxu0
          %v1177 = vadd.f32 0.0, %v1176
          %v1178 = vpop.f32.mrf.mxu0
          %1179 = vmatprep.mubr.bf16.mxu0 0
          %1180 = vmatmul.mubr.bf16.gmra.mxu0 %v852
          %v1181 = vpop.f32.mrf.mxu0
          %v1182 = vadd.f32 0.0, %v1181
          %v1183 = vpop.f32.mrf.mxu0
          %v1184 = vpop.f32.mrf.mxu0
          %v1185 = vadd.f32 0.0, %v1184
          %v1186 = vpop.f32.mrf.mxu0
          %1187 = vmatprep.mubr.bf16.mxu0 0
          %1188 = vmatmul.mubr.bf16.gmra.mxu0 %v853
          %v1189 = vpop.f32.mrf.mxu0
          %v1190 = vadd.f32 0.0, %v1189
          %v1191 = vpop.f32.mrf.mxu0
          %v1192 = vpop.f32.mrf.mxu0
          %v1193 = vadd.f32 0.0, %v1192
          %v1194 = vpop.f32.mrf.mxu0
          %1195 = vmatprep.mubr.bf16.mxu0 0
          %1196 = vmatmul.mubr.bf16.gmra.mxu0 %v854
          %v1197 = vpop.f32.mrf.mxu0
          %v1198 = vadd.f32 0.0, %v1197
          %v1199 = vpop.f32.mrf.mxu0
          %v1200 = vpop.f32.mrf.mxu0
          %v1201 = vadd.f32 0.0, %v1200
          %v1202 = vpop.f32.mrf.mxu0
          %1203 = vmatprep.mubr.bf16.mxu0 0
          %1204 = vmatmul.mubr.bf16.gmra.mxu0 %v855
          %v1205 = vpop.f32.mrf.mxu0
          %v1206 = vadd.f32 0.0, %v1205
          %v1207 = vpop.f32.mrf.mxu0
          %v1208 = vpop.f32.mrf.mxu0
          %v1209 = vadd.f32 0.0, %v1208
          %v1210 = vpop.f32.mrf.mxu0
          %1211 = vmatprep.mubr.bf16.mxu0 0
          %1212 = vmatmul.mubr.bf16.gmra.mxu0 %v856
          %v1213 = vpop.f32.mrf.mxu0
          %v1214 = vadd.f32 0.0, %v1213
          %v1215 = vpop.f32.mrf.mxu0
          %v1216 = vpop.f32.mrf.mxu0
          %v1217 = vadd.f32 0.0, %v1216
          %v1218 = vpop.f32.mrf.mxu0
          %1219 = vmatprep.mubr.bf16.mxu0 0
          %1220 = vmatmul.mubr.bf16.gmra.mxu0 %v857
          %v1221 = vpop.f32.mrf.mxu0
          %v1222 = vadd.f32 0.0, %v1221
          %v1223 = vpop.f32.mrf.mxu0
          %v1224 = vpop.f32.mrf.mxu0
          %v1225 = vadd.f32 0.0, %v1224
          %v1226 = vpop.f32.mrf.mxu0
          %1227 = vmatprep.mubr.bf16.mxu0 0
          %1228 = vmatmul.mubr.bf16.gmra.mxu0 %v858
          %v1229 = vpop.f32.mrf.mxu0
          %v1230 = vadd.f32 0.0, %v1229
          %v1231 = vpop.f32.mrf.mxu0
          %v1232 = vpop.f32.mrf.mxu0
          %v1233 = vadd.f32 0.0, %v1232
          %v1234 = vpop.f32.mrf.mxu0
          %1235 = vmatprep.mubr.bf16.mxu0 0
          %1236 = vmatmul.mubr.bf16.gmra.mxu0 %v859
          %v1237 = vpop.f32.mrf.mxu0
          %v1238 = vadd.f32 0.0, %v1237
          %v1239 = vpop.f32.mrf.mxu0
          %v1240 = vpop.f32.mrf.mxu0
          %v1241 = vadd.f32 0.0, %v1240
          %v1242 = vpop.f32.mrf.mxu0
          %1243 = vmatprep.mubr.bf16.mxu0 0
          %1244 = vmatmul.mubr.bf16.gmra.mxu0 %v860
          %v1245 = vpop.f32.mrf.mxu0
          %v1246 = vadd.f32 0.0, %v1245
          %v1247 = vpop.f32.mrf.mxu0
          %v1248 = vpop.f32.mrf.mxu0
          %v1249 = vadd.f32 0.0, %v1248
          %v1250 = vpop.f32.mrf.mxu0
          %1251 = vmatprep.mubr.bf16.mxu0 0
          %1252 = vmatmul.mubr.bf16.gmra.mxu0 %v861
          %v1253 = vpop.f32.mrf.mxu0
          %v1254 = vadd.f32 0.0, %v1253
          %v1255 = vpop.f32.mrf.mxu0
          %v1256 = vpop.f32.mrf.mxu0
          %v1257 = vadd.f32 0.0, %v1256
          %v1258 = vpop.f32.mrf.mxu0
          %1259 = vmatprep.mubr.bf16.mxu0 0
          %1260 = vmatmul.mubr.bf16.gmra.mxu0 %v862
          %v1261 = vpop.f32.mrf.mxu0
          %v1262 = vadd.f32 0.0, %v1261
          %v1263 = vpop.f32.mrf.mxu0
          %v1264 = vpop.f32.mrf.mxu0
          %v1265 = vadd.f32 0.0, %v1264
          %v1266 = vpop.f32.mrf.mxu0
          %1267 = vmatprep.mubr.bf16.mxu0 0
          %1268 = vmatmul.mubr.bf16.gmra.mxu0 %v863
          %v1269 = vpop.f32.mrf.mxu0
          %v1270 = vadd.f32 0.0, %v1269
          %v1271 = vpop.f32.mrf.mxu0
          %v1272 = vpop.f32.mrf.mxu0
          %v1273 = vadd.f32 0.0, %v1272
          %v1274 = vpop.f32.mrf.mxu0
          %1275 = vmatprep.mubr.bf16.mxu0 0
          %1276 = vmatmul.mubr.bf16.gmra.mxu0 %v864
          %v1277 = vpop.f32.mrf.mxu0
          %v1278 = vadd.f32 0.0, %v1277
          %v1279 = vpop.f32.mrf.mxu0
          %v1280 = vpop.f32.mrf.mxu0
          %v1281 = vadd.f32 0.0, %v1280
          %v1282 = vpop.f32.mrf.mxu0
          %1283 = vmatprep.mubr.bf16.mxu0 0
          %1284 = vmatmul.mubr.bf16.gmra.mxu0 %v865
          %v1285 = vpop.f32.mrf.mxu0
          %v1286 = vadd.f32 0.0, %v1285
          %v1287 = vpop.f32.mrf.mxu0
          %v1288 = vpop.f32.mrf.mxu0
          %v1289 = vadd.f32 0.0, %v1288
          %v1290 = vpop.f32.mrf.mxu0
          %1291 = vmatprep.mubr.bf16.mxu0 0
          %1292 = vmatmul.mubr.bf16.gmra.mxu0 %v866
          %v1293 = vpop.f32.mrf.mxu0
          %v1294 = vadd.f32 0.0, %v1293
          %v1295 = vpop.f32.mrf.mxu0
          %v1296 = vpop.f32.mrf.mxu0
          %v1297 = vadd.f32 0.0, %v1296
          %v1298 = vpop.f32.mrf.mxu0
          %1299 = vmatprep.mubr.bf16.mxu0 0
          %1300 = vmatmul.mubr.bf16.gmra.mxu0 %v867
          %v1301 = vpop.f32.mrf.mxu0
          %v1302 = vadd.f32 0.0, %v1301
          %v1303 = vpop.f32.mrf.mxu0
          %v1304 = vpop.f32.mrf.mxu0
          %v1305 = vadd.f32 0.0, %v1304
          %v1306 = vpop.f32.mrf.mxu0
          %1307 = vmatprep.mubr.bf16.mxu0 0
          %1308 = vmatmul.mubr.bf16.gmra.mxu0 %v868
          %v1309 = vpop.f32.mrf.mxu0
          %v1310 = vadd.f32 0.0, %v1309
          %v1311 = vpop.f32.mrf.mxu0
          %v1312 = vpop.f32.mrf.mxu0
          %v1313 = vadd.f32 0.0, %v1312
          %v1314 = vpop.f32.mrf.mxu0
          %1315 = vmatprep.mubr.bf16.mxu0 0
          %1316 = vmatmul.mubr.bf16.gmra.mxu0 %v869
          %v1317 = vpop.f32.mrf.mxu0
          %v1318 = vadd.f32 0.0, %v1317
          %v1319 = vpop.f32.mrf.mxu0
          %v1320 = vpop.f32.mrf.mxu0
          %v1321 = vadd.f32 0.0, %v1320
          %v1322 = vpop.f32.mrf.mxu0
          %1323 = vmatprep.mubr.bf16.mxu0 0
          %1324 = vmatmul.mubr.bf16.gmra.mxu0 %v870
          %v1325 = vpop.f32.mrf.mxu0
          %v1326 = vadd.f32 0.0, %v1325
          %v1327 = vpop.f32.mrf.mxu0
          %v1328 = vpop.f32.mrf.mxu0
          %v1329 = vadd.f32 0.0, %v1328
          %v1330 = vpop.f32.mrf.mxu0
          %1331 = vmatprep.mubr.bf16.mxu0 0
          %1332 = vmatmul.mubr.bf16.gmra.mxu0 %v871
          %v1333 = vpop.f32.mrf.mxu0
          %v1334 = vadd.f32 0.0, %v1333
          %v1335 = vpop.f32.mrf.mxu0
          %v1336 = vpop.f32.mrf.mxu0
          %v1337 = vadd.f32 0.0, %v1336
          %v1338 = vpop.f32.mrf.mxu0
          %1339 = vmatprep.mubr.bf16.mxu0 0
          %1340 = vmatmul.mubr.bf16.gmra.mxu0 %v872
          %v1341 = vpop.f32.mrf.mxu0
          %v1342 = vadd.f32 0.0, %v1341
          %v1343 = vpop.f32.mrf.mxu0
          %v1344 = vpop.f32.mrf.mxu0
          %v1345 = vadd.f32 0.0, %v1344
          %v1346 = vpop.f32.mrf.mxu0
          %1347 = vmatprep.mubr.bf16.mxu0 0
          %1348 = vmatmul.mubr.bf16.gmra.mxu0 %v873
          %v1349 = vpop.f32.mrf.mxu0
          %v1350 = vadd.f32 0.0, %v1349
          %v1351 = vpop.f32.mrf.mxu0
          %v1352 = vpop.f32.mrf.mxu0
          %v1353 = vadd.f32 0.0, %v1352
          %v1354 = vpop.f32.mrf.mxu0
          %1355 = vmatprep.mubr.bf16.mxu0 0
          %1356 = vmatmul.mubr.bf16.gmra.mxu0 %v874
          %v1357 = vpop.f32.mrf.mxu0
          %v1358 = vadd.f32 0.0, %v1357
          %v1359 = vpop.f32.mrf.mxu0
          %v1360 = vpop.f32.mrf.mxu0
          %v1361 = vadd.f32 0.0, %v1360
          %v1362 = vpop.f32.mrf.mxu0
          %1363 = vmatprep.mubr.bf16.mxu0 0
          %1364 = vmatmul.mubr.bf16.gmra.mxu0 %v875
          %v1365 = vpop.f32.mrf.mxu0
          %v1366 = vadd.f32 0.0, %v1365
          %v1367 = vpop.f32.mrf.mxu0
          %v1368 = vpop.f32.mrf.mxu0
          %v1369 = vadd.f32 0.0, %v1368
          %v1370 = vpop.f32.mrf.mxu0
          %1371 = vmatprep.mubr.bf16.mxu0 0
          %1372 = vmatmul.mubr.bf16.gmra.mxu0 %v876
          %v1373 = vpop.f32.mrf.mxu0
          %v1374 = vadd.f32 0.0, %v1373
          %v1375 = vpop.f32.mrf.mxu0
          %v1376 = vpop.f32.mrf.mxu0
          %v1377 = vadd.f32 0.0, %v1376
          %v1378 = vpop.f32.mrf.mxu0
          %1379 = vmatprep.mubr.bf16.mxu0 0
          %1380 = vmatmul.mubr.bf16.gmra.mxu0 %v877
          %v1381 = vpop.f32.mrf.mxu0
          %v1382 = vadd.f32 0.0, %v1381
          %v1383 = vpop.f32.mrf.mxu0
          %v1384 = vpop.f32.mrf.mxu0
          %v1385 = vadd.f32 0.0, %v1384
          %v1386 = vpop.f32.mrf.mxu0
          %1387 = vmatprep.mubr.bf16.mxu0 0
          %1388 = vmatmul.mubr.bf16.gmra.mxu0 %v878
          %v1389 = vpop.f32.mrf.mxu0
          %v1390 = vadd.f32 0.0, %v1389
          %v1391 = vpop.f32.mrf.mxu0
          %v1392 = vpop.f32.mrf.mxu0
          %v1393 = vadd.f32 0.0, %v1392
          %v1394 = vpop.f32.mrf.mxu0
          %1395 = vmatprep.mubr.bf16.mxu0 0
          %1396 = vmatmul.mubr.bf16.gmra.mxu0 %v879
          %v1397 = vpop.f32.mrf.mxu0
          %v1398 = vadd.f32 0.0, %v1397
          %v1399 = vpop.f32.mrf.mxu0
          %v1400 = vpop.f32.mrf.mxu0
          %v1401 = vadd.f32 0.0, %v1400
          %v1402 = vpop.f32.mrf.mxu0
          %1403 = vmatprep.mubr.bf16.mxu0 0
          %1404 = vmatmul.mubr.bf16.gmra.mxu0 %v880
          %v1405 = vpop.f32.mrf.mxu0
          %v1406 = vadd.f32 0.0, %v1405
          %v1407 = vpop.f32.mrf.mxu0
          %v1408 = vpop.f32.mrf.mxu0
          %v1409 = vadd.f32 0.0, %v1408
          %v1410 = vpop.f32.mrf.mxu0
          %1411 = vmatprep.mubr.bf16.mxu0 0
          %1412 = vmatmul.mubr.bf16.gmra.mxu0 %v881
          %v1413 = vpop.f32.mrf.mxu0
          %v1414 = vadd.f32 0.0, %v1413
          %v1415 = vpop.f32.mrf.mxu0
          %v1416 = vpop.f32.mrf.mxu0
          %v1417 = vadd.f32 0.0, %v1416
          %v1418 = vpop.f32.mrf.mxu0
          %1419 = vmatprep.mubr.bf16.mxu0 0
          %1420 = vmatmul.mubr.bf16.gmra.mxu0 %v882
          %v1421 = vpop.f32.mrf.mxu0
          %v1422 = vadd.f32 0.0, %v1421
          %v1423 = vpop.f32.mrf.mxu0
          %v1424 = vpop.f32.mrf.mxu0
          %v1425 = vadd.f32 0.0, %v1424
          %v1426 = vpop.f32.mrf.mxu0
          %1427 = vmatprep.mubr.bf16.mxu0 0
          %1428 = vmatmul.mubr.bf16.gmra.mxu0 %v883
          %v1429 = vpop.f32.mrf.mxu0
          %v1430 = vadd.f32 0.0, %v1429
          %v1431 = vpop.f32.mrf.mxu0
          %v1432 = vpop.f32.mrf.mxu0
          %v1433 = vadd.f32 0.0, %v1432
          %v1434 = vpop.f32.mrf.mxu0
          %1435 = vmatprep.mubr.bf16.mxu0 0
          %1436 = vmatmul.mubr.bf16.gmra.mxu0 %v884
          %v1437 = vpop.f32.mrf.mxu0
          %v1438 = vadd.f32 0.0, %v1437
          %v1439 = vpop.f32.mrf.mxu0
          %v1440 = vpop.f32.mrf.mxu0
          %v1441 = vadd.f32 0.0, %v1440
          %v1442 = vpop.f32.mrf.mxu0
          %1443 = vmatprep.mubr.bf16.mxu0 0
          %1444 = vmatmul.mubr.bf16.gmra.mxu0 %v885
          %v1445 = vpop.f32.mrf.mxu0
          %v1446 = vadd.f32 0.0, %v1445
          %v1447 = vpop.f32.mrf.mxu0
          %v1448 = vpop.f32.mrf.mxu0
          %v1449 = vadd.f32 0.0, %v1448
          %v1450 = vpop.f32.mrf.mxu0
          %1451 = vmatprep.mubr.bf16.mxu0 0
          %1452 = vmatmul.mubr.bf16.gmra.mxu0 %v886
          %v1453 = vpop.f32.mrf.mxu0
          %v1454 = vadd.f32 0.0, %v1453
          %v1455 = vpop.f32.mrf.mxu0
          %v1456 = vpop.f32.mrf.mxu0
          %v1457 = vadd.f32 0.0, %v1456
          %v1458 = vpop.f32.mrf.mxu0
          %1459 = vmatprep.mubr.bf16.mxu0 0
          %1460 = vmatmul.mubr.bf16.gmra.mxu0 %v887
          %v1461 = vpop.f32.mrf.mxu0
          %v1462 = vadd.f32 0.0, %v1461
          %v1463 = vpop.f32.mrf.mxu0
          %v1464 = vpop.f32.mrf.mxu0
          %v1465 = vadd.f32 0.0, %v1464
          %v1466 = vpop.f32.mrf.mxu0
          %1467 = vmatprep.mubr.bf16.mxu0 0
          %1468 = vmatmul.mubr.bf16.gmra.mxu0 %v888
          %v1469 = vpop.f32.mrf.mxu0
          %v1470 = vadd.f32 0.0, %v1469
          %v1471 = vpop.f32.mrf.mxu0
          %v1472 = vpop.f32.mrf.mxu0
          %v1473 = vadd.f32 0.0, %v1472
          %v1474 = vpop.f32.mrf.mxu0
          %1475 = vmatprep.mubr.bf16.mxu0 0
          %1476 = vmatmul.mubr.bf16.gmra.mxu0 %v889
          %v1477 = vpop.f32.mrf.mxu0
          %v1478 = vadd.f32 0.0, %v1477
          %v1479 = vpop.f32.mrf.mxu0
          %v1480 = vpop.f32.mrf.mxu0
          %v1481 = vadd.f32 0.0, %v1480
          %v1482 = vpop.f32.mrf.mxu0
          %1483 = vmatprep.mubr.bf16.mxu0 0
          %1484 = vmatmul.mubr.bf16.gmra.mxu0 %v890
          %v1485 = vpop.f32.mrf.mxu0
          %v1486 = vadd.f32 0.0, %v1485
          %v1487 = vpop.f32.mrf.mxu0
          %v1488 = vpop.f32.mrf.mxu0
          %v1489 = vadd.f32 0.0, %v1488
          %v1490 = vpop.f32.mrf.mxu0
          %1491 = vmatprep.mubr.bf16.mxu0 0
          %1492 = vmatmul.mubr.bf16.gmra.mxu0 %v891
          %v1493 = vpop.f32.mrf.mxu0
          %v1494 = vadd.f32 0.0, %v1493
          %v1495 = vpop.f32.mrf.mxu0
          %v1496 = vpop.f32.mrf.mxu0
          %v1497 = vadd.f32 0.0, %v1496
          %v1498 = vpop.f32.mrf.mxu0
          %1499 = vmatprep.mubr.bf16.mxu0 0
          %1500 = vmatmul.mubr.bf16.gmra.mxu0 %v892
          %v1501 = vpop.f32.mrf.mxu0
          %v1502 = vadd.f32 0.0, %v1501
          %v1503 = vpop.f32.mrf.mxu0
          %v1504 = vpop.f32.mrf.mxu0
          %v1505 = vadd.f32 0.0, %v1504
          %v1506 = vpop.f32.mrf.mxu0
          %1507 = vmatprep.mubr.bf16.mxu0 0
          %1508 = vmatmul.mubr.bf16.gmra.mxu0 %v893
          %v1509 = vpop.f32.mrf.mxu0
          %v1510 = vadd.f32 0.0, %v1509
          %v1511 = vpop.f32.mrf.mxu0
          %v1512 = vpop.f32.mrf.mxu0
          %v1513 = vadd.f32 0.0, %v1512
          %v1514 = vpop.f32.mrf.mxu0
          %1515 = vmatprep.mubr.bf16.mxu0 0
          %1516 = vmatmul.mubr.bf16.gmra.mxu0 %v894
          %v1517 = vpop.f32.mrf.mxu0
          %v1518 = vadd.f32 0.0, %v1517
          %v1519 = vpop.f32.mrf.mxu0
          %v1520 = vpop.f32.mrf.mxu0
          %v1521 = vadd.f32 0.0, %v1520
          %v1522 = vpop.f32.mrf.mxu0
          %1523 = vmatprep.mubr.bf16.mxu0 0
          %1524 = vmatmul.mubr.bf16.gmra.mxu0 %v895
          %v1525 = vpop.f32.mrf.mxu0
          %v1526 = vadd.f32 0.0, %v1525
          %v1527 = vpop.f32.mrf.mxu0
          %v1528 = vpop.f32.mrf.mxu0
          %v1529 = vadd.f32 0.0, %v1528
          %v1530 = vpop.f32.mrf.mxu0
          %1531 = vmatprep.mubr.bf16.mxu0 0
          %1532 = vmatmul.mubr.bf16.gmra.mxu0 %v896
          %v1533 = vpop.f32.mrf.mxu0
          %v1534 = vadd.f32 0.0, %v1533
          %v1535 = vpop.f32.mrf.mxu0
          %v1536 = vpop.f32.mrf.mxu0
          %v1537 = vadd.f32 0.0, %v1536
          %v1538 = vpop.f32.mrf.mxu0
          %1539 = vmatprep.mubr.bf16.mxu0 0
          %1540 = vmatmul.mubr.bf16.gmra.mxu0 %v897
          %v1541 = vpop.f32.mrf.mxu0
          %v1542 = vadd.f32 0.0, %v1541
          %v1543 = vpop.f32.mrf.mxu0
          %v1544 = vpop.f32.mrf.mxu0
          %v1545 = vadd.f32 0.0, %v1544
          %v1546 = vpop.f32.mrf.mxu0
          %1547 = vmatprep.mubr.bf16.mxu0 0
          %1548 = vmatmul.mubr.bf16.gmra.mxu0 %v898
          %v1549 = vpop.f32.mrf.mxu0
          %v1550 = vadd.f32 0.0, %v1549
          %v1551 = vpop.f32.mrf.mxu0
          %v1552 = vpop.f32.mrf.mxu0
          %v1553 = vadd.f32 0.0, %v1552
          %v1554 = vpop.f32.mrf.mxu0
          %1555 = vdwg.mxu0
          %s1556 = scalar_lea.vmem [#allocation2], %s424
          %1557 = vst [vmem:[%s1556] sm:$0xff] %v1046
          %1558 = vst [vmem:[%s1556 + $0x8] sm:$0xff] %v1049
          %1559 = vst [vmem:[%s1556 + $0x10] sm:$0xff] %v1054
          %1560 = vst [vmem:[%s1556 + $0x18] sm:$0xff] %v1057
          %1561 = vst [vmem:[%s1556 + $0x20] sm:$0xff] %v1062
          %1562 = vst [vmem:[%s1556 + $0x28] sm:$0xff] %v1065
          %1563 = vst [vmem:[%s1556 + $0x30] sm:$0xff] %v1070
          %1564 = vst [vmem:[%s1556 + $0x38] sm:$0xff] %v1073
          %1565 = vst [vmem:[%s1556 + $0x40] sm:$0xff] %v1078
          %1566 = vst [vmem:[%s1556 + $0x48] sm:$0xff] %v1081
          %1567 = vst [vmem:[%s1556 + $0x50] sm:$0xff] %v1086
          %1568 = vst [vmem:[%s1556 + $0x58] sm:$0xff] %v1089
          %1569 = vst [vmem:[%s1556 + $0x60] sm:$0xff] %v1094
          %1570 = vst [vmem:[%s1556 + $0x68] sm:$0xff] %v1097
          %1571 = vst [vmem:[%s1556 + $0x70] sm:$0xff] %v1102
          %1572 = vst [vmem:[%s1556 + $0x78] sm:$0xff] %v1105
          %1573 = vst [vmem:[%s1556 + $0x80] sm:$0xff] %v1110
          %1574 = vst [vmem:[%s1556 + $0x88] sm:$0xff] %v1113
          %1575 = vst [vmem:[%s1556 + $0x90] sm:$0xff] %v1118
          %1576 = vst [vmem:[%s1556 + $0x98] sm:$0xff] %v1121
          %1577 = vst [vmem:[%s1556 + $0xa0] sm:$0xff] %v1126
          %1578 = vst [vmem:[%s1556 + $0xa8] sm:$0xff] %v1129
          %1579 = vst [vmem:[%s1556 + $0xb0] sm:$0xff] %v1134
          %1580 = vst [vmem:[%s1556 + $0xb8] sm:$0xff] %v1137
          %1581 = vst [vmem:[%s1556 + $0xc0] sm:$0xff] %v1142
          %1582 = vst [vmem:[%s1556 + $0xc8] sm:$0xff] %v1145
          %1583 = vst [vmem:[%s1556 + $0xd0] sm:$0xff] %v1150
          %1584 = vst [vmem:[%s1556 + $0xd8] sm:$0xff] %v1153
          %1585 = vst [vmem:[%s1556 + $0xe0] sm:$0xff] %v1158
          %1586 = vst [vmem:[%s1556 + $0xe8] sm:$0xff] %v1161
          %1587 = vst [vmem:[%s1556 + $0xf0] sm:$0xff] %v1166
          %1588 = vst [vmem:[%s1556 + $0xf8] sm:$0xff] %v1169
          %1589 = vst [vmem:[%s1556 + $0x100] sm:$0xff] %v1174
          %1590 = vst [vmem:[%s1556 + $0x108] sm:$0xff] %v1177
          %1591 = vst [vmem:[%s1556 + $0x110] sm:$0xff] %v1182
          %1592 = vst [vmem:[%s1556 + $0x118] sm:$0xff] %v1185
          %1593 = vst [vmem:[%s1556 + $0x120] sm:$0xff] %v1190
          %1594 = vst [vmem:[%s1556 + $0x128] sm:$0xff] %v1193
          %1595 = vst [vmem:[%s1556 + $0x130] sm:$0xff] %v1198
          %1596 = vst [vmem:[%s1556 + $0x138] sm:$0xff] %v1201
          %1597 = vst [vmem:[%s1556 + $0x140] sm:$0xff] %v1206
          %1598 = vst [vmem:[%s1556 + $0x148] sm:$0xff] %v1209
          %1599 = vst [vmem:[%s1556 + $0x150] sm:$0xff] %v1214
          %1600 = vst [vmem:[%s1556 + $0x158] sm:$0xff] %v1217
          %1601 = vst [vmem:[%s1556 + $0x160] sm:$0xff] %v1222
          %1602 = vst [vmem:[%s1556 + $0x168] sm:$0xff] %v1225
          %1603 = vst [vmem:[%s1556 + $0x170] sm:$0xff] %v1230
          %1604 = vst [vmem:[%s1556 + $0x178] sm:$0xff] %v1233
          %1605 = vst [vmem:[%s1556 + $0x180] sm:$0xff] %v1238
          %1606 = vst [vmem:[%s1556 + $0x188] sm:$0xff] %v1241
          %1607 = vst [vmem:[%s1556 + $0x190] sm:$0xff] %v1246
          %1608 = vst [vmem:[%s1556 + $0x198] sm:$0xff] %v1249
          %1609 = vst [vmem:[%s1556 + $0x1a0] sm:$0xff] %v1254
          %1610 = vst [vmem:[%s1556 + $0x1a8] sm:$0xff] %v1257
          %1611 = vst [vmem:[%s1556 + $0x1b0] sm:$0xff] %v1262
          %1612 = vst [vmem:[%s1556 + $0x1b8] sm:$0xff] %v1265
          %1613 = vst [vmem:[%s1556 + $0x1c0] sm:$0xff] %v1270
          %1614 = vst [vmem:[%s1556 + $0x1c8] sm:$0xff] %v1273
          %1615 = vst [vmem:[%s1556 + $0x1d0] sm:$0xff] %v1278
          %1616 = vst [vmem:[%s1556 + $0x1d8] sm:$0xff] %v1281
          %1617 = vst [vmem:[%s1556 + $0x1e0] sm:$0xff] %v1286
          %1618 = vst [vmem:[%s1556 + $0x1e8] sm:$0xff] %v1289
          %1619 = vst [vmem:[%s1556 + $0x1f0] sm:$0xff] %v1294
          %1620 = vst [vmem:[%s1556 + $0x1f8] sm:$0xff] %v1297
          %1621 = vst [vmem:[%s1556 + $0x200] sm:$0xff] %v1302
          %1622 = vst [vmem:[%s1556 + $0x208] sm:$0xff] %v1305
          %1623 = vst [vmem:[%s1556 + $0x210] sm:$0xff] %v1310
          %1624 = vst [vmem:[%s1556 + $0x218] sm:$0xff] %v1313
          %1625 = vst [vmem:[%s1556 + $0x220] sm:$0xff] %v1318
          %1626 = vst [vmem:[%s1556 + $0x228] sm:$0xff] %v1321
          %1627 = vst [vmem:[%s1556 + $0x230] sm:$0xff] %v1326
          %1628 = vst [vmem:[%s1556 + $0x238] sm:$0xff] %v1329
          %1629 = vst [vmem:[%s1556 + $0x240] sm:$0xff] %v1334
          %1630 = vst [vmem:[%s1556 + $0x248] sm:$0xff] %v1337
          %1631 = vst [vmem:[%s1556 + $0x250] sm:$0xff] %v1342
          %1632 = vst [vmem:[%s1556 + $0x258] sm:$0xff] %v1345
          %1633 = vst [vmem:[%s1556 + $0x260] sm:$0xff] %v1350
          %1634 = vst [vmem:[%s1556 + $0x268] sm:$0xff] %v1353
          %1635 = vst [vmem:[%s1556 + $0x270] sm:$0xff] %v1358
          %1636 = vst [vmem:[%s1556 + $0x278] sm:$0xff] %v1361
          %1637 = vst [vmem:[%s1556 + $0x280] sm:$0xff] %v1366
          %1638 = vst [vmem:[%s1556 + $0x288] sm:$0xff] %v1369
          %1639 = vst [vmem:[%s1556 + $0x290] sm:$0xff] %v1374
          %1640 = vst [vmem:[%s1556 + $0x298] sm:$0xff] %v1377
          %1641 = vst [vmem:[%s1556 + $0x2a0] sm:$0xff] %v1382
          %1642 = vst [vmem:[%s1556 + $0x2a8] sm:$0xff] %v1385
          %1643 = vst [vmem:[%s1556 + $0x2b0] sm:$0xff] %v1390
          %1644 = vst [vmem:[%s1556 + $0x2b8] sm:$0xff] %v1393
          %1645 = vst [vmem:[%s1556 + $0x2c0] sm:$0xff] %v1398
          %1646 = vst [vmem:[%s1556 + $0x2c8] sm:$0xff] %v1401
          %1647 = vst [vmem:[%s1556 + $0x2d0] sm:$0xff] %v1406
          %1648 = vst [vmem:[%s1556 + $0x2d8] sm:$0xff] %v1409
          %1649 = vst [vmem:[%s1556 + $0x2e0] sm:$0xff] %v1414
          %1650 = vst [vmem:[%s1556 + $0x2e8] sm:$0xff] %v1417
          %1651 = vst [vmem:[%s1556 + $0x2f0] sm:$0xff] %v1422
          %1652 = vst [vmem:[%s1556 + $0x2f8] sm:$0xff] %v1425
          %1653 = vst [vmem:[%s1556 + $0x300] sm:$0xff] %v1430
          %1654 = vst [vmem:[%s1556 + $0x308] sm:$0xff] %v1433
          %1655 = vst [vmem:[%s1556 + $0x310] sm:$0xff] %v1438
          %1656 = vst [vmem:[%s1556 + $0x318] sm:$0xff] %v1441
          %1657 = vst [vmem:[%s1556 + $0x320] sm:$0xff] %v1446
          %1658 = vst [vmem:[%s1556 + $0x328] sm:$0xff] %v1449
          %1659 = vst [vmem:[%s1556 + $0x330] sm:$0xff] %v1454
          %1660 = vst [vmem:[%s1556 + $0x338] sm:$0xff] %v1457
          %1661 = vst [vmem:[%s1556 + $0x340] sm:$0xff] %v1462
          %1662 = vst [vmem:[%s1556 + $0x348] sm:$0xff] %v1465
          %1663 = vst [vmem:[%s1556 + $0x350] sm:$0xff] %v1470
          %1664 = vst [vmem:[%s1556 + $0x358] sm:$0xff] %v1473
          %1665 = vst [vmem:[%s1556 + $0x360] sm:$0xff] %v1478
          %1666 = vst [vmem:[%s1556 + $0x368] sm:$0xff] %v1481
          %1667 = vst [vmem:[%s1556 + $0x370] sm:$0xff] %v1486
          %1668 = vst [vmem:[%s1556 + $0x378] sm:$0xff] %v1489
          %1669 = vst [vmem:[%s1556 + $0x380] sm:$0xff] %v1494
          %1670 = vst [vmem:[%s1556 + $0x388] sm:$0xff] %v1497
          %1671 = vst [vmem:[%s1556 + $0x390] sm:$0xff] %v1502
          %1672 = vst [vmem:[%s1556 + $0x398] sm:$0xff] %v1505
          %1673 = vst [vmem:[%s1556 + $0x3a0] sm:$0xff] %v1510
          %1674 = vst [vmem:[%s1556 + $0x3a8] sm:$0xff] %v1513
          %1675 = vst [vmem:[%s1556 + $0x3b0] sm:$0xff] %v1518
          %1676 = vst [vmem:[%s1556 + $0x3b8] sm:$0xff] %v1521
          %1677 = vst [vmem:[%s1556 + $0x3c0] sm:$0xff] %v1526
          %1678 = vst [vmem:[%s1556 + $0x3c8] sm:$0xff] %v1529
          %1679 = vst [vmem:[%s1556 + $0x3d0] sm:$0xff] %v1534
          %1680 = vst [vmem:[%s1556 + $0x3d8] sm:$0xff] %v1537
          %1681 = vst [vmem:[%s1556 + $0x3e0] sm:$0xff] %v1542
          %1682 = vst [vmem:[%s1556 + $0x3e8] sm:$0xff] %v1545
          %1683 = vst [vmem:[%s1556 + $0x3f0] sm:$0xff] %v1550
          %1684 = vst [vmem:[%s1556 + $0x3f8] sm:$0xff] %v1553
          %v1685 = vld [vmem:[#allocation4] sm:$0x1]
          %v1686 = vadd.f32 %v1046, %v1049
          %v1687 = vadd.f32 %v1686, %v1054
          %v1688 = vadd.f32 %v1687, %v1057
          %v1689 = vadd.f32 %v1688, %v1062
          %v1690 = vadd.f32 %v1689, %v1065
          %v1691 = vadd.f32 %v1690, %v1070
          %v1692 = vadd.f32 %v1691, %v1073
          %v1693 = vadd.f32 %v1692, %v1078
          %v1694 = vadd.f32 %v1693, %v1081
          %v1695 = vadd.f32 %v1694, %v1086
          %v1696 = vadd.f32 %v1695, %v1089
          %v1697 = vadd.f32 %v1696, %v1094
          %v1698 = vadd.f32 %v1697, %v1097
          %v1699 = vadd.f32 %v1698, %v1102
          %v1700 = vadd.f32 %v1699, %v1105
          %v1701 = vadd.f32 %v1700, %v1110
          %v1702 = vadd.f32 %v1701, %v1113
          %v1703 = vadd.f32 %v1702, %v1118
          %v1704 = vadd.f32 %v1703, %v1121
          %v1705 = vadd.f32 %v1704, %v1126
          %v1706 = vadd.f32 %v1705, %v1129
          %v1707 = vadd.f32 %v1706, %v1134
          %v1708 = vadd.f32 %v1707, %v1137
          %v1709 = vadd.f32 %v1708, %v1142
          %v1710 = vadd.f32 %v1709, %v1145
          %v1711 = vadd.f32 %v1710, %v1150
          %v1712 = vadd.f32 %v1711, %v1153
          %v1713 = vadd.f32 %v1712, %v1158
          %v1714 = vadd.f32 %v1713, %v1161
          %v1715 = vadd.f32 %v1714, %v1166
          %v1716 = vadd.f32 %v1715, %v1169
          %v1717 = vadd.f32 %v1716, %v1174
          %v1718 = vadd.f32 %v1717, %v1177
          %v1719 = vadd.f32 %v1718, %v1182
          %v1720 = vadd.f32 %v1719, %v1185
          %v1721 = vadd.f32 %v1720, %v1190
          %v1722 = vadd.f32 %v1721, %v1193
          %v1723 = vadd.f32 %v1722, %v1198
          %v1724 = vadd.f32 %v1723, %v1201
          %v1725 = vadd.f32 %v1724, %v1206
          %v1726 = vadd.f32 %v1725, %v1209
          %v1727 = vadd.f32 %v1726, %v1214
          %v1728 = vadd.f32 %v1727, %v1217
          %v1729 = vadd.f32 %v1728, %v1222
          %v1730 = vadd.f32 %v1729, %v1225
          %v1731 = vadd.f32 %v1730, %v1230
          %v1732 = vadd.f32 %v1731, %v1233
          %v1733 = vadd.f32 %v1732, %v1238
          %v1734 = vadd.f32 %v1733, %v1241
          %v1735 = vadd.f32 %v1734, %v1246
          %v1736 = vadd.f32 %v1735, %v1249
          %v1737 = vadd.f32 %v1736, %v1254
          %v1738 = vadd.f32 %v1737, %v1257
          %v1739 = vadd.f32 %v1738, %v1262
          %v1740 = vadd.f32 %v1739, %v1265
          %v1741 = vadd.f32 %v1740, %v1270
          %v1742 = vadd.f32 %v1741, %v1273
          %v1743 = vadd.f32 %v1742, %v1278
          %v1744 = vadd.f32 %v1743, %v1281
          %v1745 = vadd.f32 %v1744, %v1286
          %v1746 = vadd.f32 %v1745, %v1289
          %v1747 = vadd.f32 %v1746, %v1294
          %v1748 = vadd.f32 %v1747, %v1297
          %v1749 = vadd.f32 %v1748, %v1302
          %v1750 = vadd.f32 %v1749, %v1305
          %v1751 = vadd.f32 %v1750, %v1310
          %v1752 = vadd.f32 %v1751, %v1313
          %v1753 = vadd.f32 %v1752, %v1318
          %v1754 = vadd.f32 %v1753, %v1321
          %v1755 = vadd.f32 %v1754, %v1326
          %v1756 = vadd.f32 %v1755, %v1329
          %v1757 = vadd.f32 %v1756, %v1334
          %v1758 = vadd.f32 %v1757, %v1337
          %v1759 = vadd.f32 %v1758, %v1342
          %v1760 = vadd.f32 %v1759, %v1345
          %v1761 = vadd.f32 %v1760, %v1350
          %v1762 = vadd.f32 %v1761, %v1353
          %v1763 = vadd.f32 %v1762, %v1358
          %v1764 = vadd.f32 %v1763, %v1361
          %v1765 = vadd.f32 %v1764, %v1366
          %v1766 = vadd.f32 %v1765, %v1369
          %v1767 = vadd.f32 %v1766, %v1374
          %v1768 = vadd.f32 %v1767, %v1377
          %v1769 = vadd.f32 %v1768, %v1382
          %v1770 = vadd.f32 %v1769, %v1385
          %v1771 = vadd.f32 %v1770, %v1390
          %v1772 = vadd.f32 %v1771, %v1393
          %v1773 = vadd.f32 %v1772, %v1398
          %v1774 = vadd.f32 %v1773, %v1401
          %v1775 = vadd.f32 %v1774, %v1406
          %v1776 = vadd.f32 %v1775, %v1409
          %v1777 = vadd.f32 %v1776, %v1414
          %v1778 = vadd.f32 %v1777, %v1417
          %v1779 = vadd.f32 %v1778, %v1422
          %v1780 = vadd.f32 %v1779, %v1425
          %v1781 = vadd.f32 %v1780, %v1430
          %v1782 = vadd.f32 %v1781, %v1433
          %v1783 = vadd.f32 %v1782, %v1438
          %v1784 = vadd.f32 %v1783, %v1441
          %v1785 = vadd.f32 %v1784, %v1446
          %v1786 = vadd.f32 %v1785, %v1449
          %v1787 = vadd.f32 %v1786, %v1454
          %v1788 = vadd.f32 %v1787, %v1457
          %v1789 = vadd.f32 %v1788, %v1462
          %v1790 = vadd.f32 %v1789, %v1465
          %v1791 = vadd.f32 %v1790, %v1470
          %v1792 = vadd.f32 %v1791, %v1473
          %v1793 = vadd.f32 %v1792, %v1478
          %v1794 = vadd.f32 %v1793, %v1481
          %v1795 = vadd.f32 %v1794, %v1486
          %v1796 = vadd.f32 %v1795, %v1489
          %v1797 = vadd.f32 %v1796, %v1494
          %v1798 = vadd.f32 %v1797, %v1497
          %v1799 = vadd.f32 %v1798, %v1502
          %v1800 = vadd.f32 %v1799, %v1505
          %v1801 = vadd.f32 %v1800, %v1510
          %v1802 = vadd.f32 %v1801, %v1513
          %v1803 = vadd.f32 %v1802, %v1518
          %v1804 = vadd.f32 %v1803, %v1521
          %v1805 = vadd.f32 %v1804, %v1526
          %v1806 = vadd.f32 %v1805, %v1529
          %v1807 = vadd.f32 %v1806, %v1534
          %v1808 = vadd.f32 %v1807, %v1537
          %v1809 = vadd.f32 %v1808, %v1542
          %v1810 = vadd.f32 %v1809, %v1545
          %v1811 = vadd.f32 %v1810, %v1550
          %v1812 = vadd.f32 %v1811, %v1553
          %v1813 = vrot.slane %v1812, 4
          %v1814 = vadd.f32 %v1812, %v1813
          %v1815 = vrot.slane %v1814, 2
          %v1816 = vadd.f32 %v1814, %v1815
          %v1817 = vrot.slane %v1816, 1
          %v1818 = vadd.f32 %v1816, %v1817
          %v1819 = vadd.f32 %v1685, %v1818
          %1820 = vst [vmem:[#allocation4] sm:$0x1] %v1819
          %v1821 = vld [vmem:[#allocation5] sm:$0x1]
          %v1822 = vmul.f32 %v1046, %v1046
          %v1823 = vmul.f32 %v1049, %v1049
          %v1824 = vmul.f32 %v1054, %v1054
          %v1825 = vmul.f32 %v1057, %v1057
          %v1826 = vmul.f32 %v1062, %v1062
          %v1827 = vmul.f32 %v1065, %v1065
          %v1828 = vmul.f32 %v1070, %v1070
          %v1829 = vmul.f32 %v1073, %v1073
          %v1830 = vmul.f32 %v1078, %v1078
          %v1831 = vmul.f32 %v1081, %v1081
          %v1832 = vmul.f32 %v1086, %v1086
          %v1833 = vmul.f32 %v1089, %v1089
          %v1834 = vmul.f32 %v1094, %v1094
          %v1835 = vmul.f32 %v1097, %v1097
          %v1836 = vmul.f32 %v1102, %v1102
          %v1837 = vmul.f32 %v1105, %v1105
          %v1838 = vmul.f32 %v1110, %v1110
          %v1839 = vmul.f32 %v1113, %v1113
          %v1840 = vmul.f32 %v1118, %v1118
          %v1841 = vmul.f32 %v1121, %v1121
          %v1842 = vmul.f32 %v1126, %v1126
          %v1843 = vmul.f32 %v1129, %v1129
          %v1844 = vmul.f32 %v1134, %v1134
          %v1845 = vmul.f32 %v1137, %v1137
          %v1846 = vmul.f32 %v1142, %v1142
          %v1847 = vmul.f32 %v1145, %v1145
          %v1848 = vmul.f32 %v1150, %v1150
          %v1849 = vmul.f32 %v1153, %v1153
          %v1850 = vmul.f32 %v1158, %v1158
          %v1851 = vmul.f32 %v1161, %v1161
          %v1852 = vmul.f32 %v1166, %v1166
          %v1853 = vmul.f32 %v1169, %v1169
          %v1854 = vmul.f32 %v1174, %v1174
          %v1855 = vmul.f32 %v1177, %v1177
          %v1856 = vmul.f32 %v1182, %v1182
          %v1857 = vmul.f32 %v1185, %v1185
          %v1858 = vmul.f32 %v1190, %v1190
          %v1859 = vmul.f32 %v1193, %v1193
          %v1860 = vmul.f32 %v1198, %v1198
          %v1861 = vmul.f32 %v1201, %v1201
          %v1862 = vmul.f32 %v1206, %v1206
          %v1863 = vmul.f32 %v1209, %v1209
          %v1864 = vmul.f32 %v1214, %v1214
          %v1865 = vmul.f32 %v1217, %v1217
          %v1866 = vmul.f32 %v1222, %v1222
          %v1867 = vmul.f32 %v1225, %v1225
          %v1868 = vmul.f32 %v1230, %v1230
          %v1869 = vmul.f32 %v1233, %v1233
          %v1870 = vmul.f32 %v1238, %v1238
          %v1871 = vmul.f32 %v1241, %v1241
          %v1872 = vmul.f32 %v1246, %v1246
          %v1873 = vmul.f32 %v1249, %v1249
          %v1874 = vmul.f32 %v1254, %v1254
          %v1875 = vmul.f32 %v1257, %v1257
          %v1876 = vmul.f32 %v1262, %v1262
          %v1877 = vmul.f32 %v1265, %v1265
          %v1878 = vmul.f32 %v1270, %v1270
          %v1879 = vmul.f32 %v1273, %v1273
          %v1880 = vmul.f32 %v1278, %v1278
          %v1881 = vmul.f32 %v1281, %v1281
          %v1882 = vmul.f32 %v1286, %v1286
          %v1883 = vmul.f32 %v1289, %v1289
          %v1884 = vmul.f32 %v1294, %v1294
          %v1885 = vmul.f32 %v1297, %v1297
          %v1886 = vmul.f32 %v1302, %v1302
          %v1887 = vmul.f32 %v1305, %v1305
          %v1888 = vmul.f32 %v1310, %v1310
          %v1889 = vmul.f32 %v1313, %v1313
          %v1890 = vmul.f32 %v1318, %v1318
          %v1891 = vmul.f32 %v1321, %v1321
          %v1892 = vmul.f32 %v1326, %v1326
          %v1893 = vmul.f32 %v1329, %v1329
          %v1894 = vmul.f32 %v1334, %v1334
          %v1895 = vmul.f32 %v1337, %v1337
          %v1896 = vmul.f32 %v1342, %v1342
          %v1897 = vmul.f32 %v1345, %v1345
          %v1898 = vmul.f32 %v1350, %v1350
          %v1899 = vmul.f32 %v1353, %v1353
          %v1900 = vmul.f32 %v1358, %v1358
          %v1901 = vmul.f32 %v1361, %v1361
          %v1902 = vmul.f32 %v1366, %v1366
          %v1903 = vmul.f32 %v1369, %v1369
          %v1904 = vmul.f32 %v1374, %v1374
          %v1905 = vmul.f32 %v1377, %v1377
          %v1906 = vmul.f32 %v1382, %v1382
          %v1907 = vmul.f32 %v1385, %v1385
          %v1908 = vmul.f32 %v1390, %v1390
          %v1909 = vmul.f32 %v1393, %v1393
          %v1910 = vmul.f32 %v1398, %v1398
          %v1911 = vmul.f32 %v1401, %v1401
          %v1912 = vmul.f32 %v1406, %v1406
          %v1913 = vmul.f32 %v1409, %v1409
          %v1914 = vmul.f32 %v1414, %v1414
          %v1915 = vmul.f32 %v1417, %v1417
          %v1916 = vmul.f32 %v1422, %v1422
          %v1917 = vmul.f32 %v1425, %v1425
          %v1918 = vmul.f32 %v1430, %v1430
          %v1919 = vmul.f32 %v1433, %v1433
          %v1920 = vmul.f32 %v1438, %v1438
          %v1921 = vmul.f32 %v1441, %v1441
          %v1922 = vmul.f32 %v1446, %v1446
          %v1923 = vmul.f32 %v1449, %v1449
          %v1924 = vmul.f32 %v1454, %v1454
          %v1925 = vmul.f32 %v1457, %v1457
          %v1926 = vmul.f32 %v1462, %v1462
          %v1927 = vmul.f32 %v1465, %v1465
          %v1928 = vmul.f32 %v1470, %v1470
          %v1929 = vmul.f32 %v1473, %v1473
          %v1930 = vmul.f32 %v1478, %v1478
          %v1931 = vmul.f32 %v1481, %v1481
          %v1932 = vmul.f32 %v1486, %v1486
          %v1933 = vmul.f32 %v1489, %v1489
          %v1934 = vmul.f32 %v1494, %v1494
          %v1935 = vmul.f32 %v1497, %v1497
          %v1936 = vmul.f32 %v1502, %v1502
          %v1937 = vmul.f32 %v1505, %v1505
          %v1938 = vmul.f32 %v1510, %v1510
          %v1939 = vmul.f32 %v1513, %v1513
          %v1940 = vmul.f32 %v1518, %v1518
          %v1941 = vmul.f32 %v1521, %v1521
          %v1942 = vmul.f32 %v1526, %v1526
          %v1943 = vmul.f32 %v1529, %v1529
          %v1944 = vmul.f32 %v1534, %v1534
          %v1945 = vmul.f32 %v1537, %v1537
          %v1946 = vmul.f32 %v1542, %v1542
          %v1947 = vmul.f32 %v1545, %v1545
          %v1948 = vmul.f32 %v1550, %v1550
          %v1949 = vmul.f32 %v1553, %v1553
          %v1950 = vadd.f32 %v1822, %v1823
          %v1951 = vadd.f32 %v1950, %v1824
          %v1952 = vadd.f32 %v1951, %v1825
          %v1953 = vadd.f32 %v1952, %v1826
          %v1954 = vadd.f32 %v1953, %v1827
          %v1955 = vadd.f32 %v1954, %v1828
          %v1956 = vadd.f32 %v1955, %v1829
          %v1957 = vadd.f32 %v1956, %v1830
          %v1958 = vadd.f32 %v1957, %v1831
          %v1959 = vadd.f32 %v1958, %v1832
          %v1960 = vadd.f32 %v1959, %v1833
          %v1961 = vadd.f32 %v1960, %v1834
          %v1962 = vadd.f32 %v1961, %v1835
          %v1963 = vadd.f32 %v1962, %v1836
          %v1964 = vadd.f32 %v1963, %v1837
          %v1965 = vadd.f32 %v1964, %v1838
          %v1966 = vadd.f32 %v1965, %v1839
          %v1967 = vadd.f32 %v1966, %v1840
          %v1968 = vadd.f32 %v1967, %v1841
          %v1969 = vadd.f32 %v1968, %v1842
          %v1970 = vadd.f32 %v1969, %v1843
          %v1971 = vadd.f32 %v1970, %v1844
          %v1972 = vadd.f32 %v1971, %v1845
          %v1973 = vadd.f32 %v1972, %v1846
          %v1974 = vadd.f32 %v1973, %v1847
          %v1975 = vadd.f32 %v1974, %v1848
          %v1976 = vadd.f32 %v1975, %v1849
          %v1977 = vadd.f32 %v1976, %v1850
          %v1978 = vadd.f32 %v1977, %v1851
          %v1979 = vadd.f32 %v1978, %v1852
          %v1980 = vadd.f32 %v1979, %v1853
          %v1981 = vadd.f32 %v1980, %v1854
          %v1982 = vadd.f32 %v1981, %v1855
          %v1983 = vadd.f32 %v1982, %v1856
          %v1984 = vadd.f32 %v1983, %v1857
          %v1985 = vadd.f32 %v1984, %v1858
          %v1986 = vadd.f32 %v1985, %v1859
          %v1987 = vadd.f32 %v1986, %v1860
          %v1988 = vadd.f32 %v1987, %v1861
          %v1989 = vadd.f32 %v1988, %v1862
          %v1990 = vadd.f32 %v1989, %v1863
          %v1991 = vadd.f32 %v1990, %v1864
          %v1992 = vadd.f32 %v1991, %v1865
          %v1993 = vadd.f32 %v1992, %v1866
          %v1994 = vadd.f32 %v1993, %v1867
          %v1995 = vadd.f32 %v1994, %v1868
          %v1996 = vadd.f32 %v1995, %v1869
          %v1997 = vadd.f32 %v1996, %v1870
          %v1998 = vadd.f32 %v1997, %v1871
          %v1999 = vadd.f32 %v1998, %v1872
          %v2000 = vadd.f32 %v1999, %v1873
          %v2001 = vadd.f32 %v2000, %v1874
          %v2002 = vadd.f32 %v2001, %v1875
          %v2003 = vadd.f32 %v2002, %v1876
          %v2004 = vadd.f32 %v2003, %v1877
          %v2005 = vadd.f32 %v2004, %v1878
          %v2006 = vadd.f32 %v2005, %v1879
          %v2007 = vadd.f32 %v2006, %v1880
          %v2008 = vadd.f32 %v2007, %v1881
          %v2009 = vadd.f32 %v2008, %v1882
          %v2010 = vadd.f32 %v2009, %v1883
          %v2011 = vadd.f32 %v2010, %v1884
          %v2012 = vadd.f32 %v2011, %v1885
          %v2013 = vadd.f32 %v2012, %v1886
          %v2014 = vadd.f32 %v2013, %v1887
          %v2015 = vadd.f32 %v2014, %v1888
          %v2016 = vadd.f32 %v2015, %v1889
          %v2017 = vadd.f32 %v2016, %v1890
          %v2018 = vadd.f32 %v2017, %v1891
          %v2019 = vadd.f32 %v2018, %v1892
          %v2020 = vadd.f32 %v2019, %v1893
          %v2021 = vadd.f32 %v2020, %v1894
          %v2022 = vadd.f32 %v2021, %v1895
          %v2023 = vadd.f32 %v2022, %v1896
          %v2024 = vadd.f32 %v2023, %v1897
          %v2025 = vadd.f32 %v2024, %v1898
          %v2026 = vadd.f32 %v2025, %v1899
          %v2027 = vadd.f32 %v2026, %v1900
          %v2028 = vadd.f32 %v2027, %v1901
          %v2029 = vadd.f32 %v2028, %v1902
          %v2030 = vadd.f32 %v2029, %v1903
          %v2031 = vadd.f32 %v2030, %v1904
          %v2032 = vadd.f32 %v2031, %v1905
          %v2033 = vadd.f32 %v2032, %v1906
          %v2034 = vadd.f32 %v2033, %v1907
          %v2035 = vadd.f32 %v2034, %v1908
          %v2036 = vadd.f32 %v2035, %v1909
          %v2037 = vadd.f32 %v2036, %v1910
          %v2038 = vadd.f32 %v2037, %v1911
          %v2039 = vadd.f32 %v2038, %v1912
          %v2040 = vadd.f32 %v2039, %v1913
          %v2041 = vadd.f32 %v2040, %v1914
          %v2042 = vadd.f32 %v2041, %v1915
          %v2043 = vadd.f32 %v2042, %v1916
          %v2044 = vadd.f32 %v2043, %v1917
          %v2045 = vadd.f32 %v2044, %v1918
          %v2046 = vadd.f32 %v2045, %v1919
          %v2047 = vadd.f32 %v2046, %v1920
          %v2048 = vadd.f32 %v2047, %v1921
          %v2049 = vadd.f32 %v2048, %v1922
          %v2050 = vadd.f32 %v2049, %v1923
          %v2051 = vadd.f32 %v2050, %v1924
          %v2052 = vadd.f32 %v2051, %v1925
          %v2053 = vadd.f32 %v2052, %v1926
          %v2054 = vadd.f32 %v2053, %v1927
          %v2055 = vadd.f32 %v2054, %v1928
          %v2056 = vadd.f32 %v2055, %v1929
          %v2057 = vadd.f32 %v2056, %v1930
          %v2058 = vadd.f32 %v2057, %v1931
          %v2059 = vadd.f32 %v2058, %v1932
          %v2060 = vadd.f32 %v2059, %v1933
          %v2061 = vadd.f32 %v2060, %v1934
          %v2062 = vadd.f32 %v2061, %v1935
          %v2063 = vadd.f32 %v2062, %v1936
          %v2064 = vadd.f32 %v2063, %v1937
          %v2065 = vadd.f32 %v2064, %v1938
          %v2066 = vadd.f32 %v2065, %v1939
          %v2067 = vadd.f32 %v2066, %v1940
          %v2068 = vadd.f32 %v2067, %v1941
          %v2069 = vadd.f32 %v2068, %v1942
          %v2070 = vadd.f32 %v2069, %v1943
          %v2071 = vadd.f32 %v2070, %v1944
          %v2072 = vadd.f32 %v2071, %v1945
          %v2073 = vadd.f32 %v2072, %v1946
          %v2074 = vadd.f32 %v2073, %v1947
          %v2075 = vadd.f32 %v2074, %v1948
          %v2076 = vadd.f32 %v2075, %v1949
          %v2077 = vrot.slane %v2076, 4
          %v2078 = vadd.f32 %v2076, %v2077
          %v2079 = vrot.slane %v2078, 2
          %v2080 = vadd.f32 %v2078, %v2079
          %v2081 = vrot.slane %v2080, 1
          %v2082 = vadd.f32 %v2080, %v2081
          %v2083 = vadd.f32 %v1821, %v2082
          %2084 = vst [vmem:[#allocation5] sm:$0x1] %v2083
          %p2085 = scmp.eq.s32.totalorder %s33, 1
          // Predicated region
          $region81: #{tpu_custom_call.1} parent=75 // pred_check
            %p2086 = pneg %p2085
          $region82: #{tpu_custom_call.1} parent=75 // pred_check_branch
            %2088 = sbr.rel (%p2086) target = $region84
          $region83: #{tpu_custom_call.1} parent=75 // pred_region
            %v2089 = vld [vmem:[#allocation4] sm:$0x1]
            %v2090 = vmul.f32 %v2089, 0.00048828125
            %v2091 = vld [vmem:[#allocation5] sm:$0x1]
            %v2092 = vmul.f32 %v2091, 0.00048828125
            %v2093 = vmul.f32 %v2090, %v2090
            %v2094 = vsub.f32 %v2092, %v2093
            %v2095 = vmax.f32 %v2094, 0.0
            %v2096 = vadd.f32 %v2095, 1e-05
            %v2097 = vrsqrt.pop %v2096
            %v2098 = vld [vmem:[%s2] sm:$0x1]
            %v2099 = vmul.f32 %v2097, %v2098
            %2100 = vst [vmem:[#allocation4] sm:$0x1] %v2099
            %v2101 = vld [vmem:[%s3] sm:$0x1]
            %v2102 = vmul.f32 %v2090, %v2099
            %v2103 = vsub.f32 %v2101, %v2102
            %2104 = vst [vmem:[#allocation5] sm:$0x1] %v2103
          $region84: #{tpu_custom_call.1} parent=75 // pred_fallthru
            _
        $region76: #{tpu_custom_call.1} parent=55 // pred_fallthru
          _
        %p2105 = scmp.eq.s32.totalorder %s32, 1
        // Predicated region
        $region85: #{tpu_custom_call.1} parent=55 // pred_check
          %p2106 = pneg %p2105
        $region86: #{tpu_custom_call.1} parent=55 // pred_check_branch
          %2108 = sbr.rel (%p2106) target = $region88
        $region87: #{tpu_custom_call.1} parent=55 // pred_region
          %p2109 = scmp.eq.s32.totalorder %s33, 0
          // Predicated region
          $region89: #{tpu_custom_call.1} parent=87 // pred_check
            %p2110 = pneg %p2109
          $region90: #{tpu_custom_call.1} parent=87 // pred_check_branch
            %2112 = sbr.rel (%p2110) target = $region92
          $region91: #{tpu_custom_call.1} parent=87 // pred_region
            %2113 = vst [vmem:[#allocation6] sm:$0x1] 0.0
            %2114 = vst [vmem:[#allocation7] sm:$0x1] 0.0
          $region92: #{tpu_custom_call.1} parent=87 // pred_fallthru
            _
          %s2115 = scalar_lea.vmem [#allocation2], %s424
          %v2116 = vld [vmem:[%s2115] sm:$0xff]
          %v2117 = vld [vmem:[%s2115 + $0x8] sm:$0xff]
          %v2118 = vld [vmem:[%s2115 + $0x10] sm:$0xff]
          %v2119 = vld [vmem:[%s2115 + $0x18] sm:$0xff]
          %v2120 = vld [vmem:[%s2115 + $0x20] sm:$0xff]
          %v2121 = vld [vmem:[%s2115 + $0x28] sm:$0xff]
          %v2122 = vld [vmem:[%s2115 + $0x30] sm:$0xff]
          %v2123 = vld [vmem:[%s2115 + $0x38] sm:$0xff]
          %v2124 = vld [vmem:[%s2115 + $0x40] sm:$0xff]
          %v2125 = vld [vmem:[%s2115 + $0x48] sm:$0xff]
          %v2126 = vld [vmem:[%s2115 + $0x50] sm:$0xff]
          %v2127 = vld [vmem:[%s2115 + $0x58] sm:$0xff]
          %v2128 = vld [vmem:[%s2115 + $0x60] sm:$0xff]
          %v2129 = vld [vmem:[%s2115 + $0x68] sm:$0xff]
          %v2130 = vld [vmem:[%s2115 + $0x70] sm:$0xff]
          %v2131 = vld [vmem:[%s2115 + $0x78] sm:$0xff]
          %v2132 = vld [vmem:[%s2115 + $0x80] sm:$0xff]
          %v2133 = vld [vmem:[%s2115 + $0x88] sm:$0xff]
          %v2134 = vld [vmem:[%s2115 + $0x90] sm:$0xff]
          %v2135 = vld [vmem:[%s2115 + $0x98] sm:$0xff]
          %v2136 = vld [vmem:[%s2115 + $0xa0] sm:$0xff]
          %v2137 = vld [vmem:[%s2115 + $0xa8] sm:$0xff]
          %v2138 = vld [vmem:[%s2115 + $0xb0] sm:$0xff]
          %v2139 = vld [vmem:[%s2115 + $0xb8] sm:$0xff]
          %v2140 = vld [vmem:[%s2115 + $0xc0] sm:$0xff]
          %v2141 = vld [vmem:[%s2115 + $0xc8] sm:$0xff]
          %v2142 = vld [vmem:[%s2115 + $0xd0] sm:$0xff]
          %v2143 = vld [vmem:[%s2115 + $0xd8] sm:$0xff]
          %v2144 = vld [vmem:[%s2115 + $0xe0] sm:$0xff]
          %v2145 = vld [vmem:[%s2115 + $0xe8] sm:$0xff]
          %v2146 = vld [vmem:[%s2115 + $0xf0] sm:$0xff]
          %v2147 = vld [vmem:[%s2115 + $0xf8] sm:$0xff]
          %v2148 = vld [vmem:[%s2115 + $0x100] sm:$0xff]
          %v2149 = vld [vmem:[%s2115 + $0x108] sm:$0xff]
          %v2150 = vld [vmem:[%s2115 + $0x110] sm:$0xff]
          %v2151 = vld [vmem:[%s2115 + $0x118] sm:$0xff]
          %v2152 = vld [vmem:[%s2115 + $0x120] sm:$0xff]
          %v2153 = vld [vmem:[%s2115 + $0x128] sm:$0xff]
          %v2154 = vld [vmem:[%s2115 + $0x130] sm:$0xff]
          %v2155 = vld [vmem:[%s2115 + $0x138] sm:$0xff]
          %v2156 = vld [vmem:[%s2115 + $0x140] sm:$0xff]
          %v2157 = vld [vmem:[%s2115 + $0x148] sm:$0xff]
          %v2158 = vld [vmem:[%s2115 + $0x150] sm:$0xff]
          %v2159 = vld [vmem:[%s2115 + $0x158] sm:$0xff]
          %v2160 = vld [vmem:[%s2115 + $0x160] sm:$0xff]
          %v2161 = vld [vmem:[%s2115 + $0x168] sm:$0xff]
          %v2162 = vld [vmem:[%s2115 + $0x170] sm:$0xff]
          %v2163 = vld [vmem:[%s2115 + $0x178] sm:$0xff]
          %v2164 = vld [vmem:[%s2115 + $0x180] sm:$0xff]
          %v2165 = vld [vmem:[%s2115 + $0x188] sm:$0xff]
          %v2166 = vld [vmem:[%s2115 + $0x190] sm:$0xff]
          %v2167 = vld [vmem:[%s2115 + $0x198] sm:$0xff]
          %v2168 = vld [vmem:[%s2115 + $0x1a0] sm:$0xff]
          %v2169 = vld [vmem:[%s2115 + $0x1a8] sm:$0xff]
          %v2170 = vld [vmem:[%s2115 + $0x1b0] sm:$0xff]
          %v2171 = vld [vmem:[%s2115 + $0x1b8] sm:$0xff]
          %v2172 = vld [vmem:[%s2115 + $0x1c0] sm:$0xff]
          %v2173 = vld [vmem:[%s2115 + $0x1c8] sm:$0xff]
          %v2174 = vld [vmem:[%s2115 + $0x1d0] sm:$0xff]
          %v2175 = vld [vmem:[%s2115 + $0x1d8] sm:$0xff]
          %v2176 = vld [vmem:[%s2115 + $0x1e0] sm:$0xff]
          %v2177 = vld [vmem:[%s2115 + $0x1e8] sm:$0xff]
          %v2178 = vld [vmem:[%s2115 + $0x1f0] sm:$0xff]
          %v2179 = vld [vmem:[%s2115 + $0x1f8] sm:$0xff]
          %v2180 = vld [vmem:[%s2115 + $0x200] sm:$0xff]
          %v2181 = vld [vmem:[%s2115 + $0x208] sm:$0xff]
          %v2182 = vld [vmem:[%s2115 + $0x210] sm:$0xff]
          %v2183 = vld [vmem:[%s2115 + $0x218] sm:$0xff]
          %v2184 = vld [vmem:[%s2115 + $0x220] sm:$0xff]
          %v2185 = vld [vmem:[%s2115 + $0x228] sm:$0xff]
          %v2186 = vld [vmem:[%s2115 + $0x230] sm:$0xff]
          %v2187 = vld [vmem:[%s2115 + $0x238] sm:$0xff]
          %v2188 = vld [vmem:[%s2115 + $0x240] sm:$0xff]
          %v2189 = vld [vmem:[%s2115 + $0x248] sm:$0xff]
          %v2190 = vld [vmem:[%s2115 + $0x250] sm:$0xff]
          %v2191 = vld [vmem:[%s2115 + $0x258] sm:$0xff]
          %v2192 = vld [vmem:[%s2115 + $0x260] sm:$0xff]
          %v2193 = vld [vmem:[%s2115 + $0x268] sm:$0xff]
          %v2194 = vld [vmem:[%s2115 + $0x270] sm:$0xff]
          %v2195 = vld [vmem:[%s2115 + $0x278] sm:$0xff]
          %v2196 = vld [vmem:[%s2115 + $0x280] sm:$0xff]
          %v2197 = vld [vmem:[%s2115 + $0x288] sm:$0xff]
          %v2198 = vld [vmem:[%s2115 + $0x290] sm:$0xff]
          %v2199 = vld [vmem:[%s2115 + $0x298] sm:$0xff]
          %v2200 = vld [vmem:[%s2115 + $0x2a0] sm:$0xff]
          %v2201 = vld [vmem:[%s2115 + $0x2a8] sm:$0xff]
          %v2202 = vld [vmem:[%s2115 + $0x2b0] sm:$0xff]
          %v2203 = vld [vmem:[%s2115 + $0x2b8] sm:$0xff]
          %v2204 = vld [vmem:[%s2115 + $0x2c0] sm:$0xff]
          %v2205 = vld [vmem:[%s2115 + $0x2c8] sm:$0xff]
          %v2206 = vld [vmem:[%s2115 + $0x2d0] sm:$0xff]
          %v2207 = vld [vmem:[%s2115 + $0x2d8] sm:$0xff]
          %v2208 = vld [vmem:[%s2115 + $0x2e0] sm:$0xff]
          %v2209 = vld [vmem:[%s2115 + $0x2e8] sm:$0xff]
          %v2210 = vld [vmem:[%s2115 + $0x2f0] sm:$0xff]
          %v2211 = vld [vmem:[%s2115 + $0x2f8] sm:$0xff]
          %v2212 = vld [vmem:[%s2115 + $0x300] sm:$0xff]
          %v2213 = vld [vmem:[%s2115 + $0x308] sm:$0xff]
          %v2214 = vld [vmem:[%s2115 + $0x310] sm:$0xff]
          %v2215 = vld [vmem:[%s2115 + $0x318] sm:$0xff]
          %v2216 = vld [vmem:[%s2115 + $0x320] sm:$0xff]
          %v2217 = vld [vmem:[%s2115 + $0x328] sm:$0xff]
          %v2218 = vld [vmem:[%s2115 + $0x330] sm:$0xff]
          %v2219 = vld [vmem:[%s2115 + $0x338] sm:$0xff]
          %v2220 = vld [vmem:[%s2115 + $0x340] sm:$0xff]
          %v2221 = vld [vmem:[%s2115 + $0x348] sm:$0xff]
          %v2222 = vld [vmem:[%s2115 + $0x350] sm:$0xff]
          %v2223 = vld [vmem:[%s2115 + $0x358] sm:$0xff]
          %v2224 = vld [vmem:[%s2115 + $0x360] sm:$0xff]
          %v2225 = vld [vmem:[%s2115 + $0x368] sm:$0xff]
          %v2226 = vld [vmem:[%s2115 + $0x370] sm:$0xff]
          %v2227 = vld [vmem:[%s2115 + $0x378] sm:$0xff]
          %v2228 = vld [vmem:[%s2115 + $0x380] sm:$0xff]
          %v2229 = vld [vmem:[%s2115 + $0x388] sm:$0xff]
          %v2230 = vld [vmem:[%s2115 + $0x390] sm:$0xff]
          %v2231 = vld [vmem:[%s2115 + $0x398] sm:$0xff]
          %v2232 = vld [vmem:[%s2115 + $0x3a0] sm:$0xff]
          %v2233 = vld [vmem:[%s2115 + $0x3a8] sm:$0xff]
          %v2234 = vld [vmem:[%s2115 + $0x3b0] sm:$0xff]
          %v2235 = vld [vmem:[%s2115 + $0x3b8] sm:$0xff]
          %v2236 = vld [vmem:[%s2115 + $0x3c0] sm:$0xff]
          %v2237 = vld [vmem:[%s2115 + $0x3c8] sm:$0xff]
          %v2238 = vld [vmem:[%s2115 + $0x3d0] sm:$0xff]
          %v2239 = vld [vmem:[%s2115 + $0x3d8] sm:$0xff]
          %v2240 = vld [vmem:[%s2115 + $0x3e0] sm:$0xff]
          %v2241 = vld [vmem:[%s2115 + $0x3e8] sm:$0xff]
          %v2242 = vld [vmem:[%s2115 + $0x3f0] sm:$0xff]
          %v2243 = vld [vmem:[%s2115 + $0x3f8] sm:$0xff]
          %v2244 = vld [vmem:[#allocation4] sm:$0x1]
          %v2246 = vlaneseq
          %v2247 = vshrl.u32 %v2246, 7
          %v2248 = vsub.s32 0, %v2247
          %v2249 = vrot.slane %v2244, %v2248
          %v2251 = vmul.f32 %v2116, %v2249
          %v2252 = vmul.f32 %v2117, %v2249
          %v2253 = vmul.f32 %v2118, %v2249
          %v2254 = vmul.f32 %v2119, %v2249
          %v2255 = vmul.f32 %v2120, %v2249
          %v2256 = vmul.f32 %v2121, %v2249
          %v2257 = vmul.f32 %v2122, %v2249
          %v2258 = vmul.f32 %v2123, %v2249
          %v2259 = vmul.f32 %v2124, %v2249
          %v2260 = vmul.f32 %v2125, %v2249
          %v2261 = vmul.f32 %v2126, %v2249
          %v2262 = vmul.f32 %v2127, %v2249
          %v2263 = vmul.f32 %v2128, %v2249
          %v2264 = vmul.f32 %v2129, %v2249
          %v2265 = vmul.f32 %v2130, %v2249
          %v2266 = vmul.f32 %v2131, %v2249
          %v2267 = vmul.f32 %v2132, %v2249
          %v2268 = vmul.f32 %v2133, %v2249
          %v2269 = vmul.f32 %v2134, %v2249
          %v2270 = vmul.f32 %v2135, %v2249
          %v2271 = vmul.f32 %v2136, %v2249
          %v2272 = vmul.f32 %v2137, %v2249
          %v2273 = vmul.f32 %v2138, %v2249
          %v2274 = vmul.f32 %v2139, %v2249
          %v2275 = vmul.f32 %v2140, %v2249
          %v2276 = vmul.f32 %v2141, %v2249
          %v2277 = vmul.f32 %v2142, %v2249
          %v2278 = vmul.f32 %v2143, %v2249
          %v2279 = vmul.f32 %v2144, %v2249
          %v2280 = vmul.f32 %v2145, %v2249
          %v2281 = vmul.f32 %v2146, %v2249
          %v2282 = vmul.f32 %v2147, %v2249
          %v2283 = vmul.f32 %v2148, %v2249
          %v2284 = vmul.f32 %v2149, %v2249
          %v2285 = vmul.f32 %v2150, %v2249
          %v2286 = vmul.f32 %v2151, %v2249
          %v2287 = vmul.f32 %v2152, %v2249
          %v2288 = vmul.f32 %v2153, %v2249
          %v2289 = vmul.f32 %v2154, %v2249
          %v2290 = vmul.f32 %v2155, %v2249
          %v2291 = vmul.f32 %v2156, %v2249
          %v2292 = vmul.f32 %v2157, %v2249
          %v2293 = vmul.f32 %v2158, %v2249
          %v2294 = vmul.f32 %v2159, %v2249
          %v2295 = vmul.f32 %v2160, %v2249
          %v2296 = vmul.f32 %v2161, %v2249
          %v2297 = vmul.f32 %v2162, %v2249
          %v2298 = vmul.f32 %v2163, %v2249
          %v2299 = vmul.f32 %v2164, %v2249
          %v2300 = vmul.f32 %v2165, %v2249
          %v2301 = vmul.f32 %v2166, %v2249
          %v2302 = vmul.f32 %v2167, %v2249
          %v2303 = vmul.f32 %v2168, %v2249
          %v2304 = vmul.f32 %v2169, %v2249
          %v2305 = vmul.f32 %v2170, %v2249
          %v2306 = vmul.f32 %v2171, %v2249
          %v2307 = vmul.f32 %v2172, %v2249
          %v2308 = vmul.f32 %v2173, %v2249
          %v2309 = vmul.f32 %v2174, %v2249
          %v2310 = vmul.f32 %v2175, %v2249
          %v2311 = vmul.f32 %v2176, %v2249
          %v2312 = vmul.f32 %v2177, %v2249
          %v2313 = vmul.f32 %v2178, %v2249
          %v2314 = vmul.f32 %v2179, %v2249
          %v2315 = vmul.f32 %v2180, %v2249
          %v2316 = vmul.f32 %v2181, %v2249
          %v2317 = vmul.f32 %v2182, %v2249
          %v2318 = vmul.f32 %v2183, %v2249
          %v2319 = vmul.f32 %v2184, %v2249
          %v2320 = vmul.f32 %v2185, %v2249
          %v2321 = vmul.f32 %v2186, %v2249
          %v2322 = vmul.f32 %v2187, %v2249
          %v2323 = vmul.f32 %v2188, %v2249
          %v2324 = vmul.f32 %v2189, %v2249
          %v2325 = vmul.f32 %v2190, %v2249
          %v2326 = vmul.f32 %v2191, %v2249
          %v2327 = vmul.f32 %v2192, %v2249
          %v2328 = vmul.f32 %v2193, %v2249
          %v2329 = vmul.f32 %v2194, %v2249
          %v2330 = vmul.f32 %v2195, %v2249
          %v2331 = vmul.f32 %v2196, %v2249
          %v2332 = vmul.f32 %v2197, %v2249
          %v2333 = vmul.f32 %v2198, %v2249
          %v2334 = vmul.f32 %v2199, %v2249
          %v2335 = vmul.f32 %v2200, %v2249
          %v2336 = vmul.f32 %v2201, %v2249
          %v2337 = vmul.f32 %v2202, %v2249
          %v2338 = vmul.f32 %v2203, %v2249
          %v2339 = vmul.f32 %v2204, %v2249
          %v2340 = vmul.f32 %v2205, %v2249
          %v2341 = vmul.f32 %v2206, %v2249
          %v2342 = vmul.f32 %v2207, %v2249
          %v2343 = vmul.f32 %v2208, %v2249
          %v2344 = vmul.f32 %v2209, %v2249
          %v2345 = vmul.f32 %v2210, %v2249
          %v2346 = vmul.f32 %v2211, %v2249
          %v2347 = vmul.f32 %v2212, %v2249
          %v2348 = vmul.f32 %v2213, %v2249
          %v2349 = vmul.f32 %v2214, %v2249
          %v2350 = vmul.f32 %v2215, %v2249
          %v2351 = vmul.f32 %v2216, %v2249
          %v2352 = vmul.f32 %v2217, %v2249
          %v2353 = vmul.f32 %v2218, %v2249
          %v2354 = vmul.f32 %v2219, %v2249
          %v2355 = vmul.f32 %v2220, %v2249
          %v2356 = vmul.f32 %v2221, %v2249
          %v2357 = vmul.f32 %v2222, %v2249
          %v2358 = vmul.f32 %v2223, %v2249
          %v2359 = vmul.f32 %v2224, %v2249
          %v2360 = vmul.f32 %v2225, %v2249
          %v2361 = vmul.f32 %v2226, %v2249
          %v2362 = vmul.f32 %v2227, %v2249
          %v2363 = vmul.f32 %v2228, %v2249
          %v2364 = vmul.f32 %v2229, %v2249
          %v2365 = vmul.f32 %v2230, %v2249
          %v2366 = vmul.f32 %v2231, %v2249
          %v2367 = vmul.f32 %v2232, %v2249
          %v2368 = vmul.f32 %v2233, %v2249
          %v2369 = vmul.f32 %v2234, %v2249
          %v2370 = vmul.f32 %v2235, %v2249
          %v2371 = vmul.f32 %v2236, %v2249
          %v2372 = vmul.f32 %v2237, %v2249
          %v2373 = vmul.f32 %v2238, %v2249
          %v2374 = vmul.f32 %v2239, %v2249
          %v2375 = vmul.f32 %v2240, %v2249
          %v2376 = vmul.f32 %v2241, %v2249
          %v2377 = vmul.f32 %v2242, %v2249
          %v2378 = vmul.f32 %v2243, %v2249
          %v2379 = vld [vmem:[#allocation5] sm:$0x1]
          %v2381 = vlaneseq
          %v2382 = vshrl.u32 %v2381, 7
          %v2383 = vsub.s32 0, %v2382
          %v2384 = vrot.slane %v2379, %v2383
          %v2386 = vadd.f32 %v2251, %v2384
          %v2387 = vadd.f32 %v2252, %v2384
          %v2388 = vadd.f32 %v2253, %v2384
          %v2389 = vadd.f32 %v2254, %v2384
          %v2390 = vadd.f32 %v2255, %v2384
          %v2391 = vadd.f32 %v2256, %v2384
          %v2392 = vadd.f32 %v2257, %v2384
          %v2393 = vadd.f32 %v2258, %v2384
          %v2394 = vadd.f32 %v2259, %v2384
          %v2395 = vadd.f32 %v2260, %v2384
          %v2396 = vadd.f32 %v2261, %v2384
          %v2397 = vadd.f32 %v2262, %v2384
          %v2398 = vadd.f32 %v2263, %v2384
          %v2399 = vadd.f32 %v2264, %v2384
          %v2400 = vadd.f32 %v2265, %v2384
          %v2401 = vadd.f32 %v2266, %v2384
          %v2402 = vadd.f32 %v2267, %v2384
          %v2403 = vadd.f32 %v2268, %v2384
          %v2404 = vadd.f32 %v2269, %v2384
          %v2405 = vadd.f32 %v2270, %v2384
          %v2406 = vadd.f32 %v2271, %v2384
          %v2407 = vadd.f32 %v2272, %v2384
          %v2408 = vadd.f32 %v2273, %v2384
          %v2409 = vadd.f32 %v2274, %v2384
          %v2410 = vadd.f32 %v2275, %v2384
          %v2411 = vadd.f32 %v2276, %v2384
          %v2412 = vadd.f32 %v2277, %v2384
          %v2413 = vadd.f32 %v2278, %v2384
          %v2414 = vadd.f32 %v2279, %v2384
          %v2415 = vadd.f32 %v2280, %v2384
          %v2416 = vadd.f32 %v2281, %v2384
          %v2417 = vadd.f32 %v2282, %v2384
          %v2418 = vadd.f32 %v2283, %v2384
          %v2419 = vadd.f32 %v2284, %v2384
          %v2420 = vadd.f32 %v2285, %v2384
          %v2421 = vadd.f32 %v2286, %v2384
          %v2422 = vadd.f32 %v2287, %v2384
          %v2423 = vadd.f32 %v2288, %v2384
          %v2424 = vadd.f32 %v2289, %v2384
          %v2425 = vadd.f32 %v2290, %v2384
          %v2426 = vadd.f32 %v2291, %v2384
          %v2427 = vadd.f32 %v2292, %v2384
          %v2428 = vadd.f32 %v2293, %v2384
          %v2429 = vadd.f32 %v2294, %v2384
          %v2430 = vadd.f32 %v2295, %v2384
          %v2431 = vadd.f32 %v2296, %v2384
          %v2432 = vadd.f32 %v2297, %v2384
          %v2433 = vadd.f32 %v2298, %v2384
          %v2434 = vadd.f32 %v2299, %v2384
          %v2435 = vadd.f32 %v2300, %v2384
          %v2436 = vadd.f32 %v2301, %v2384
          %v2437 = vadd.f32 %v2302, %v2384
          %v2438 = vadd.f32 %v2303, %v2384
          %v2439 = vadd.f32 %v2304, %v2384
          %v2440 = vadd.f32 %v2305, %v2384
          %v2441 = vadd.f32 %v2306, %v2384
          %v2442 = vadd.f32 %v2307, %v2384
          %v2443 = vadd.f32 %v2308, %v2384
          %v2444 = vadd.f32 %v2309, %v2384
          %v2445 = vadd.f32 %v2310, %v2384
          %v2446 = vadd.f32 %v2311, %v2384
          %v2447 = vadd.f32 %v2312, %v2384
          %v2448 = vadd.f32 %v2313, %v2384
          %v2449 = vadd.f32 %v2314, %v2384
          %v2450 = vadd.f32 %v2315, %v2384
          %v2451 = vadd.f32 %v2316, %v2384
          %v2452 = vadd.f32 %v2317, %v2384
          %v2453 = vadd.f32 %v2318, %v2384
          %v2454 = vadd.f32 %v2319, %v2384
          %v2455 = vadd.f32 %v2320, %v2384
          %v2456 = vadd.f32 %v2321, %v2384
          %v2457 = vadd.f32 %v2322, %v2384
          %v2458 = vadd.f32 %v2323, %v2384
          %v2459 = vadd.f32 %v2324, %v2384
          %v2460 = vadd.f32 %v2325, %v2384
          %v2461 = vadd.f32 %v2326, %v2384
          %v2462 = vadd.f32 %v2327, %v2384
          %v2463 = vadd.f32 %v2328, %v2384
          %v2464 = vadd.f32 %v2329, %v2384
          %v2465 = vadd.f32 %v2330, %v2384
          %v2466 = vadd.f32 %v2331, %v2384
          %v2467 = vadd.f32 %v2332, %v2384
          %v2468 = vadd.f32 %v2333, %v2384
          %v2469 = vadd.f32 %v2334, %v2384
          %v2470 = vadd.f32 %v2335, %v2384
          %v2471 = vadd.f32 %v2336, %v2384
          %v2472 = vadd.f32 %v2337, %v2384
          %v2473 = vadd.f32 %v2338, %v2384
          %v2474 = vadd.f32 %v2339, %v2384
          %v2475 = vadd.f32 %v2340, %v2384
          %v2476 = vadd.f32 %v2341, %v2384
          %v2477 = vadd.f32 %v2342, %v2384
          %v2478 = vadd.f32 %v2343, %v2384
          %v2479 = vadd.f32 %v2344, %v2384
          %v2480 = vadd.f32 %v2345, %v2384
          %v2481 = vadd.f32 %v2346, %v2384
          %v2482 = vadd.f32 %v2347, %v2384
          %v2483 = vadd.f32 %v2348, %v2384
          %v2484 = vadd.f32 %v2349, %v2384
          %v2485 = vadd.f32 %v2350, %v2384
          %v2486 = vadd.f32 %v2351, %v2384
          %v2487 = vadd.f32 %v2352, %v2384
          %v2488 = vadd.f32 %v2353, %v2384
          %v2489 = vadd.f32 %v2354, %v2384
          %v2490 = vadd.f32 %v2355, %v2384
          %v2491 = vadd.f32 %v2356, %v2384
          %v2492 = vadd.f32 %v2357, %v2384
          %v2493 = vadd.f32 %v2358, %v2384
          %v2494 = vadd.f32 %v2359, %v2384
          %v2495 = vadd.f32 %v2360, %v2384
          %v2496 = vadd.f32 %v2361, %v2384
          %v2497 = vadd.f32 %v2362, %v2384
          %v2498 = vadd.f32 %v2363, %v2384
          %v2499 = vadd.f32 %v2364, %v2384
          %v2500 = vadd.f32 %v2365, %v2384
          %v2501 = vadd.f32 %v2366, %v2384
          %v2502 = vadd.f32 %v2367, %v2384
          %v2503 = vadd.f32 %v2368, %v2384
          %v2504 = vadd.f32 %v2369, %v2384
          %v2505 = vadd.f32 %v2370, %v2384
          %v2506 = vadd.f32 %v2371, %v2384
          %v2507 = vadd.f32 %v2372, %v2384
          %v2508 = vadd.f32 %v2373, %v2384
          %v2509 = vadd.f32 %v2374, %v2384
          %v2510 = vadd.f32 %v2375, %v2384
          %v2511 = vadd.f32 %v2376, %v2384
          %v2512 = vadd.f32 %v2377, %v2384
          %v2513 = vadd.f32 %v2378, %v2384
          %v2514 = vmax.f32 %v2386, 0.0
          %v2515 = vmax.f32 %v2387, 0.0
          %v2516 = vmax.f32 %v2388, 0.0
          %v2517 = vmax.f32 %v2389, 0.0
          %v2518 = vmax.f32 %v2390, 0.0
          %v2519 = vmax.f32 %v2391, 0.0
          %v2520 = vmax.f32 %v2392, 0.0
          %v2521 = vmax.f32 %v2393, 0.0
          %v2522 = vmax.f32 %v2394, 0.0
          %v2523 = vmax.f32 %v2395, 0.0
          %v2524 = vmax.f32 %v2396, 0.0
          %v2525 = vmax.f32 %v2397, 0.0
          %v2526 = vmax.f32 %v2398, 0.0
          %v2527 = vmax.f32 %v2399, 0.0
          %v2528 = vmax.f32 %v2400, 0.0
          %v2529 = vmax.f32 %v2401, 0.0
          %v2530 = vmax.f32 %v2402, 0.0
          %v2531 = vmax.f32 %v2403, 0.0
          %v2532 = vmax.f32 %v2404, 0.0
          %v2533 = vmax.f32 %v2405, 0.0
          %v2534 = vmax.f32 %v2406, 0.0
          %v2535 = vmax.f32 %v2407, 0.0
          %v2536 = vmax.f32 %v2408, 0.0
          %v2537 = vmax.f32 %v2409, 0.0
          %v2538 = vmax.f32 %v2410, 0.0
          %v2539 = vmax.f32 %v2411, 0.0
          %v2540 = vmax.f32 %v2412, 0.0
          %v2541 = vmax.f32 %v2413, 0.0
          %v2542 = vmax.f32 %v2414, 0.0
          %v2543 = vmax.f32 %v2415, 0.0
          %v2544 = vmax.f32 %v2416, 0.0
          %v2545 = vmax.f32 %v2417, 0.0
          %v2546 = vmax.f32 %v2418, 0.0
          %v2547 = vmax.f32 %v2419, 0.0
          %v2548 = vmax.f32 %v2420, 0.0
          %v2549 = vmax.f32 %v2421, 0.0
          %v2550 = vmax.f32 %v2422, 0.0
          %v2551 = vmax.f32 %v2423, 0.0
          %v2552 = vmax.f32 %v2424, 0.0
          %v2553 = vmax.f32 %v2425, 0.0
          %v2554 = vmax.f32 %v2426, 0.0
          %v2555 = vmax.f32 %v2427, 0.0
          %v2556 = vmax.f32 %v2428, 0.0
          %v2557 = vmax.f32 %v2429, 0.0
          %v2558 = vmax.f32 %v2430, 0.0
          %v2559 = vmax.f32 %v2431, 0.0
          %v2560 = vmax.f32 %v2432, 0.0
          %v2561 = vmax.f32 %v2433, 0.0
          %v2562 = vmax.f32 %v2434, 0.0
          %v2563 = vmax.f32 %v2435, 0.0
          %v2564 = vmax.f32 %v2436, 0.0
          %v2565 = vmax.f32 %v2437, 0.0
          %v2566 = vmax.f32 %v2438, 0.0
          %v2567 = vmax.f32 %v2439, 0.0
          %v2568 = vmax.f32 %v2440, 0.0
          %v2569 = vmax.f32 %v2441, 0.0
          %v2570 = vmax.f32 %v2442, 0.0
          %v2571 = vmax.f32 %v2443, 0.0
          %v2572 = vmax.f32 %v2444, 0.0
          %v2573 = vmax.f32 %v2445, 0.0
          %v2574 = vmax.f32 %v2446, 0.0
          %v2575 = vmax.f32 %v2447, 0.0
          %v2576 = vmax.f32 %v2448, 0.0
          %v2577 = vmax.f32 %v2449, 0.0
          %v2578 = vmax.f32 %v2450, 0.0
          %v2579 = vmax.f32 %v2451, 0.0
          %v2580 = vmax.f32 %v2452, 0.0
          %v2581 = vmax.f32 %v2453, 0.0
          %v2582 = vmax.f32 %v2454, 0.0
          %v2583 = vmax.f32 %v2455, 0.0
          %v2584 = vmax.f32 %v2456, 0.0
          %v2585 = vmax.f32 %v2457, 0.0
          %v2586 = vmax.f32 %v2458, 0.0
          %v2587 = vmax.f32 %v2459, 0.0
          %v2588 = vmax.f32 %v2460, 0.0
          %v2589 = vmax.f32 %v2461, 0.0
          %v2590 = vmax.f32 %v2462, 0.0
          %v2591 = vmax.f32 %v2463, 0.0
          %v2592 = vmax.f32 %v2464, 0.0
          %v2593 = vmax.f32 %v2465, 0.0
          %v2594 = vmax.f32 %v2466, 0.0
          %v2595 = vmax.f32 %v2467, 0.0
          %v2596 = vmax.f32 %v2468, 0.0
          %v2597 = vmax.f32 %v2469, 0.0
          %v2598 = vmax.f32 %v2470, 0.0
          %v2599 = vmax.f32 %v2471, 0.0
          %v2600 = vmax.f32 %v2472, 0.0
          %v2601 = vmax.f32 %v2473, 0.0
          %v2602 = vmax.f32 %v2474, 0.0
          %v2603 = vmax.f32 %v2475, 0.0
          %v2604 = vmax.f32 %v2476, 0.0
          %v2605 = vmax.f32 %v2477, 0.0
          %v2606 = vmax.f32 %v2478, 0.0
          %v2607 = vmax.f32 %v2479, 0.0
          %v2608 = vmax.f32 %v2480, 0.0
          %v2609 = vmax.f32 %v2481, 0.0
          %v2610 = vmax.f32 %v2482, 0.0
          %v2611 = vmax.f32 %v2483, 0.0
          %v2612 = vmax.f32 %v2484, 0.0
          %v2613 = vmax.f32 %v2485, 0.0
          %v2614 = vmax.f32 %v2486, 0.0
          %v2615 = vmax.f32 %v2487, 0.0
          %v2616 = vmax.f32 %v2488, 0.0
          %v2617 = vmax.f32 %v2489, 0.0
          %v2618 = vmax.f32 %v2490, 0.0
          %v2619 = vmax.f32 %v2491, 0.0
          %v2620 = vmax.f32 %v2492, 0.0
          %v2621 = vmax.f32 %v2493, 0.0
          %v2622 = vmax.f32 %v2494, 0.0
          %v2623 = vmax.f32 %v2495, 0.0
          %v2624 = vmax.f32 %v2496, 0.0
          %v2625 = vmax.f32 %v2497, 0.0
          %v2626 = vmax.f32 %v2498, 0.0
          %v2627 = vmax.f32 %v2499, 0.0
          %v2628 = vmax.f32 %v2500, 0.0
          %v2629 = vmax.f32 %v2501, 0.0
          %v2630 = vmax.f32 %v2502, 0.0
          %v2631 = vmax.f32 %v2503, 0.0
          %v2632 = vmax.f32 %v2504, 0.0
          %v2633 = vmax.f32 %v2505, 0.0
          %v2634 = vmax.f32 %v2506, 0.0
          %v2635 = vmax.f32 %v2507, 0.0
          %v2636 = vmax.f32 %v2508, 0.0
          %v2637 = vmax.f32 %v2509, 0.0
          %v2638 = vmax.f32 %v2510, 0.0
          %v2639 = vmax.f32 %v2511, 0.0
          %v2640 = vmax.f32 %v2512, 0.0
          %v2641 = vmax.f32 %v2513, 0.0
          %v2642 = vpack.c.bf16 %v2515, %v2514
          %v2643 = vpack.c.bf16 %v2517, %v2516
          %v2644 = vpack.c.bf16 %v2519, %v2518
          %v2645 = vpack.c.bf16 %v2521, %v2520
          %v2646 = vpack.c.bf16 %v2523, %v2522
          %v2647 = vpack.c.bf16 %v2525, %v2524
          %v2648 = vpack.c.bf16 %v2527, %v2526
          %v2649 = vpack.c.bf16 %v2529, %v2528
          %v2650 = vpack.c.bf16 %v2531, %v2530
          %v2651 = vpack.c.bf16 %v2533, %v2532
          %v2652 = vpack.c.bf16 %v2535, %v2534
          %v2653 = vpack.c.bf16 %v2537, %v2536
          %v2654 = vpack.c.bf16 %v2539, %v2538
          %v2655 = vpack.c.bf16 %v2541, %v2540
          %v2656 = vpack.c.bf16 %v2543, %v2542
          %v2657 = vpack.c.bf16 %v2545, %v2544
          %v2658 = vpack.c.bf16 %v2547, %v2546
          %v2659 = vpack.c.bf16 %v2549, %v2548
          %v2660 = vpack.c.bf16 %v2551, %v2550
          %v2661 = vpack.c.bf16 %v2553, %v2552
          %v2662 = vpack.c.bf16 %v2555, %v2554
          %v2663 = vpack.c.bf16 %v2557, %v2556
          %v2664 = vpack.c.bf16 %v2559, %v2558
          %v2665 = vpack.c.bf16 %v2561, %v2560
          %v2666 = vpack.c.bf16 %v2563, %v2562
          %v2667 = vpack.c.bf16 %v2565, %v2564
          %v2668 = vpack.c.bf16 %v2567, %v2566
          %v2669 = vpack.c.bf16 %v2569, %v2568
          %v2670 = vpack.c.bf16 %v2571, %v2570
          %v2671 = vpack.c.bf16 %v2573, %v2572
          %v2672 = vpack.c.bf16 %v2575, %v2574
          %v2673 = vpack.c.bf16 %v2577, %v2576
          %v2674 = vpack.c.bf16 %v2579, %v2578
          %v2675 = vpack.c.bf16 %v2581, %v2580
          %v2676 = vpack.c.bf16 %v2583, %v2582
          %v2677 = vpack.c.bf16 %v2585, %v2584
          %v2678 = vpack.c.bf16 %v2587, %v2586
          %v2679 = vpack.c.bf16 %v2589, %v2588
          %v2680 = vpack.c.bf16 %v2591, %v2590
          %v2681 = vpack.c.bf16 %v2593, %v2592
          %v2682 = vpack.c.bf16 %v2595, %v2594
          %v2683 = vpack.c.bf16 %v2597, %v2596
          %v2684 = vpack.c.bf16 %v2599, %v2598
          %v2685 = vpack.c.bf16 %v2601, %v2600
          %v2686 = vpack.c.bf16 %v2603, %v2602
          %v2687 = vpack.c.bf16 %v2605, %v2604
          %v2688 = vpack.c.bf16 %v2607, %v2606
          %v2689 = vpack.c.bf16 %v2609, %v2608
          %v2690 = vpack.c.bf16 %v2611, %v2610
          %v2691 = vpack.c.bf16 %v2613, %v2612
          %v2692 = vpack.c.bf16 %v2615, %v2614
          %v2693 = vpack.c.bf16 %v2617, %v2616
          %v2694 = vpack.c.bf16 %v2619, %v2618
          %v2695 = vpack.c.bf16 %v2621, %v2620
          %v2696 = vpack.c.bf16 %v2623, %v2622
          %v2697 = vpack.c.bf16 %v2625, %v2624
          %v2698 = vpack.c.bf16 %v2627, %v2626
          %v2699 = vpack.c.bf16 %v2629, %v2628
          %v2700 = vpack.c.bf16 %v2631, %v2630
          %v2701 = vpack.c.bf16 %v2633, %v2632
          %v2702 = vpack.c.bf16 %v2635, %v2634
          %v2703 = vpack.c.bf16 %v2637, %v2636
          %v2704 = vpack.c.bf16 %v2639, %v2638
          %v2705 = vpack.c.bf16 %v2641, %v2640
          %v2706 = vld [vmem:[#allocation13] sm:$0xf]
          %v2707 = vld [vmem:[#allocation13 + $0x4] sm:$0xf]
          %v2708 = vld [vmem:[#allocation13 + $0x8] sm:$0xf]
          %v2709 = vld [vmem:[#allocation13 + $0xc] sm:$0xf]
          %v2710 = vld [vmem:[#allocation13 + $0x10] sm:$0xf]
          %v2711 = vld [vmem:[#allocation13 + $0x14] sm:$0xf]
          %v2712 = vld [vmem:[#allocation13 + $0x18] sm:$0xf]
          %v2713 = vld [vmem:[#allocation13 + $0x1c] sm:$0xf]
          %v2714 = vld [vmem:[#allocation13 + $0x20] sm:$0xf]
          %v2715 = vld [vmem:[#allocation13 + $0x24] sm:$0xf]
          %v2716 = vld [vmem:[#allocation13 + $0x28] sm:$0xf]
          %v2717 = vld [vmem:[#allocation13 + $0x2c] sm:$0xf]
          %v2718 = vld [vmem:[#allocation13 + $0x30] sm:$0xf]
          %v2719 = vld [vmem:[#allocation13 + $0x34] sm:$0xf]
          %v2720 = vld [vmem:[#allocation13 + $0x38] sm:$0xf]
          %v2721 = vld [vmem:[#allocation13 + $0x3c] sm:$0xf]
          %v2738 = vunpack.c.l.b16 %v2706
          %v2739 = vunpack.c.l.b16 %v2707
          %v2740 = vunpack.c.l.b16 %v2708
          %v2741 = vunpack.c.l.b16 %v2709
          %v2742 = vunpack.c.l.b16 %v2710
          %v2743 = vunpack.c.l.b16 %v2711
          %v2744 = vunpack.c.l.b16 %v2712
          %v2745 = vunpack.c.l.b16 %v2713
          %v2746 = vunpack.c.l.b16 %v2714
          %v2747 = vunpack.c.l.b16 %v2715
          %v2748 = vunpack.c.l.b16 %v2716
          %v2749 = vunpack.c.l.b16 %v2717
          %v2750 = vunpack.c.l.b16 %v2718
          %v2751 = vunpack.c.l.b16 %v2719
          %v2752 = vunpack.c.l.b16 %v2720
          %v2753 = vunpack.c.l.b16 %v2721
          %v2754 = vpack.c.b16 %v2739, %v2738
          %v2755 = vpack.c.b16 %v2741, %v2740
          %v2756 = vpack.c.b16 %v2743, %v2742
          %v2757 = vpack.c.b16 %v2745, %v2744
          %v2758 = vpack.c.b16 %v2747, %v2746
          %v2759 = vpack.c.b16 %v2749, %v2748
          %v2760 = vpack.c.b16 %v2751, %v2750
          %v2761 = vpack.c.b16 %v2753, %v2752
          %2770 = vmatprep.subr.bf16.mxu0 0
          %2771 = vmatpush1.bf16.msra.mxu0 %v2761
          %2772 = vmatprep.subr.bf16.mxu0 0
          %2773 = vmatpush1.bf16.msra.mxu0 %v2760
          %2774 = vmatprep.subr.bf16.mxu0 0
          %2775 = vmatpush1.bf16.msra.mxu0 %v2759
          %2776 = vmatprep.subr.bf16.mxu0 0
          %2777 = vmatpush1.bf16.msra.mxu0 %v2758
          %2778 = vmatprep.subr.bf16.mxu0 0
          %2779 = vmatpush1.bf16.msra.mxu0 %v2757
          %2780 = vmatprep.subr.bf16.mxu0 0
          %2781 = vmatpush1.bf16.msra.mxu0 %v2756
          %2782 = vmatprep.subr.bf16.mxu0 0
          %2783 = vmatpush1.bf16.msra.mxu0 %v2755
          %2784 = vmatprep.subr.bf16.mxu0 0
          %2785 = vmatpush1.bf16.msra.mxu0 %v2754
          %2786 = vmatprep.subr.bf16.mxu0 0
          %2787 = vmatpush2.bf16.msra.mxu0 0
          %2788 = vmatprep.subr.bf16.mxu0 0
          %2789 = vmatpush2.bf16.msra.mxu0 0
          %2790 = vmatprep.subr.bf16.mxu0 0
          %2791 = vmatpush2.bf16.msra.mxu0 0
          %2792 = vmatprep.subr.bf16.mxu0 0
          %2793 = vmatpush2.bf16.msra.mxu0 0
          %2794 = vmatprep.subr.bf16.mxu0 0
          %2795 = vmatpush2.bf16.msra.mxu0 0
          %2796 = vmatprep.subr.bf16.mxu0 0
          %2797 = vmatpush2.bf16.msra.mxu0 0
          %2798 = vmatprep.subr.bf16.mxu0 0
          %2799 = vmatpush2.bf16.msra.mxu0 0
          %2800 = vmatprep.subr.bf16.mxu0 0
          %2801 = vmatpush2.bf16.msra.mxu0 0
          %2802 = vmatprep.mubr.bf16.mxu0 0
          %2803 = vmatmul.mubr.bf16.gmra.mxu0 %v2642
          %v2804 = vpop.f32.mrf.mxu0
          %v2805 = vadd.f32 0.0, %v2804
          %v2806 = vpop.f32.mrf.mxu0
          %v2807 = vpop.f32.mrf.mxu0
          %v2808 = vadd.f32 0.0, %v2807
          %v2809 = vpop.f32.mrf.mxu0
          %2810 = vmatprep.mubr.bf16.mxu0 0
          %2811 = vmatmul.mubr.bf16.gmra.mxu0 %v2643
          %v2812 = vpop.f32.mrf.mxu0
          %v2813 = vadd.f32 0.0, %v2812
          %v2814 = vpop.f32.mrf.mxu0
          %v2815 = vpop.f32.mrf.mxu0
          %v2816 = vadd.f32 0.0, %v2815
          %v2817 = vpop.f32.mrf.mxu0
          %2818 = vmatprep.mubr.bf16.mxu0 0
          %2819 = vmatmul.mubr.bf16.gmra.mxu0 %v2644
          %v2820 = vpop.f32.mrf.mxu0
          %v2821 = vadd.f32 0.0, %v2820
          %v2822 = vpop.f32.mrf.mxu0
          %v2823 = vpop.f32.mrf.mxu0
          %v2824 = vadd.f32 0.0, %v2823
          %v2825 = vpop.f32.mrf.mxu0
          %2826 = vmatprep.mubr.bf16.mxu0 0
          %2827 = vmatmul.mubr.bf16.gmra.mxu0 %v2645
          %v2828 = vpop.f32.mrf.mxu0
          %v2829 = vadd.f32 0.0, %v2828
          %v2830 = vpop.f32.mrf.mxu0
          %v2831 = vpop.f32.mrf.mxu0
          %v2832 = vadd.f32 0.0, %v2831
          %v2833 = vpop.f32.mrf.mxu0
          %2834 = vmatprep.mubr.bf16.mxu0 0
          %2835 = vmatmul.mubr.bf16.gmra.mxu0 %v2646
          %v2836 = vpop.f32.mrf.mxu0
          %v2837 = vadd.f32 0.0, %v2836
          %v2838 = vpop.f32.mrf.mxu0
          %v2839 = vpop.f32.mrf.mxu0
          %v2840 = vadd.f32 0.0, %v2839
          %v2841 = vpop.f32.mrf.mxu0
          %2842 = vmatprep.mubr.bf16.mxu0 0
          %2843 = vmatmul.mubr.bf16.gmra.mxu0 %v2647
          %v2844 = vpop.f32.mrf.mxu0
          %v2845 = vadd.f32 0.0, %v2844
          %v2846 = vpop.f32.mrf.mxu0
          %v2847 = vpop.f32.mrf.mxu0
          %v2848 = vadd.f32 0.0, %v2847
          %v2849 = vpop.f32.mrf.mxu0
          %2850 = vmatprep.mubr.bf16.mxu0 0
          %2851 = vmatmul.mubr.bf16.gmra.mxu0 %v2648
          %v2852 = vpop.f32.mrf.mxu0
          %v2853 = vadd.f32 0.0, %v2852
          %v2854 = vpop.f32.mrf.mxu0
          %v2855 = vpop.f32.mrf.mxu0
          %v2856 = vadd.f32 0.0, %v2855
          %v2857 = vpop.f32.mrf.mxu0
          %2858 = vmatprep.mubr.bf16.mxu0 0
          %2859 = vmatmul.mubr.bf16.gmra.mxu0 %v2649
          %v2860 = vpop.f32.mrf.mxu0
          %v2861 = vadd.f32 0.0, %v2860
          %v2862 = vpop.f32.mrf.mxu0
          %v2863 = vpop.f32.mrf.mxu0
          %v2864 = vadd.f32 0.0, %v2863
          %v2865 = vpop.f32.mrf.mxu0
          %2866 = vmatprep.mubr.bf16.mxu0 0
          %2867 = vmatmul.mubr.bf16.gmra.mxu0 %v2650
          %v2868 = vpop.f32.mrf.mxu0
          %v2869 = vadd.f32 0.0, %v2868
          %v2870 = vpop.f32.mrf.mxu0
          %v2871 = vpop.f32.mrf.mxu0
          %v2872 = vadd.f32 0.0, %v2871
          %v2873 = vpop.f32.mrf.mxu0
          %2874 = vmatprep.mubr.bf16.mxu0 0
          %2875 = vmatmul.mubr.bf16.gmra.mxu0 %v2651
          %v2876 = vpop.f32.mrf.mxu0
          %v2877 = vadd.f32 0.0, %v2876
          %v2878 = vpop.f32.mrf.mxu0
          %v2879 = vpop.f32.mrf.mxu0
          %v2880 = vadd.f32 0.0, %v2879
          %v2881 = vpop.f32.mrf.mxu0
          %2882 = vmatprep.mubr.bf16.mxu0 0
          %2883 = vmatmul.mubr.bf16.gmra.mxu0 %v2652
          %v2884 = vpop.f32.mrf.mxu0
          %v2885 = vadd.f32 0.0, %v2884
          %v2886 = vpop.f32.mrf.mxu0
          %v2887 = vpop.f32.mrf.mxu0
          %v2888 = vadd.f32 0.0, %v2887
          %v2889 = vpop.f32.mrf.mxu0
          %2890 = vmatprep.mubr.bf16.mxu0 0
          %2891 = vmatmul.mubr.bf16.gmra.mxu0 %v2653
          %v2892 = vpop.f32.mrf.mxu0
          %v2893 = vadd.f32 0.0, %v2892
          %v2894 = vpop.f32.mrf.mxu0
          %v2895 = vpop.f32.mrf.mxu0
          %v2896 = vadd.f32 0.0, %v2895
          %v2897 = vpop.f32.mrf.mxu0
          %2898 = vmatprep.mubr.bf16.mxu0 0
          %2899 = vmatmul.mubr.bf16.gmra.mxu0 %v2654
          %v2900 = vpop.f32.mrf.mxu0
          %v2901 = vadd.f32 0.0, %v2900
          %v2902 = vpop.f32.mrf.mxu0
          %v2903 = vpop.f32.mrf.mxu0
          %v2904 = vadd.f32 0.0, %v2903
          %v2905 = vpop.f32.mrf.mxu0
          %2906 = vmatprep.mubr.bf16.mxu0 0
          %2907 = vmatmul.mubr.bf16.gmra.mxu0 %v2655
          %v2908 = vpop.f32.mrf.mxu0
          %v2909 = vadd.f32 0.0, %v2908
          %v2910 = vpop.f32.mrf.mxu0
          %v2911 = vpop.f32.mrf.mxu0
          %v2912 = vadd.f32 0.0, %v2911
          %v2913 = vpop.f32.mrf.mxu0
          %2914 = vmatprep.mubr.bf16.mxu0 0
          %2915 = vmatmul.mubr.bf16.gmra.mxu0 %v2656
          %v2916 = vpop.f32.mrf.mxu0
          %v2917 = vadd.f32 0.0, %v2916
          %v2918 = vpop.f32.mrf.mxu0
          %v2919 = vpop.f32.mrf.mxu0
          %v2920 = vadd.f32 0.0, %v2919
          %v2921 = vpop.f32.mrf.mxu0
          %2922 = vmatprep.mubr.bf16.mxu0 0
          %2923 = vmatmul.mubr.bf16.gmra.mxu0 %v2657
          %v2924 = vpop.f32.mrf.mxu0
          %v2925 = vadd.f32 0.0, %v2924
          %v2926 = vpop.f32.mrf.mxu0
          %v2927 = vpop.f32.mrf.mxu0
          %v2928 = vadd.f32 0.0, %v2927
          %v2929 = vpop.f32.mrf.mxu0
          %2930 = vmatprep.mubr.bf16.mxu0 0
          %2931 = vmatmul.mubr.bf16.gmra.mxu0 %v2658
          %v2932 = vpop.f32.mrf.mxu0
          %v2933 = vadd.f32 0.0, %v2932
          %v2934 = vpop.f32.mrf.mxu0
          %v2935 = vpop.f32.mrf.mxu0
          %v2936 = vadd.f32 0.0, %v2935
          %v2937 = vpop.f32.mrf.mxu0
          %2938 = vmatprep.mubr.bf16.mxu0 0
          %2939 = vmatmul.mubr.bf16.gmra.mxu0 %v2659
          %v2940 = vpop.f32.mrf.mxu0
          %v2941 = vadd.f32 0.0, %v2940
          %v2942 = vpop.f32.mrf.mxu0
          %v2943 = vpop.f32.mrf.mxu0
          %v2944 = vadd.f32 0.0, %v2943
          %v2945 = vpop.f32.mrf.mxu0
          %2946 = vmatprep.mubr.bf16.mxu0 0
          %2947 = vmatmul.mubr.bf16.gmra.mxu0 %v2660
          %v2948 = vpop.f32.mrf.mxu0
          %v2949 = vadd.f32 0.0, %v2948
          %v2950 = vpop.f32.mrf.mxu0
          %v2951 = vpop.f32.mrf.mxu0
          %v2952 = vadd.f32 0.0, %v2951
          %v2953 = vpop.f32.mrf.mxu0
          %2954 = vmatprep.mubr.bf16.mxu0 0
          %2955 = vmatmul.mubr.bf16.gmra.mxu0 %v2661
          %v2956 = vpop.f32.mrf.mxu0
          %v2957 = vadd.f32 0.0, %v2956
          %v2958 = vpop.f32.mrf.mxu0
          %v2959 = vpop.f32.mrf.mxu0
          %v2960 = vadd.f32 0.0, %v2959
          %v2961 = vpop.f32.mrf.mxu0
          %2962 = vmatprep.mubr.bf16.mxu0 0
          %2963 = vmatmul.mubr.bf16.gmra.mxu0 %v2662
          %v2964 = vpop.f32.mrf.mxu0
          %v2965 = vadd.f32 0.0, %v2964
          %v2966 = vpop.f32.mrf.mxu0
          %v2967 = vpop.f32.mrf.mxu0
          %v2968 = vadd.f32 0.0, %v2967
          %v2969 = vpop.f32.mrf.mxu0
          %2970 = vmatprep.mubr.bf16.mxu0 0
          %2971 = vmatmul.mubr.bf16.gmra.mxu0 %v2663
          %v2972 = vpop.f32.mrf.mxu0
          %v2973 = vadd.f32 0.0, %v2972
          %v2974 = vpop.f32.mrf.mxu0
          %v2975 = vpop.f32.mrf.mxu0
          %v2976 = vadd.f32 0.0, %v2975
          %v2977 = vpop.f32.mrf.mxu0
          %2978 = vmatprep.mubr.bf16.mxu0 0
          %2979 = vmatmul.mubr.bf16.gmra.mxu0 %v2664
          %v2980 = vpop.f32.mrf.mxu0
          %v2981 = vadd.f32 0.0, %v2980
          %v2982 = vpop.f32.mrf.mxu0
          %v2983 = vpop.f32.mrf.mxu0
          %v2984 = vadd.f32 0.0, %v2983
          %v2985 = vpop.f32.mrf.mxu0
          %2986 = vmatprep.mubr.bf16.mxu0 0
          %2987 = vmatmul.mubr.bf16.gmra.mxu0 %v2665
          %v2988 = vpop.f32.mrf.mxu0
          %v2989 = vadd.f32 0.0, %v2988
          %v2990 = vpop.f32.mrf.mxu0
          %v2991 = vpop.f32.mrf.mxu0
          %v2992 = vadd.f32 0.0, %v2991
          %v2993 = vpop.f32.mrf.mxu0
          %2994 = vmatprep.mubr.bf16.mxu0 0
          %2995 = vmatmul.mubr.bf16.gmra.mxu0 %v2666
          %v2996 = vpop.f32.mrf.mxu0
          %v2997 = vadd.f32 0.0, %v2996
          %v2998 = vpop.f32.mrf.mxu0
          %v2999 = vpop.f32.mrf.mxu0
          %v3000 = vadd.f32 0.0, %v2999
          %v3001 = vpop.f32.mrf.mxu0
          %3002 = vmatprep.mubr.bf16.mxu0 0
          %3003 = vmatmul.mubr.bf16.gmra.mxu0 %v2667
          %v3004 = vpop.f32.mrf.mxu0
          %v3005 = vadd.f32 0.0, %v3004
          %v3006 = vpop.f32.mrf.mxu0
          %v3007 = vpop.f32.mrf.mxu0
          %v3008 = vadd.f32 0.0, %v3007
          %v3009 = vpop.f32.mrf.mxu0
          %3010 = vmatprep.mubr.bf16.mxu0 0
          %3011 = vmatmul.mubr.bf16.gmra.mxu0 %v2668
          %v3012 = vpop.f32.mrf.mxu0
          %v3013 = vadd.f32 0.0, %v3012
          %v3014 = vpop.f32.mrf.mxu0
          %v3015 = vpop.f32.mrf.mxu0
          %v3016 = vadd.f32 0.0, %v3015
          %v3017 = vpop.f32.mrf.mxu0
          %3018 = vmatprep.mubr.bf16.mxu0 0
          %3019 = vmatmul.mubr.bf16.gmra.mxu0 %v2669
          %v3020 = vpop.f32.mrf.mxu0
          %v3021 = vadd.f32 0.0, %v3020
          %v3022 = vpop.f32.mrf.mxu0
          %v3023 = vpop.f32.mrf.mxu0
          %v3024 = vadd.f32 0.0, %v3023
          %v3025 = vpop.f32.mrf.mxu0
          %3026 = vmatprep.mubr.bf16.mxu0 0
          %3027 = vmatmul.mubr.bf16.gmra.mxu0 %v2670
          %v3028 = vpop.f32.mrf.mxu0
          %v3029 = vadd.f32 0.0, %v3028
          %v3030 = vpop.f32.mrf.mxu0
          %v3031 = vpop.f32.mrf.mxu0
          %v3032 = vadd.f32 0.0, %v3031
          %v3033 = vpop.f32.mrf.mxu0
          %3034 = vmatprep.mubr.bf16.mxu0 0
          %3035 = vmatmul.mubr.bf16.gmra.mxu0 %v2671
          %v3036 = vpop.f32.mrf.mxu0
          %v3037 = vadd.f32 0.0, %v3036
          %v3038 = vpop.f32.mrf.mxu0
          %v3039 = vpop.f32.mrf.mxu0
          %v3040 = vadd.f32 0.0, %v3039
          %v3041 = vpop.f32.mrf.mxu0
          %3042 = vmatprep.mubr.bf16.mxu0 0
          %3043 = vmatmul.mubr.bf16.gmra.mxu0 %v2672
          %v3044 = vpop.f32.mrf.mxu0
          %v3045 = vadd.f32 0.0, %v3044
          %v3046 = vpop.f32.mrf.mxu0
          %v3047 = vpop.f32.mrf.mxu0
          %v3048 = vadd.f32 0.0, %v3047
          %v3049 = vpop.f32.mrf.mxu0
          %3050 = vmatprep.mubr.bf16.mxu0 0
          %3051 = vmatmul.mubr.bf16.gmra.mxu0 %v2673
          %v3052 = vpop.f32.mrf.mxu0
          %v3053 = vadd.f32 0.0, %v3052
          %v3054 = vpop.f32.mrf.mxu0
          %v3055 = vpop.f32.mrf.mxu0
          %v3056 = vadd.f32 0.0, %v3055
          %v3057 = vpop.f32.mrf.mxu0
          %3058 = vmatprep.mubr.bf16.mxu0 0
          %3059 = vmatmul.mubr.bf16.gmra.mxu0 %v2674
          %v3060 = vpop.f32.mrf.mxu0
          %v3061 = vadd.f32 0.0, %v3060
          %v3062 = vpop.f32.mrf.mxu0
          %v3063 = vpop.f32.mrf.mxu0
          %v3064 = vadd.f32 0.0, %v3063
          %v3065 = vpop.f32.mrf.mxu0
          %3066 = vmatprep.mubr.bf16.mxu0 0
          %3067 = vmatmul.mubr.bf16.gmra.mxu0 %v2675
          %v3068 = vpop.f32.mrf.mxu0
          %v3069 = vadd.f32 0.0, %v3068
          %v3070 = vpop.f32.mrf.mxu0
          %v3071 = vpop.f32.mrf.mxu0
          %v3072 = vadd.f32 0.0, %v3071
          %v3073 = vpop.f32.mrf.mxu0
          %3074 = vmatprep.mubr.bf16.mxu0 0
          %3075 = vmatmul.mubr.bf16.gmra.mxu0 %v2676
          %v3076 = vpop.f32.mrf.mxu0
          %v3077 = vadd.f32 0.0, %v3076
          %v3078 = vpop.f32.mrf.mxu0
          %v3079 = vpop.f32.mrf.mxu0
          %v3080 = vadd.f32 0.0, %v3079
          %v3081 = vpop.f32.mrf.mxu0
          %3082 = vmatprep.mubr.bf16.mxu0 0
          %3083 = vmatmul.mubr.bf16.gmra.mxu0 %v2677
          %v3084 = vpop.f32.mrf.mxu0
          %v3085 = vadd.f32 0.0, %v3084
          %v3086 = vpop.f32.mrf.mxu0
          %v3087 = vpop.f32.mrf.mxu0
          %v3088 = vadd.f32 0.0, %v3087
          %v3089 = vpop.f32.mrf.mxu0
          %3090 = vmatprep.mubr.bf16.mxu0 0
          %3091 = vmatmul.mubr.bf16.gmra.mxu0 %v2678
          %v3092 = vpop.f32.mrf.mxu0
          %v3093 = vadd.f32 0.0, %v3092
          %v3094 = vpop.f32.mrf.mxu0
          %v3095 = vpop.f32.mrf.mxu0
          %v3096 = vadd.f32 0.0, %v3095
          %v3097 = vpop.f32.mrf.mxu0
          %3098 = vmatprep.mubr.bf16.mxu0 0
          %3099 = vmatmul.mubr.bf16.gmra.mxu0 %v2679
          %v3100 = vpop.f32.mrf.mxu0
          %v3101 = vadd.f32 0.0, %v3100
          %v3102 = vpop.f32.mrf.mxu0
          %v3103 = vpop.f32.mrf.mxu0
          %v3104 = vadd.f32 0.0, %v3103
          %v3105 = vpop.f32.mrf.mxu0
          %3106 = vmatprep.mubr.bf16.mxu0 0
          %3107 = vmatmul.mubr.bf16.gmra.mxu0 %v2680
          %v3108 = vpop.f32.mrf.mxu0
          %v3109 = vadd.f32 0.0, %v3108
          %v3110 = vpop.f32.mrf.mxu0
          %v3111 = vpop.f32.mrf.mxu0
          %v3112 = vadd.f32 0.0, %v3111
          %v3113 = vpop.f32.mrf.mxu0
          %3114 = vmatprep.mubr.bf16.mxu0 0
          %3115 = vmatmul.mubr.bf16.gmra.mxu0 %v2681
          %v3116 = vpop.f32.mrf.mxu0
          %v3117 = vadd.f32 0.0, %v3116
          %v3118 = vpop.f32.mrf.mxu0
          %v3119 = vpop.f32.mrf.mxu0
          %v3120 = vadd.f32 0.0, %v3119
          %v3121 = vpop.f32.mrf.mxu0
          %3122 = vmatprep.mubr.bf16.mxu0 0
          %3123 = vmatmul.mubr.bf16.gmra.mxu0 %v2682
          %v3124 = vpop.f32.mrf.mxu0
          %v3125 = vadd.f32 0.0, %v3124
          %v3126 = vpop.f32.mrf.mxu0
          %v3127 = vpop.f32.mrf.mxu0
          %v3128 = vadd.f32 0.0, %v3127
          %v3129 = vpop.f32.mrf.mxu0
          %3130 = vmatprep.mubr.bf16.mxu0 0
          %3131 = vmatmul.mubr.bf16.gmra.mxu0 %v2683
          %v3132 = vpop.f32.mrf.mxu0
          %v3133 = vadd.f32 0.0, %v3132
          %v3134 = vpop.f32.mrf.mxu0
          %v3135 = vpop.f32.mrf.mxu0
          %v3136 = vadd.f32 0.0, %v3135
          %v3137 = vpop.f32.mrf.mxu0
          %3138 = vmatprep.mubr.bf16.mxu0 0
          %3139 = vmatmul.mubr.bf16.gmra.mxu0 %v2684
          %v3140 = vpop.f32.mrf.mxu0
          %v3141 = vadd.f32 0.0, %v3140
          %v3142 = vpop.f32.mrf.mxu0
          %v3143 = vpop.f32.mrf.mxu0
          %v3144 = vadd.f32 0.0, %v3143
          %v3145 = vpop.f32.mrf.mxu0
          %3146 = vmatprep.mubr.bf16.mxu0 0
          %3147 = vmatmul.mubr.bf16.gmra.mxu0 %v2685
          %v3148 = vpop.f32.mrf.mxu0
          %v3149 = vadd.f32 0.0, %v3148
          %v3150 = vpop.f32.mrf.mxu0
          %v3151 = vpop.f32.mrf.mxu0
          %v3152 = vadd.f32 0.0, %v3151
          %v3153 = vpop.f32.mrf.mxu0
          %3154 = vmatprep.mubr.bf16.mxu0 0
          %3155 = vmatmul.mubr.bf16.gmra.mxu0 %v2686
          %v3156 = vpop.f32.mrf.mxu0
          %v3157 = vadd.f32 0.0, %v3156
          %v3158 = vpop.f32.mrf.mxu0
          %v3159 = vpop.f32.mrf.mxu0
          %v3160 = vadd.f32 0.0, %v3159
          %v3161 = vpop.f32.mrf.mxu0
          %3162 = vmatprep.mubr.bf16.mxu0 0
          %3163 = vmatmul.mubr.bf16.gmra.mxu0 %v2687
          %v3164 = vpop.f32.mrf.mxu0
          %v3165 = vadd.f32 0.0, %v3164
          %v3166 = vpop.f32.mrf.mxu0
          %v3167 = vpop.f32.mrf.mxu0
          %v3168 = vadd.f32 0.0, %v3167
          %v3169 = vpop.f32.mrf.mxu0
          %3170 = vmatprep.mubr.bf16.mxu0 0
          %3171 = vmatmul.mubr.bf16.gmra.mxu0 %v2688
          %v3172 = vpop.f32.mrf.mxu0
          %v3173 = vadd.f32 0.0, %v3172
          %v3174 = vpop.f32.mrf.mxu0
          %v3175 = vpop.f32.mrf.mxu0
          %v3176 = vadd.f32 0.0, %v3175
          %v3177 = vpop.f32.mrf.mxu0
          %3178 = vmatprep.mubr.bf16.mxu0 0
          %3179 = vmatmul.mubr.bf16.gmra.mxu0 %v2689
          %v3180 = vpop.f32.mrf.mxu0
          %v3181 = vadd.f32 0.0, %v3180
          %v3182 = vpop.f32.mrf.mxu0
          %v3183 = vpop.f32.mrf.mxu0
          %v3184 = vadd.f32 0.0, %v3183
          %v3185 = vpop.f32.mrf.mxu0
          %3186 = vmatprep.mubr.bf16.mxu0 0
          %3187 = vmatmul.mubr.bf16.gmra.mxu0 %v2690
          %v3188 = vpop.f32.mrf.mxu0
          %v3189 = vadd.f32 0.0, %v3188
          %v3190 = vpop.f32.mrf.mxu0
          %v3191 = vpop.f32.mrf.mxu0
          %v3192 = vadd.f32 0.0, %v3191
          %v3193 = vpop.f32.mrf.mxu0
          %3194 = vmatprep.mubr.bf16.mxu0 0
          %3195 = vmatmul.mubr.bf16.gmra.mxu0 %v2691
          %v3196 = vpop.f32.mrf.mxu0
          %v3197 = vadd.f32 0.0, %v3196
          %v3198 = vpop.f32.mrf.mxu0
          %v3199 = vpop.f32.mrf.mxu0
          %v3200 = vadd.f32 0.0, %v3199
          %v3201 = vpop.f32.mrf.mxu0
          %3202 = vmatprep.mubr.bf16.mxu0 0
          %3203 = vmatmul.mubr.bf16.gmra.mxu0 %v2692
          %v3204 = vpop.f32.mrf.mxu0
          %v3205 = vadd.f32 0.0, %v3204
          %v3206 = vpop.f32.mrf.mxu0
          %v3207 = vpop.f32.mrf.mxu0
          %v3208 = vadd.f32 0.0, %v3207
          %v3209 = vpop.f32.mrf.mxu0
          %3210 = vmatprep.mubr.bf16.mxu0 0
          %3211 = vmatmul.mubr.bf16.gmra.mxu0 %v2693
          %v3212 = vpop.f32.mrf.mxu0
          %v3213 = vadd.f32 0.0, %v3212
          %v3214 = vpop.f32.mrf.mxu0
          %v3215 = vpop.f32.mrf.mxu0
          %v3216 = vadd.f32 0.0, %v3215
          %v3217 = vpop.f32.mrf.mxu0
          %3218 = vmatprep.mubr.bf16.mxu0 0
          %3219 = vmatmul.mubr.bf16.gmra.mxu0 %v2694
          %v3220 = vpop.f32.mrf.mxu0
          %v3221 = vadd.f32 0.0, %v3220
          %v3222 = vpop.f32.mrf.mxu0
          %v3223 = vpop.f32.mrf.mxu0
          %v3224 = vadd.f32 0.0, %v3223
          %v3225 = vpop.f32.mrf.mxu0
          %3226 = vmatprep.mubr.bf16.mxu0 0
          %3227 = vmatmul.mubr.bf16.gmra.mxu0 %v2695
          %v3228 = vpop.f32.mrf.mxu0
          %v3229 = vadd.f32 0.0, %v3228
          %v3230 = vpop.f32.mrf.mxu0
          %v3231 = vpop.f32.mrf.mxu0
          %v3232 = vadd.f32 0.0, %v3231
          %v3233 = vpop.f32.mrf.mxu0
          %3234 = vmatprep.mubr.bf16.mxu0 0
          %3235 = vmatmul.mubr.bf16.gmra.mxu0 %v2696
          %v3236 = vpop.f32.mrf.mxu0
          %v3237 = vadd.f32 0.0, %v3236
          %v3238 = vpop.f32.mrf.mxu0
          %v3239 = vpop.f32.mrf.mxu0
          %v3240 = vadd.f32 0.0, %v3239
          %v3241 = vpop.f32.mrf.mxu0
          %3242 = vmatprep.mubr.bf16.mxu0 0
          %3243 = vmatmul.mubr.bf16.gmra.mxu0 %v2697
          %v3244 = vpop.f32.mrf.mxu0
          %v3245 = vadd.f32 0.0, %v3244
          %v3246 = vpop.f32.mrf.mxu0
          %v3247 = vpop.f32.mrf.mxu0
          %v3248 = vadd.f32 0.0, %v3247
          %v3249 = vpop.f32.mrf.mxu0
          %3250 = vmatprep.mubr.bf16.mxu0 0
          %3251 = vmatmul.mubr.bf16.gmra.mxu0 %v2698
          %v3252 = vpop.f32.mrf.mxu0
          %v3253 = vadd.f32 0.0, %v3252
          %v3254 = vpop.f32.mrf.mxu0
          %v3255 = vpop.f32.mrf.mxu0
          %v3256 = vadd.f32 0.0, %v3255
          %v3257 = vpop.f32.mrf.mxu0
          %3258 = vmatprep.mubr.bf16.mxu0 0
          %3259 = vmatmul.mubr.bf16.gmra.mxu0 %v2699
          %v3260 = vpop.f32.mrf.mxu0
          %v3261 = vadd.f32 0.0, %v3260
          %v3262 = vpop.f32.mrf.mxu0
          %v3263 = vpop.f32.mrf.mxu0
          %v3264 = vadd.f32 0.0, %v3263
          %v3265 = vpop.f32.mrf.mxu0
          %3266 = vmatprep.mubr.bf16.mxu0 0
          %3267 = vmatmul.mubr.bf16.gmra.mxu0 %v2700
          %v3268 = vpop.f32.mrf.mxu0
          %v3269 = vadd.f32 0.0, %v3268
          %v3270 = vpop.f32.mrf.mxu0
          %v3271 = vpop.f32.mrf.mxu0
          %v3272 = vadd.f32 0.0, %v3271
          %v3273 = vpop.f32.mrf.mxu0
          %3274 = vmatprep.mubr.bf16.mxu0 0
          %3275 = vmatmul.mubr.bf16.gmra.mxu0 %v2701
          %v3276 = vpop.f32.mrf.mxu0
          %v3277 = vadd.f32 0.0, %v3276
          %v3278 = vpop.f32.mrf.mxu0
          %v3279 = vpop.f32.mrf.mxu0
          %v3280 = vadd.f32 0.0, %v3279
          %v3281 = vpop.f32.mrf.mxu0
          %3282 = vmatprep.mubr.bf16.mxu0 0
          %3283 = vmatmul.mubr.bf16.gmra.mxu0 %v2702
          %v3284 = vpop.f32.mrf.mxu0
          %v3285 = vadd.f32 0.0, %v3284
          %v3286 = vpop.f32.mrf.mxu0
          %v3287 = vpop.f32.mrf.mxu0
          %v3288 = vadd.f32 0.0, %v3287
          %v3289 = vpop.f32.mrf.mxu0
          %3290 = vmatprep.mubr.bf16.mxu0 0
          %3291 = vmatmul.mubr.bf16.gmra.mxu0 %v2703
          %v3292 = vpop.f32.mrf.mxu0
          %v3293 = vadd.f32 0.0, %v3292
          %v3294 = vpop.f32.mrf.mxu0
          %v3295 = vpop.f32.mrf.mxu0
          %v3296 = vadd.f32 0.0, %v3295
          %v3297 = vpop.f32.mrf.mxu0
          %3298 = vmatprep.mubr.bf16.mxu0 0
          %3299 = vmatmul.mubr.bf16.gmra.mxu0 %v2704
          %v3300 = vpop.f32.mrf.mxu0
          %v3301 = vadd.f32 0.0, %v3300
          %v3302 = vpop.f32.mrf.mxu0
          %v3303 = vpop.f32.mrf.mxu0
          %v3304 = vadd.f32 0.0, %v3303
          %v3305 = vpop.f32.mrf.mxu0
          %3306 = vmatprep.mubr.bf16.mxu0 0
          %3307 = vmatmul.mubr.bf16.gmra.mxu0 %v2705
          %v3308 = vpop.f32.mrf.mxu0
          %v3309 = vadd.f32 0.0, %v3308
          %v3310 = vpop.f32.mrf.mxu0
          %v3311 = vpop.f32.mrf.mxu0
          %v3312 = vadd.f32 0.0, %v3311
          %v3313 = vpop.f32.mrf.mxu0
          %3314 = vdwg.mxu0
          %s3315 = scalar_lea.vmem [#allocation3], %s424
          %3316 = vst [vmem:[%s3315] sm:$0xff] %v2805
          %3317 = vst [vmem:[%s3315 + $0x8] sm:$0xff] %v2808
          %3318 = vst [vmem:[%s3315 + $0x10] sm:$0xff] %v2813
          %3319 = vst [vmem:[%s3315 + $0x18] sm:$0xff] %v2816
          %3320 = vst [vmem:[%s3315 + $0x20] sm:$0xff] %v2821
          %3321 = vst [vmem:[%s3315 + $0x28] sm:$0xff] %v2824
          %3322 = vst [vmem:[%s3315 + $0x30] sm:$0xff] %v2829
          %3323 = vst [vmem:[%s3315 + $0x38] sm:$0xff] %v2832
          %3324 = vst [vmem:[%s3315 + $0x40] sm:$0xff] %v2837
          %3325 = vst [vmem:[%s3315 + $0x48] sm:$0xff] %v2840
          %3326 = vst [vmem:[%s3315 + $0x50] sm:$0xff] %v2845
          %3327 = vst [vmem:[%s3315 + $0x58] sm:$0xff] %v2848
          %3328 = vst [vmem:[%s3315 + $0x60] sm:$0xff] %v2853
          %3329 = vst [vmem:[%s3315 + $0x68] sm:$0xff] %v2856
          %3330 = vst [vmem:[%s3315 + $0x70] sm:$0xff] %v2861
          %3331 = vst [vmem:[%s3315 + $0x78] sm:$0xff] %v2864
          %3332 = vst [vmem:[%s3315 + $0x80] sm:$0xff] %v2869
          %3333 = vst [vmem:[%s3315 + $0x88] sm:$0xff] %v2872
          %3334 = vst [vmem:[%s3315 + $0x90] sm:$0xff] %v2877
          %3335 = vst [vmem:[%s3315 + $0x98] sm:$0xff] %v2880
          %3336 = vst [vmem:[%s3315 + $0xa0] sm:$0xff] %v2885
          %3337 = vst [vmem:[%s3315 + $0xa8] sm:$0xff] %v2888
          %3338 = vst [vmem:[%s3315 + $0xb0] sm:$0xff] %v2893
          %3339 = vst [vmem:[%s3315 + $0xb8] sm:$0xff] %v2896
          %3340 = vst [vmem:[%s3315 + $0xc0] sm:$0xff] %v2901
          %3341 = vst [vmem:[%s3315 + $0xc8] sm:$0xff] %v2904
          %3342 = vst [vmem:[%s3315 + $0xd0] sm:$0xff] %v2909
          %3343 = vst [vmem:[%s3315 + $0xd8] sm:$0xff] %v2912
          %3344 = vst [vmem:[%s3315 + $0xe0] sm:$0xff] %v2917
          %3345 = vst [vmem:[%s3315 + $0xe8] sm:$0xff] %v2920
          %3346 = vst [vmem:[%s3315 + $0xf0] sm:$0xff] %v2925
          %3347 = vst [vmem:[%s3315 + $0xf8] sm:$0xff] %v2928
          %3348 = vst [vmem:[%s3315 + $0x100] sm:$0xff] %v2933
          %3349 = vst [vmem:[%s3315 + $0x108] sm:$0xff] %v2936
          %3350 = vst [vmem:[%s3315 + $0x110] sm:$0xff] %v2941
          %3351 = vst [vmem:[%s3315 + $0x118] sm:$0xff] %v2944
          %3352 = vst [vmem:[%s3315 + $0x120] sm:$0xff] %v2949
          %3353 = vst [vmem:[%s3315 + $0x128] sm:$0xff] %v2952
          %3354 = vst [vmem:[%s3315 + $0x130] sm:$0xff] %v2957
          %3355 = vst [vmem:[%s3315 + $0x138] sm:$0xff] %v2960
          %3356 = vst [vmem:[%s3315 + $0x140] sm:$0xff] %v2965
          %3357 = vst [vmem:[%s3315 + $0x148] sm:$0xff] %v2968
          %3358 = vst [vmem:[%s3315 + $0x150] sm:$0xff] %v2973
          %3359 = vst [vmem:[%s3315 + $0x158] sm:$0xff] %v2976
          %3360 = vst [vmem:[%s3315 + $0x160] sm:$0xff] %v2981
          %3361 = vst [vmem:[%s3315 + $0x168] sm:$0xff] %v2984
          %3362 = vst [vmem:[%s3315 + $0x170] sm:$0xff] %v2989
          %3363 = vst [vmem:[%s3315 + $0x178] sm:$0xff] %v2992
          %3364 = vst [vmem:[%s3315 + $0x180] sm:$0xff] %v2997
          %3365 = vst [vmem:[%s3315 + $0x188] sm:$0xff] %v3000
          %3366 = vst [vmem:[%s3315 + $0x190] sm:$0xff] %v3005
          %3367 = vst [vmem:[%s3315 + $0x198] sm:$0xff] %v3008
          %3368 = vst [vmem:[%s3315 + $0x1a0] sm:$0xff] %v3013
          %3369 = vst [vmem:[%s3315 + $0x1a8] sm:$0xff] %v3016
          %3370 = vst [vmem:[%s3315 + $0x1b0] sm:$0xff] %v3021
          %3371 = vst [vmem:[%s3315 + $0x1b8] sm:$0xff] %v3024
          %3372 = vst [vmem:[%s3315 + $0x1c0] sm:$0xff] %v3029
          %3373 = vst [vmem:[%s3315 + $0x1c8] sm:$0xff] %v3032
          %3374 = vst [vmem:[%s3315 + $0x1d0] sm:$0xff] %v3037
          %3375 = vst [vmem:[%s3315 + $0x1d8] sm:$0xff] %v3040
          %3376 = vst [vmem:[%s3315 + $0x1e0] sm:$0xff] %v3045
          %3377 = vst [vmem:[%s3315 + $0x1e8] sm:$0xff] %v3048
          %3378 = vst [vmem:[%s3315 + $0x1f0] sm:$0xff] %v3053
          %3379 = vst [vmem:[%s3315 + $0x1f8] sm:$0xff] %v3056
          %3380 = vst [vmem:[%s3315 + $0x200] sm:$0xff] %v3061
          %3381 = vst [vmem:[%s3315 + $0x208] sm:$0xff] %v3064
          %3382 = vst [vmem:[%s3315 + $0x210] sm:$0xff] %v3069
          %3383 = vst [vmem:[%s3315 + $0x218] sm:$0xff] %v3072
          %3384 = vst [vmem:[%s3315 + $0x220] sm:$0xff] %v3077
          %3385 = vst [vmem:[%s3315 + $0x228] sm:$0xff] %v3080
          %3386 = vst [vmem:[%s3315 + $0x230] sm:$0xff] %v3085
          %3387 = vst [vmem:[%s3315 + $0x238] sm:$0xff] %v3088
          %3388 = vst [vmem:[%s3315 + $0x240] sm:$0xff] %v3093
          %3389 = vst [vmem:[%s3315 + $0x248] sm:$0xff] %v3096
          %3390 = vst [vmem:[%s3315 + $0x250] sm:$0xff] %v3101
          %3391 = vst [vmem:[%s3315 + $0x258] sm:$0xff] %v3104
          %3392 = vst [vmem:[%s3315 + $0x260] sm:$0xff] %v3109
          %3393 = vst [vmem:[%s3315 + $0x268] sm:$0xff] %v3112
          %3394 = vst [vmem:[%s3315 + $0x270] sm:$0xff] %v3117
          %3395 = vst [vmem:[%s3315 + $0x278] sm:$0xff] %v3120
          %3396 = vst [vmem:[%s3315 + $0x280] sm:$0xff] %v3125
          %3397 = vst [vmem:[%s3315 + $0x288] sm:$0xff] %v3128
          %3398 = vst [vmem:[%s3315 + $0x290] sm:$0xff] %v3133
          %3399 = vst [vmem:[%s3315 + $0x298] sm:$0xff] %v3136
          %3400 = vst [vmem:[%s3315 + $0x2a0] sm:$0xff] %v3141
          %3401 = vst [vmem:[%s3315 + $0x2a8] sm:$0xff] %v3144
          %3402 = vst [vmem:[%s3315 + $0x2b0] sm:$0xff] %v3149
          %3403 = vst [vmem:[%s3315 + $0x2b8] sm:$0xff] %v3152
          %3404 = vst [vmem:[%s3315 + $0x2c0] sm:$0xff] %v3157
          %3405 = vst [vmem:[%s3315 + $0x2c8] sm:$0xff] %v3160
          %3406 = vst [vmem:[%s3315 + $0x2d0] sm:$0xff] %v3165
          %3407 = vst [vmem:[%s3315 + $0x2d8] sm:$0xff] %v3168
          %3408 = vst [vmem:[%s3315 + $0x2e0] sm:$0xff] %v3173
          %3409 = vst [vmem:[%s3315 + $0x2e8] sm:$0xff] %v3176
          %3410 = vst [vmem:[%s3315 + $0x2f0] sm:$0xff] %v3181
          %3411 = vst [vmem:[%s3315 + $0x2f8] sm:$0xff] %v3184
          %3412 = vst [vmem:[%s3315 + $0x300] sm:$0xff] %v3189
          %3413 = vst [vmem:[%s3315 + $0x308] sm:$0xff] %v3192
          %3414 = vst [vmem:[%s3315 + $0x310] sm:$0xff] %v3197
          %3415 = vst [vmem:[%s3315 + $0x318] sm:$0xff] %v3200
          %3416 = vst [vmem:[%s3315 + $0x320] sm:$0xff] %v3205
          %3417 = vst [vmem:[%s3315 + $0x328] sm:$0xff] %v3208
          %3418 = vst [vmem:[%s3315 + $0x330] sm:$0xff] %v3213
          %3419 = vst [vmem:[%s3315 + $0x338] sm:$0xff] %v3216
          %3420 = vst [vmem:[%s3315 + $0x340] sm:$0xff] %v3221
          %3421 = vst [vmem:[%s3315 + $0x348] sm:$0xff] %v3224
          %3422 = vst [vmem:[%s3315 + $0x350] sm:$0xff] %v3229
          %3423 = vst [vmem:[%s3315 + $0x358] sm:$0xff] %v3232
          %3424 = vst [vmem:[%s3315 + $0x360] sm:$0xff] %v3237
          %3425 = vst [vmem:[%s3315 + $0x368] sm:$0xff] %v3240
          %3426 = vst [vmem:[%s3315 + $0x370] sm:$0xff] %v3245
          %3427 = vst [vmem:[%s3315 + $0x378] sm:$0xff] %v3248
          %3428 = vst [vmem:[%s3315 + $0x380] sm:$0xff] %v3253
          %3429 = vst [vmem:[%s3315 + $0x388] sm:$0xff] %v3256
          %3430 = vst [vmem:[%s3315 + $0x390] sm:$0xff] %v3261
          %3431 = vst [vmem:[%s3315 + $0x398] sm:$0xff] %v3264
          %3432 = vst [vmem:[%s3315 + $0x3a0] sm:$0xff] %v3269
          %3433 = vst [vmem:[%s3315 + $0x3a8] sm:$0xff] %v3272
          %3434 = vst [vmem:[%s3315 + $0x3b0] sm:$0xff] %v3277
          %3435 = vst [vmem:[%s3315 + $0x3b8] sm:$0xff] %v3280
          %3436 = vst [vmem:[%s3315 + $0x3c0] sm:$0xff] %v3285
          %3437 = vst [vmem:[%s3315 + $0x3c8] sm:$0xff] %v3288
          %3438 = vst [vmem:[%s3315 + $0x3d0] sm:$0xff] %v3293
          %3439 = vst [vmem:[%s3315 + $0x3d8] sm:$0xff] %v3296
          %3440 = vst [vmem:[%s3315 + $0x3e0] sm:$0xff] %v3301
          %3441 = vst [vmem:[%s3315 + $0x3e8] sm:$0xff] %v3304
          %3442 = vst [vmem:[%s3315 + $0x3f0] sm:$0xff] %v3309
          %3443 = vst [vmem:[%s3315 + $0x3f8] sm:$0xff] %v3312
          %v3444 = vld [vmem:[#allocation6] sm:$0x1]
          %v3445 = vadd.f32 %v2805, %v2808
          %v3446 = vadd.f32 %v3445, %v2813
          %v3447 = vadd.f32 %v3446, %v2816
          %v3448 = vadd.f32 %v3447, %v2821
          %v3449 = vadd.f32 %v3448, %v2824
          %v3450 = vadd.f32 %v3449, %v2829
          %v3451 = vadd.f32 %v3450, %v2832
          %v3452 = vadd.f32 %v3451, %v2837
          %v3453 = vadd.f32 %v3452, %v2840
          %v3454 = vadd.f32 %v3453, %v2845
          %v3455 = vadd.f32 %v3454, %v2848
          %v3456 = vadd.f32 %v3455, %v2853
          %v3457 = vadd.f32 %v3456, %v2856
          %v3458 = vadd.f32 %v3457, %v2861
          %v3459 = vadd.f32 %v3458, %v2864
          %v3460 = vadd.f32 %v3459, %v2869
          %v3461 = vadd.f32 %v3460, %v2872
          %v3462 = vadd.f32 %v3461, %v2877
          %v3463 = vadd.f32 %v3462, %v2880
          %v3464 = vadd.f32 %v3463, %v2885
          %v3465 = vadd.f32 %v3464, %v2888
          %v3466 = vadd.f32 %v3465, %v2893
          %v3467 = vadd.f32 %v3466, %v2896
          %v3468 = vadd.f32 %v3467, %v2901
          %v3469 = vadd.f32 %v3468, %v2904
          %v3470 = vadd.f32 %v3469, %v2909
          %v3471 = vadd.f32 %v3470, %v2912
          %v3472 = vadd.f32 %v3471, %v2917
          %v3473 = vadd.f32 %v3472, %v2920
          %v3474 = vadd.f32 %v3473, %v2925
          %v3475 = vadd.f32 %v3474, %v2928
          %v3476 = vadd.f32 %v3475, %v2933
          %v3477 = vadd.f32 %v3476, %v2936
          %v3478 = vadd.f32 %v3477, %v2941
          %v3479 = vadd.f32 %v3478, %v2944
          %v3480 = vadd.f32 %v3479, %v2949
          %v3481 = vadd.f32 %v3480, %v2952
          %v3482 = vadd.f32 %v3481, %v2957
          %v3483 = vadd.f32 %v3482, %v2960
          %v3484 = vadd.f32 %v3483, %v2965
          %v3485 = vadd.f32 %v3484, %v2968
          %v3486 = vadd.f32 %v3485, %v2973
          %v3487 = vadd.f32 %v3486, %v2976
          %v3488 = vadd.f32 %v3487, %v2981
          %v3489 = vadd.f32 %v3488, %v2984
          %v3490 = vadd.f32 %v3489, %v2989
          %v3491 = vadd.f32 %v3490, %v2992
          %v3492 = vadd.f32 %v3491, %v2997
          %v3493 = vadd.f32 %v3492, %v3000
          %v3494 = vadd.f32 %v3493, %v3005
          %v3495 = vadd.f32 %v3494, %v3008
          %v3496 = vadd.f32 %v3495, %v3013
          %v3497 = vadd.f32 %v3496, %v3016
          %v3498 = vadd.f32 %v3497, %v3021
          %v3499 = vadd.f32 %v3498, %v3024
          %v3500 = vadd.f32 %v3499, %v3029
          %v3501 = vadd.f32 %v3500, %v3032
          %v3502 = vadd.f32 %v3501, %v3037
          %v3503 = vadd.f32 %v3502, %v3040
          %v3504 = vadd.f32 %v3503, %v3045
          %v3505 = vadd.f32 %v3504, %v3048
          %v3506 = vadd.f32 %v3505, %v3053
          %v3507 = vadd.f32 %v3506, %v3056
          %v3508 = vadd.f32 %v3507, %v3061
          %v3509 = vadd.f32 %v3508, %v3064
          %v3510 = vadd.f32 %v3509, %v3069
          %v3511 = vadd.f32 %v3510, %v3072
          %v3512 = vadd.f32 %v3511, %v3077
          %v3513 = vadd.f32 %v3512, %v3080
          %v3514 = vadd.f32 %v3513, %v3085
          %v3515 = vadd.f32 %v3514, %v3088
          %v3516 = vadd.f32 %v3515, %v3093
          %v3517 = vadd.f32 %v3516, %v3096
          %v3518 = vadd.f32 %v3517, %v3101
          %v3519 = vadd.f32 %v3518, %v3104
          %v3520 = vadd.f32 %v3519, %v3109
          %v3521 = vadd.f32 %v3520, %v3112
          %v3522 = vadd.f32 %v3521, %v3117
          %v3523 = vadd.f32 %v3522, %v3120
          %v3524 = vadd.f32 %v3523, %v3125
          %v3525 = vadd.f32 %v3524, %v3128
          %v3526 = vadd.f32 %v3525, %v3133
          %v3527 = vadd.f32 %v3526, %v3136
          %v3528 = vadd.f32 %v3527, %v3141
          %v3529 = vadd.f32 %v3528, %v3144
          %v3530 = vadd.f32 %v3529, %v3149
          %v3531 = vadd.f32 %v3530, %v3152
          %v3532 = vadd.f32 %v3531, %v3157
          %v3533 = vadd.f32 %v3532, %v3160
          %v3534 = vadd.f32 %v3533, %v3165
          %v3535 = vadd.f32 %v3534, %v3168
          %v3536 = vadd.f32 %v3535, %v3173
          %v3537 = vadd.f32 %v3536, %v3176
          %v3538 = vadd.f32 %v3537, %v3181
          %v3539 = vadd.f32 %v3538, %v3184
          %v3540 = vadd.f32 %v3539, %v3189
          %v3541 = vadd.f32 %v3540, %v3192
          %v3542 = vadd.f32 %v3541, %v3197
          %v3543 = vadd.f32 %v3542, %v3200
          %v3544 = vadd.f32 %v3543, %v3205
          %v3545 = vadd.f32 %v3544, %v3208
          %v3546 = vadd.f32 %v3545, %v3213
          %v3547 = vadd.f32 %v3546, %v3216
          %v3548 = vadd.f32 %v3547, %v3221
          %v3549 = vadd.f32 %v3548, %v3224
          %v3550 = vadd.f32 %v3549, %v3229
          %v3551 = vadd.f32 %v3550, %v3232
          %v3552 = vadd.f32 %v3551, %v3237
          %v3553 = vadd.f32 %v3552, %v3240
          %v3554 = vadd.f32 %v3553, %v3245
          %v3555 = vadd.f32 %v3554, %v3248
          %v3556 = vadd.f32 %v3555, %v3253
          %v3557 = vadd.f32 %v3556, %v3256
          %v3558 = vadd.f32 %v3557, %v3261
          %v3559 = vadd.f32 %v3558, %v3264
          %v3560 = vadd.f32 %v3559, %v3269
          %v3561 = vadd.f32 %v3560, %v3272
          %v3562 = vadd.f32 %v3561, %v3277
          %v3563 = vadd.f32 %v3562, %v3280
          %v3564 = vadd.f32 %v3563, %v3285
          %v3565 = vadd.f32 %v3564, %v3288
          %v3566 = vadd.f32 %v3565, %v3293
          %v3567 = vadd.f32 %v3566, %v3296
          %v3568 = vadd.f32 %v3567, %v3301
          %v3569 = vadd.f32 %v3568, %v3304
          %v3570 = vadd.f32 %v3569, %v3309
          %v3571 = vadd.f32 %v3570, %v3312
          %v3572 = vrot.slane %v3571, 4
          %v3573 = vadd.f32 %v3571, %v3572
          %v3574 = vrot.slane %v3573, 2
          %v3575 = vadd.f32 %v3573, %v3574
          %v3576 = vrot.slane %v3575, 1
          %v3577 = vadd.f32 %v3575, %v3576
          %v3578 = vadd.f32 %v3444, %v3577
          %3579 = vst [vmem:[#allocation6] sm:$0x1] %v3578
          %v3580 = vld [vmem:[#allocation7] sm:$0x1]
          %v3581 = vmul.f32 %v2805, %v2805
          %v3582 = vmul.f32 %v2808, %v2808
          %v3583 = vmul.f32 %v2813, %v2813
          %v3584 = vmul.f32 %v2816, %v2816
          %v3585 = vmul.f32 %v2821, %v2821
          %v3586 = vmul.f32 %v2824, %v2824
          %v3587 = vmul.f32 %v2829, %v2829
          %v3588 = vmul.f32 %v2832, %v2832
          %v3589 = vmul.f32 %v2837, %v2837
          %v3590 = vmul.f32 %v2840, %v2840
          %v3591 = vmul.f32 %v2845, %v2845
          %v3592 = vmul.f32 %v2848, %v2848
          %v3593 = vmul.f32 %v2853, %v2853
          %v3594 = vmul.f32 %v2856, %v2856
          %v3595 = vmul.f32 %v2861, %v2861
          %v3596 = vmul.f32 %v2864, %v2864
          %v3597 = vmul.f32 %v2869, %v2869
          %v3598 = vmul.f32 %v2872, %v2872
          %v3599 = vmul.f32 %v2877, %v2877
          %v3600 = vmul.f32 %v2880, %v2880
          %v3601 = vmul.f32 %v2885, %v2885
          %v3602 = vmul.f32 %v2888, %v2888
          %v3603 = vmul.f32 %v2893, %v2893
          %v3604 = vmul.f32 %v2896, %v2896
          %v3605 = vmul.f32 %v2901, %v2901
          %v3606 = vmul.f32 %v2904, %v2904
          %v3607 = vmul.f32 %v2909, %v2909
          %v3608 = vmul.f32 %v2912, %v2912
          %v3609 = vmul.f32 %v2917, %v2917
          %v3610 = vmul.f32 %v2920, %v2920
          %v3611 = vmul.f32 %v2925, %v2925
          %v3612 = vmul.f32 %v2928, %v2928
          %v3613 = vmul.f32 %v2933, %v2933
          %v3614 = vmul.f32 %v2936, %v2936
          %v3615 = vmul.f32 %v2941, %v2941
          %v3616 = vmul.f32 %v2944, %v2944
          %v3617 = vmul.f32 %v2949, %v2949
          %v3618 = vmul.f32 %v2952, %v2952
          %v3619 = vmul.f32 %v2957, %v2957
          %v3620 = vmul.f32 %v2960, %v2960
          %v3621 = vmul.f32 %v2965, %v2965
          %v3622 = vmul.f32 %v2968, %v2968
          %v3623 = vmul.f32 %v2973, %v2973
          %v3624 = vmul.f32 %v2976, %v2976
          %v3625 = vmul.f32 %v2981, %v2981
          %v3626 = vmul.f32 %v2984, %v2984
          %v3627 = vmul.f32 %v2989, %v2989
          %v3628 = vmul.f32 %v2992, %v2992
          %v3629 = vmul.f32 %v2997, %v2997
          %v3630 = vmul.f32 %v3000, %v3000
          %v3631 = vmul.f32 %v3005, %v3005
          %v3632 = vmul.f32 %v3008, %v3008
          %v3633 = vmul.f32 %v3013, %v3013
          %v3634 = vmul.f32 %v3016, %v3016
          %v3635 = vmul.f32 %v3021, %v3021
          %v3636 = vmul.f32 %v3024, %v3024
          %v3637 = vmul.f32 %v3029, %v3029
          %v3638 = vmul.f32 %v3032, %v3032
          %v3639 = vmul.f32 %v3037, %v3037
          %v3640 = vmul.f32 %v3040, %v3040
          %v3641 = vmul.f32 %v3045, %v3045
          %v3642 = vmul.f32 %v3048, %v3048
          %v3643 = vmul.f32 %v3053, %v3053
          %v3644 = vmul.f32 %v3056, %v3056
          %v3645 = vmul.f32 %v3061, %v3061
          %v3646 = vmul.f32 %v3064, %v3064
          %v3647 = vmul.f32 %v3069, %v3069
          %v3648 = vmul.f32 %v3072, %v3072
          %v3649 = vmul.f32 %v3077, %v3077
          %v3650 = vmul.f32 %v3080, %v3080
          %v3651 = vmul.f32 %v3085, %v3085
          %v3652 = vmul.f32 %v3088, %v3088
          %v3653 = vmul.f32 %v3093, %v3093
          %v3654 = vmul.f32 %v3096, %v3096
          %v3655 = vmul.f32 %v3101, %v3101
          %v3656 = vmul.f32 %v3104, %v3104
          %v3657 = vmul.f32 %v3109, %v3109
          %v3658 = vmul.f32 %v3112, %v3112
          %v3659 = vmul.f32 %v3117, %v3117
          %v3660 = vmul.f32 %v3120, %v3120
          %v3661 = vmul.f32 %v3125, %v3125
          %v3662 = vmul.f32 %v3128, %v3128
          %v3663 = vmul.f32 %v3133, %v3133
          %v3664 = vmul.f32 %v3136, %v3136
          %v3665 = vmul.f32 %v3141, %v3141
          %v3666 = vmul.f32 %v3144, %v3144
          %v3667 = vmul.f32 %v3149, %v3149
          %v3668 = vmul.f32 %v3152, %v3152
          %v3669 = vmul.f32 %v3157, %v3157
          %v3670 = vmul.f32 %v3160, %v3160
          %v3671 = vmul.f32 %v3165, %v3165
          %v3672 = vmul.f32 %v3168, %v3168
          %v3673 = vmul.f32 %v3173, %v3173
          %v3674 = vmul.f32 %v3176, %v3176
          %v3675 = vmul.f32 %v3181, %v3181
          %v3676 = vmul.f32 %v3184, %v3184
          %v3677 = vmul.f32 %v3189, %v3189
          %v3678 = vmul.f32 %v3192, %v3192
          %v3679 = vmul.f32 %v3197, %v3197
          %v3680 = vmul.f32 %v3200, %v3200
          %v3681 = vmul.f32 %v3205, %v3205
          %v3682 = vmul.f32 %v3208, %v3208
          %v3683 = vmul.f32 %v3213, %v3213
          %v3684 = vmul.f32 %v3216, %v3216
          %v3685 = vmul.f32 %v3221, %v3221
          %v3686 = vmul.f32 %v3224, %v3224
          %v3687 = vmul.f32 %v3229, %v3229
          %v3688 = vmul.f32 %v3232, %v3232
          %v3689 = vmul.f32 %v3237, %v3237
          %v3690 = vmul.f32 %v3240, %v3240
          %v3691 = vmul.f32 %v3245, %v3245
          %v3692 = vmul.f32 %v3248, %v3248
          %v3693 = vmul.f32 %v3253, %v3253
          %v3694 = vmul.f32 %v3256, %v3256
          %v3695 = vmul.f32 %v3261, %v3261
          %v3696 = vmul.f32 %v3264, %v3264
          %v3697 = vmul.f32 %v3269, %v3269
          %v3698 = vmul.f32 %v3272, %v3272
          %v3699 = vmul.f32 %v3277, %v3277
          %v3700 = vmul.f32 %v3280, %v3280
          %v3701 = vmul.f32 %v3285, %v3285
          %v3702 = vmul.f32 %v3288, %v3288
          %v3703 = vmul.f32 %v3293, %v3293
          %v3704 = vmul.f32 %v3296, %v3296
          %v3705 = vmul.f32 %v3301, %v3301
          %v3706 = vmul.f32 %v3304, %v3304
          %v3707 = vmul.f32 %v3309, %v3309
          %v3708 = vmul.f32 %v3312, %v3312
          %v3709 = vadd.f32 %v3581, %v3582
          %v3710 = vadd.f32 %v3709, %v3583
          %v3711 = vadd.f32 %v3710, %v3584
          %v3712 = vadd.f32 %v3711, %v3585
          %v3713 = vadd.f32 %v3712, %v3586
          %v3714 = vadd.f32 %v3713, %v3587
          %v3715 = vadd.f32 %v3714, %v3588
          %v3716 = vadd.f32 %v3715, %v3589
          %v3717 = vadd.f32 %v3716, %v3590
          %v3718 = vadd.f32 %v3717, %v3591
          %v3719 = vadd.f32 %v3718, %v3592
          %v3720 = vadd.f32 %v3719, %v3593
          %v3721 = vadd.f32 %v3720, %v3594
          %v3722 = vadd.f32 %v3721, %v3595
          %v3723 = vadd.f32 %v3722, %v3596
          %v3724 = vadd.f32 %v3723, %v3597
          %v3725 = vadd.f32 %v3724, %v3598
          %v3726 = vadd.f32 %v3725, %v3599
          %v3727 = vadd.f32 %v3726, %v3600
          %v3728 = vadd.f32 %v3727, %v3601
          %v3729 = vadd.f32 %v3728, %v3602
          %v3730 = vadd.f32 %v3729, %v3603
          %v3731 = vadd.f32 %v3730, %v3604
          %v3732 = vadd.f32 %v3731, %v3605
          %v3733 = vadd.f32 %v3732, %v3606
          %v3734 = vadd.f32 %v3733, %v3607
          %v3735 = vadd.f32 %v3734, %v3608
          %v3736 = vadd.f32 %v3735, %v3609
          %v3737 = vadd.f32 %v3736, %v3610
          %v3738 = vadd.f32 %v3737, %v3611
          %v3739 = vadd.f32 %v3738, %v3612
          %v3740 = vadd.f32 %v3739, %v3613
          %v3741 = vadd.f32 %v3740, %v3614
          %v3742 = vadd.f32 %v3741, %v3615
          %v3743 = vadd.f32 %v3742, %v3616
          %v3744 = vadd.f32 %v3743, %v3617
          %v3745 = vadd.f32 %v3744, %v3618
          %v3746 = vadd.f32 %v3745, %v3619
          %v3747 = vadd.f32 %v3746, %v3620
          %v3748 = vadd.f32 %v3747, %v3621
          %v3749 = vadd.f32 %v3748, %v3622
          %v3750 = vadd.f32 %v3749, %v3623
          %v3751 = vadd.f32 %v3750, %v3624
          %v3752 = vadd.f32 %v3751, %v3625
          %v3753 = vadd.f32 %v3752, %v3626
          %v3754 = vadd.f32 %v3753, %v3627
          %v3755 = vadd.f32 %v3754, %v3628
          %v3756 = vadd.f32 %v3755, %v3629
          %v3757 = vadd.f32 %v3756, %v3630
          %v3758 = vadd.f32 %v3757, %v3631
          %v3759 = vadd.f32 %v3758, %v3632
          %v3760 = vadd.f32 %v3759, %v3633
          %v3761 = vadd.f32 %v3760, %v3634
          %v3762 = vadd.f32 %v3761, %v3635
          %v3763 = vadd.f32 %v3762, %v3636
          %v3764 = vadd.f32 %v3763, %v3637
          %v3765 = vadd.f32 %v3764, %v3638
          %v3766 = vadd.f32 %v3765, %v3639
          %v3767 = vadd.f32 %v3766, %v3640
          %v3768 = vadd.f32 %v3767, %v3641
          %v3769 = vadd.f32 %v3768, %v3642
          %v3770 = vadd.f32 %v3769, %v3643
          %v3771 = vadd.f32 %v3770, %v3644
          %v3772 = vadd.f32 %v3771, %v3645
          %v3773 = vadd.f32 %v3772, %v3646
          %v3774 = vadd.f32 %v3773, %v3647
          %v3775 = vadd.f32 %v3774, %v3648
          %v3776 = vadd.f32 %v3775, %v3649
          %v3777 = vadd.f32 %v3776, %v3650
          %v3778 = vadd.f32 %v3777, %v3651
          %v3779 = vadd.f32 %v3778, %v3652
          %v3780 = vadd.f32 %v3779, %v3653
          %v3781 = vadd.f32 %v3780, %v3654
          %v3782 = vadd.f32 %v3781, %v3655
          %v3783 = vadd.f32 %v3782, %v3656
          %v3784 = vadd.f32 %v3783, %v3657
          %v3785 = vadd.f32 %v3784, %v3658
          %v3786 = vadd.f32 %v3785, %v3659
          %v3787 = vadd.f32 %v3786, %v3660
          %v3788 = vadd.f32 %v3787, %v3661
          %v3789 = vadd.f32 %v3788, %v3662
          %v3790 = vadd.f32 %v3789, %v3663
          %v3791 = vadd.f32 %v3790, %v3664
          %v3792 = vadd.f32 %v3791, %v3665
          %v3793 = vadd.f32 %v3792, %v3666
          %v3794 = vadd.f32 %v3793, %v3667
          %v3795 = vadd.f32 %v3794, %v3668
          %v3796 = vadd.f32 %v3795, %v3669
          %v3797 = vadd.f32 %v3796, %v3670
          %v3798 = vadd.f32 %v3797, %v3671
          %v3799 = vadd.f32 %v3798, %v3672
          %v3800 = vadd.f32 %v3799, %v3673
          %v3801 = vadd.f32 %v3800, %v3674
          %v3802 = vadd.f32 %v3801, %v3675
          %v3803 = vadd.f32 %v3802, %v3676
          %v3804 = vadd.f32 %v3803, %v3677
          %v3805 = vadd.f32 %v3804, %v3678
          %v3806 = vadd.f32 %v3805, %v3679
          %v3807 = vadd.f32 %v3806, %v3680
          %v3808 = vadd.f32 %v3807, %v3681
          %v3809 = vadd.f32 %v3808, %v3682
          %v3810 = vadd.f32 %v3809, %v3683
          %v3811 = vadd.f32 %v3810, %v3684
          %v3812 = vadd.f32 %v3811, %v3685
          %v3813 = vadd.f32 %v3812, %v3686
          %v3814 = vadd.f32 %v3813, %v3687
          %v3815 = vadd.f32 %v3814, %v3688
          %v3816 = vadd.f32 %v3815, %v3689
          %v3817 = vadd.f32 %v3816, %v3690
          %v3818 = vadd.f32 %v3817, %v3691
          %v3819 = vadd.f32 %v3818, %v3692
          %v3820 = vadd.f32 %v3819, %v3693
          %v3821 = vadd.f32 %v3820, %v3694
          %v3822 = vadd.f32 %v3821, %v3695
          %v3823 = vadd.f32 %v3822, %v3696
          %v3824 = vadd.f32 %v3823, %v3697
          %v3825 = vadd.f32 %v3824, %v3698
          %v3826 = vadd.f32 %v3825, %v3699
          %v3827 = vadd.f32 %v3826, %v3700
          %v3828 = vadd.f32 %v3827, %v3701
          %v3829 = vadd.f32 %v3828, %v3702
          %v3830 = vadd.f32 %v3829, %v3703
          %v3831 = vadd.f32 %v3830, %v3704
          %v3832 = vadd.f32 %v3831, %v3705
          %v3833 = vadd.f32 %v3832, %v3706
          %v3834 = vadd.f32 %v3833, %v3707
          %v3835 = vadd.f32 %v3834, %v3708
          %v3836 = vrot.slane %v3835, 4
          %v3837 = vadd.f32 %v3835, %v3836
          %v3838 = vrot.slane %v3837, 2
          %v3839 = vadd.f32 %v3837, %v3838
          %v3840 = vrot.slane %v3839, 1
          %v3841 = vadd.f32 %v3839, %v3840
          %v3842 = vadd.f32 %v3580, %v3841
          %3843 = vst [vmem:[#allocation7] sm:$0x1] %v3842
          %p3844 = scmp.eq.s32.totalorder %s33, 1
          // Predicated region
          $region93: #{tpu_custom_call.1} parent=87 // pred_check
            %p3845 = pneg %p3844
          $region94: #{tpu_custom_call.1} parent=87 // pred_check_branch
            %3847 = sbr.rel (%p3845) target = $region96
          $region95: #{tpu_custom_call.1} parent=87 // pred_region
            %v3848 = vld [vmem:[#allocation6] sm:$0x1]
            %v3849 = vmul.f32 %v3848, 0.00048828125
            %v3850 = vld [vmem:[#allocation7] sm:$0x1]
            %v3851 = vmul.f32 %v3850, 0.00048828125
            %v3852 = vmul.f32 %v3849, %v3849
            %v3853 = vsub.f32 %v3851, %v3852
            %v3854 = vmax.f32 %v3853, 0.0
            %v3855 = vadd.f32 %v3854, 1e-05
            %v3856 = vrsqrt.pop %v3855
            %v3857 = vld [vmem:[%s5] sm:$0x1]
            %v3858 = vmul.f32 %v3856, %v3857
            %3859 = vst [vmem:[#allocation6] sm:$0x1] %v3858
            %v3860 = vld [vmem:[%s6] sm:$0x1]
            %v3861 = vmul.f32 %v3849, %v3858
            %v3862 = vsub.f32 %v3860, %v3861
            %3863 = vst [vmem:[#allocation7] sm:$0x1] %v3862
          $region96: #{tpu_custom_call.1} parent=87 // pred_fallthru
            _
        $region88: #{tpu_custom_call.1} parent=55 // pred_fallthru
          _
        %p3864 = scmp.eq.s32.totalorder %s32, 2
        // Predicated region
        $region97: #{tpu_custom_call.1} parent=55 // pred_check
          %p3865 = pneg %p3864
        $region98: #{tpu_custom_call.1} parent=55 // pred_check_branch
          %3867 = sbr.rel (%p3865) target = $region100
        $region99: #{tpu_custom_call.1} parent=55 // pred_region
          %s3868 = scalar_lea.vmem [#allocation3], %s424
          %v3869 = vld [vmem:[%s3868] sm:$0xff]
          %v3870 = vld [vmem:[%s3868 + $0x8] sm:$0xff]
          %v3871 = vld [vmem:[%s3868 + $0x10] sm:$0xff]
          %v3872 = vld [vmem:[%s3868 + $0x18] sm:$0xff]
          %v3873 = vld [vmem:[%s3868 + $0x20] sm:$0xff]
          %v3874 = vld [vmem:[%s3868 + $0x28] sm:$0xff]
          %v3875 = vld [vmem:[%s3868 + $0x30] sm:$0xff]
          %v3876 = vld [vmem:[%s3868 + $0x38] sm:$0xff]
          %v3877 = vld [vmem:[%s3868 + $0x40] sm:$0xff]
          %v3878 = vld [vmem:[%s3868 + $0x48] sm:$0xff]
          %v3879 = vld [vmem:[%s3868 + $0x50] sm:$0xff]
          %v3880 = vld [vmem:[%s3868 + $0x58] sm:$0xff]
          %v3881 = vld [vmem:[%s3868 + $0x60] sm:$0xff]
          %v3882 = vld [vmem:[%s3868 + $0x68] sm:$0xff]
          %v3883 = vld [vmem:[%s3868 + $0x70] sm:$0xff]
          %v3884 = vld [vmem:[%s3868 + $0x78] sm:$0xff]
          %v3885 = vld [vmem:[%s3868 + $0x80] sm:$0xff]
          %v3886 = vld [vmem:[%s3868 + $0x88] sm:$0xff]
          %v3887 = vld [vmem:[%s3868 + $0x90] sm:$0xff]
          %v3888 = vld [vmem:[%s3868 + $0x98] sm:$0xff]
          %v3889 = vld [vmem:[%s3868 + $0xa0] sm:$0xff]
          %v3890 = vld [vmem:[%s3868 + $0xa8] sm:$0xff]
          %v3891 = vld [vmem:[%s3868 + $0xb0] sm:$0xff]
          %v3892 = vld [vmem:[%s3868 + $0xb8] sm:$0xff]
          %v3893 = vld [vmem:[%s3868 + $0xc0] sm:$0xff]
          %v3894 = vld [vmem:[%s3868 + $0xc8] sm:$0xff]
          %v3895 = vld [vmem:[%s3868 + $0xd0] sm:$0xff]
          %v3896 = vld [vmem:[%s3868 + $0xd8] sm:$0xff]
          %v3897 = vld [vmem:[%s3868 + $0xe0] sm:$0xff]
          %v3898 = vld [vmem:[%s3868 + $0xe8] sm:$0xff]
          %v3899 = vld [vmem:[%s3868 + $0xf0] sm:$0xff]
          %v3900 = vld [vmem:[%s3868 + $0xf8] sm:$0xff]
          %v3901 = vld [vmem:[%s3868 + $0x100] sm:$0xff]
          %v3902 = vld [vmem:[%s3868 + $0x108] sm:$0xff]
          %v3903 = vld [vmem:[%s3868 + $0x110] sm:$0xff]
          %v3904 = vld [vmem:[%s3868 + $0x118] sm:$0xff]
          %v3905 = vld [vmem:[%s3868 + $0x120] sm:$0xff]
          %v3906 = vld [vmem:[%s3868 + $0x128] sm:$0xff]
          %v3907 = vld [vmem:[%s3868 + $0x130] sm:$0xff]
          %v3908 = vld [vmem:[%s3868 + $0x138] sm:$0xff]
          %v3909 = vld [vmem:[%s3868 + $0x140] sm:$0xff]
          %v3910 = vld [vmem:[%s3868 + $0x148] sm:$0xff]
          %v3911 = vld [vmem:[%s3868 + $0x150] sm:$0xff]
          %v3912 = vld [vmem:[%s3868 + $0x158] sm:$0xff]
          %v3913 = vld [vmem:[%s3868 + $0x160] sm:$0xff]
          %v3914 = vld [vmem:[%s3868 + $0x168] sm:$0xff]
          %v3915 = vld [vmem:[%s3868 + $0x170] sm:$0xff]
          %v3916 = vld [vmem:[%s3868 + $0x178] sm:$0xff]
          %v3917 = vld [vmem:[%s3868 + $0x180] sm:$0xff]
          %v3918 = vld [vmem:[%s3868 + $0x188] sm:$0xff]
          %v3919 = vld [vmem:[%s3868 + $0x190] sm:$0xff]
          %v3920 = vld [vmem:[%s3868 + $0x198] sm:$0xff]
          %v3921 = vld [vmem:[%s3868 + $0x1a0] sm:$0xff]
          %v3922 = vld [vmem:[%s3868 + $0x1a8] sm:$0xff]
          %v3923 = vld [vmem:[%s3868 + $0x1b0] sm:$0xff]
          %v3924 = vld [vmem:[%s3868 + $0x1b8] sm:$0xff]
          %v3925 = vld [vmem:[%s3868 + $0x1c0] sm:$0xff]
          %v3926 = vld [vmem:[%s3868 + $0x1c8] sm:$0xff]
          %v3927 = vld [vmem:[%s3868 + $0x1d0] sm:$0xff]
          %v3928 = vld [vmem:[%s3868 + $0x1d8] sm:$0xff]
          %v3929 = vld [vmem:[%s3868 + $0x1e0] sm:$0xff]
          %v3930 = vld [vmem:[%s3868 + $0x1e8] sm:$0xff]
          %v3931 = vld [vmem:[%s3868 + $0x1f0] sm:$0xff]
          %v3932 = vld [vmem:[%s3868 + $0x1f8] sm:$0xff]
          %v3933 = vld [vmem:[%s3868 + $0x200] sm:$0xff]
          %v3934 = vld [vmem:[%s3868 + $0x208] sm:$0xff]
          %v3935 = vld [vmem:[%s3868 + $0x210] sm:$0xff]
          %v3936 = vld [vmem:[%s3868 + $0x218] sm:$0xff]
          %v3937 = vld [vmem:[%s3868 + $0x220] sm:$0xff]
          %v3938 = vld [vmem:[%s3868 + $0x228] sm:$0xff]
          %v3939 = vld [vmem:[%s3868 + $0x230] sm:$0xff]
          %v3940 = vld [vmem:[%s3868 + $0x238] sm:$0xff]
          %v3941 = vld [vmem:[%s3868 + $0x240] sm:$0xff]
          %v3942 = vld [vmem:[%s3868 + $0x248] sm:$0xff]
          %v3943 = vld [vmem:[%s3868 + $0x250] sm:$0xff]
          %v3944 = vld [vmem:[%s3868 + $0x258] sm:$0xff]
          %v3945 = vld [vmem:[%s3868 + $0x260] sm:$0xff]
          %v3946 = vld [vmem:[%s3868 + $0x268] sm:$0xff]
          %v3947 = vld [vmem:[%s3868 + $0x270] sm:$0xff]
          %v3948 = vld [vmem:[%s3868 + $0x278] sm:$0xff]
          %v3949 = vld [vmem:[%s3868 + $0x280] sm:$0xff]
          %v3950 = vld [vmem:[%s3868 + $0x288] sm:$0xff]
          %v3951 = vld [vmem:[%s3868 + $0x290] sm:$0xff]
          %v3952 = vld [vmem:[%s3868 + $0x298] sm:$0xff]
          %v3953 = vld [vmem:[%s3868 + $0x2a0] sm:$0xff]
          %v3954 = vld [vmem:[%s3868 + $0x2a8] sm:$0xff]
          %v3955 = vld [vmem:[%s3868 + $0x2b0] sm:$0xff]
          %v3956 = vld [vmem:[%s3868 + $0x2b8] sm:$0xff]
          %v3957 = vld [vmem:[%s3868 + $0x2c0] sm:$0xff]
          %v3958 = vld [vmem:[%s3868 + $0x2c8] sm:$0xff]
          %v3959 = vld [vmem:[%s3868 + $0x2d0] sm:$0xff]
          %v3960 = vld [vmem:[%s3868 + $0x2d8] sm:$0xff]
          %v3961 = vld [vmem:[%s3868 + $0x2e0] sm:$0xff]
          %v3962 = vld [vmem:[%s3868 + $0x2e8] sm:$0xff]
          %v3963 = vld [vmem:[%s3868 + $0x2f0] sm:$0xff]
          %v3964 = vld [vmem:[%s3868 + $0x2f8] sm:$0xff]
          %v3965 = vld [vmem:[%s3868 + $0x300] sm:$0xff]
          %v3966 = vld [vmem:[%s3868 + $0x308] sm:$0xff]
          %v3967 = vld [vmem:[%s3868 + $0x310] sm:$0xff]
          %v3968 = vld [vmem:[%s3868 + $0x318] sm:$0xff]
          %v3969 = vld [vmem:[%s3868 + $0x320] sm:$0xff]
          %v3970 = vld [vmem:[%s3868 + $0x328] sm:$0xff]
          %v3971 = vld [vmem:[%s3868 + $0x330] sm:$0xff]
          %v3972 = vld [vmem:[%s3868 + $0x338] sm:$0xff]
          %v3973 = vld [vmem:[%s3868 + $0x340] sm:$0xff]
          %v3974 = vld [vmem:[%s3868 + $0x348] sm:$0xff]
          %v3975 = vld [vmem:[%s3868 + $0x350] sm:$0xff]
          %v3976 = vld [vmem:[%s3868 + $0x358] sm:$0xff]
          %v3977 = vld [vmem:[%s3868 + $0x360] sm:$0xff]
          %v3978 = vld [vmem:[%s3868 + $0x368] sm:$0xff]
          %v3979 = vld [vmem:[%s3868 + $0x370] sm:$0xff]
          %v3980 = vld [vmem:[%s3868 + $0x378] sm:$0xff]
          %v3981 = vld [vmem:[%s3868 + $0x380] sm:$0xff]
          %v3982 = vld [vmem:[%s3868 + $0x388] sm:$0xff]
          %v3983 = vld [vmem:[%s3868 + $0x390] sm:$0xff]
          %v3984 = vld [vmem:[%s3868 + $0x398] sm:$0xff]
          %v3985 = vld [vmem:[%s3868 + $0x3a0] sm:$0xff]
          %v3986 = vld [vmem:[%s3868 + $0x3a8] sm:$0xff]
          %v3987 = vld [vmem:[%s3868 + $0x3b0] sm:$0xff]
          %v3988 = vld [vmem:[%s3868 + $0x3b8] sm:$0xff]
          %v3989 = vld [vmem:[%s3868 + $0x3c0] sm:$0xff]
          %v3990 = vld [vmem:[%s3868 + $0x3c8] sm:$0xff]
          %v3991 = vld [vmem:[%s3868 + $0x3d0] sm:$0xff]
          %v3992 = vld [vmem:[%s3868 + $0x3d8] sm:$0xff]
          %v3993 = vld [vmem:[%s3868 + $0x3e0] sm:$0xff]
          %v3994 = vld [vmem:[%s3868 + $0x3e8] sm:$0xff]
          %v3995 = vld [vmem:[%s3868 + $0x3f0] sm:$0xff]
          %v3996 = vld [vmem:[%s3868 + $0x3f8] sm:$0xff]
          %v3997 = vld [vmem:[#allocation6] sm:$0x1]
          %v3999 = vlaneseq
          %v4000 = vshrl.u32 %v3999, 7
          %v4001 = vsub.s32 0, %v4000
          %v4002 = vrot.slane %v3997, %v4001
          %v4004 = vmul.f32 %v3869, %v4002
          %v4005 = vmul.f32 %v3870, %v4002
          %v4006 = vmul.f32 %v3871, %v4002
          %v4007 = vmul.f32 %v3872, %v4002
          %v4008 = vmul.f32 %v3873, %v4002
          %v4009 = vmul.f32 %v3874, %v4002
          %v4010 = vmul.f32 %v3875, %v4002
          %v4011 = vmul.f32 %v3876, %v4002
          %v4012 = vmul.f32 %v3877, %v4002
          %v4013 = vmul.f32 %v3878, %v4002
          %v4014 = vmul.f32 %v3879, %v4002
          %v4015 = vmul.f32 %v3880, %v4002
          %v4016 = vmul.f32 %v3881, %v4002
          %v4017 = vmul.f32 %v3882, %v4002
          %v4018 = vmul.f32 %v3883, %v4002
          %v4019 = vmul.f32 %v3884, %v4002
          %v4020 = vmul.f32 %v3885, %v4002
          %v4021 = vmul.f32 %v3886, %v4002
          %v4022 = vmul.f32 %v3887, %v4002
          %v4023 = vmul.f32 %v3888, %v4002
          %v4024 = vmul.f32 %v3889, %v4002
          %v4025 = vmul.f32 %v3890, %v4002
          %v4026 = vmul.f32 %v3891, %v4002
          %v4027 = vmul.f32 %v3892, %v4002
          %v4028 = vmul.f32 %v3893, %v4002
          %v4029 = vmul.f32 %v3894, %v4002
          %v4030 = vmul.f32 %v3895, %v4002
          %v4031 = vmul.f32 %v3896, %v4002
          %v4032 = vmul.f32 %v3897, %v4002
          %v4033 = vmul.f32 %v3898, %v4002
          %v4034 = vmul.f32 %v3899, %v4002
          %v4035 = vmul.f32 %v3900, %v4002
          %v4036 = vmul.f32 %v3901, %v4002
          %v4037 = vmul.f32 %v3902, %v4002
          %v4038 = vmul.f32 %v3903, %v4002
          %v4039 = vmul.f32 %v3904, %v4002
          %v4040 = vmul.f32 %v3905, %v4002
          %v4041 = vmul.f32 %v3906, %v4002
          %v4042 = vmul.f32 %v3907, %v4002
          %v4043 = vmul.f32 %v3908, %v4002
          %v4044 = vmul.f32 %v3909, %v4002
          %v4045 = vmul.f32 %v3910, %v4002
          %v4046 = vmul.f32 %v3911, %v4002
          %v4047 = vmul.f32 %v3912, %v4002
          %v4048 = vmul.f32 %v3913, %v4002
          %v4049 = vmul.f32 %v3914, %v4002
          %v4050 = vmul.f32 %v3915, %v4002
          %v4051 = vmul.f32 %v3916, %v4002
          %v4052 = vmul.f32 %v3917, %v4002
          %v4053 = vmul.f32 %v3918, %v4002
          %v4054 = vmul.f32 %v3919, %v4002
          %v4055 = vmul.f32 %v3920, %v4002
          %v4056 = vmul.f32 %v3921, %v4002
          %v4057 = vmul.f32 %v3922, %v4002
          %v4058 = vmul.f32 %v3923, %v4002
          %v4059 = vmul.f32 %v3924, %v4002
          %v4060 = vmul.f32 %v3925, %v4002
          %v4061 = vmul.f32 %v3926, %v4002
          %v4062 = vmul.f32 %v3927, %v4002
          %v4063 = vmul.f32 %v3928, %v4002
          %v4064 = vmul.f32 %v3929, %v4002
          %v4065 = vmul.f32 %v3930, %v4002
          %v4066 = vmul.f32 %v3931, %v4002
          %v4067 = vmul.f32 %v3932, %v4002
          %v4068 = vmul.f32 %v3933, %v4002
          %v4069 = vmul.f32 %v3934, %v4002
          %v4070 = vmul.f32 %v3935, %v4002
          %v4071 = vmul.f32 %v3936, %v4002
          %v4072 = vmul.f32 %v3937, %v4002
          %v4073 = vmul.f32 %v3938, %v4002
          %v4074 = vmul.f32 %v3939, %v4002
          %v4075 = vmul.f32 %v3940, %v4002
          %v4076 = vmul.f32 %v3941, %v4002
          %v4077 = vmul.f32 %v3942, %v4002
          %v4078 = vmul.f32 %v3943, %v4002
          %v4079 = vmul.f32 %v3944, %v4002
          %v4080 = vmul.f32 %v3945, %v4002
          %v4081 = vmul.f32 %v3946, %v4002
          %v4082 = vmul.f32 %v3947, %v4002
          %v4083 = vmul.f32 %v3948, %v4002
          %v4084 = vmul.f32 %v3949, %v4002
          %v4085 = vmul.f32 %v3950, %v4002
          %v4086 = vmul.f32 %v3951, %v4002
          %v4087 = vmul.f32 %v3952, %v4002
          %v4088 = vmul.f32 %v3953, %v4002
          %v4089 = vmul.f32 %v3954, %v4002
          %v4090 = vmul.f32 %v3955, %v4002
          %v4091 = vmul.f32 %v3956, %v4002
          %v4092 = vmul.f32 %v3957, %v4002
          %v4093 = vmul.f32 %v3958, %v4002
          %v4094 = vmul.f32 %v3959, %v4002
          %v4095 = vmul.f32 %v3960, %v4002
          %v4096 = vmul.f32 %v3961, %v4002
          %v4097 = vmul.f32 %v3962, %v4002
          %v4098 = vmul.f32 %v3963, %v4002
          %v4099 = vmul.f32 %v3964, %v4002
          %v4100 = vmul.f32 %v3965, %v4002
          %v4101 = vmul.f32 %v3966, %v4002
          %v4102 = vmul.f32 %v3967, %v4002
          %v4103 = vmul.f32 %v3968, %v4002
          %v4104 = vmul.f32 %v3969, %v4002
          %v4105 = vmul.f32 %v3970, %v4002
          %v4106 = vmul.f32 %v3971, %v4002
          %v4107 = vmul.f32 %v3972, %v4002
          %v4108 = vmul.f32 %v3973, %v4002
          %v4109 = vmul.f32 %v3974, %v4002
          %v4110 = vmul.f32 %v3975, %v4002
          %v4111 = vmul.f32 %v3976, %v4002
          %v4112 = vmul.f32 %v3977, %v4002
          %v4113 = vmul.f32 %v3978, %v4002
          %v4114 = vmul.f32 %v3979, %v4002
          %v4115 = vmul.f32 %v3980, %v4002
          %v4116 = vmul.f32 %v3981, %v4002
          %v4117 = vmul.f32 %v3982, %v4002
          %v4118 = vmul.f32 %v3983, %v4002
          %v4119 = vmul.f32 %v3984, %v4002
          %v4120 = vmul.f32 %v3985, %v4002
          %v4121 = vmul.f32 %v3986, %v4002
          %v4122 = vmul.f32 %v3987, %v4002
          %v4123 = vmul.f32 %v3988, %v4002
          %v4124 = vmul.f32 %v3989, %v4002
          %v4125 = vmul.f32 %v3990, %v4002
          %v4126 = vmul.f32 %v3991, %v4002
          %v4127 = vmul.f32 %v3992, %v4002
          %v4128 = vmul.f32 %v3993, %v4002
          %v4129 = vmul.f32 %v3994, %v4002
          %v4130 = vmul.f32 %v3995, %v4002
          %v4131 = vmul.f32 %v3996, %v4002
          %v4132 = vld [vmem:[#allocation7] sm:$0x1]
          %v4134 = vlaneseq
          %v4135 = vshrl.u32 %v4134, 7
          %v4136 = vsub.s32 0, %v4135
          %v4137 = vrot.slane %v4132, %v4136
          %v4139 = vadd.f32 %v4004, %v4137
          %v4140 = vadd.f32 %v4005, %v4137
          %v4141 = vadd.f32 %v4006, %v4137
          %v4142 = vadd.f32 %v4007, %v4137
          %v4143 = vadd.f32 %v4008, %v4137
          %v4144 = vadd.f32 %v4009, %v4137
          %v4145 = vadd.f32 %v4010, %v4137
          %v4146 = vadd.f32 %v4011, %v4137
          %v4147 = vadd.f32 %v4012, %v4137
          %v4148 = vadd.f32 %v4013, %v4137
          %v4149 = vadd.f32 %v4014, %v4137
          %v4150 = vadd.f32 %v4015, %v4137
          %v4151 = vadd.f32 %v4016, %v4137
          %v4152 = vadd.f32 %v4017, %v4137
          %v4153 = vadd.f32 %v4018, %v4137
          %v4154 = vadd.f32 %v4019, %v4137
          %v4155 = vadd.f32 %v4020, %v4137
          %v4156 = vadd.f32 %v4021, %v4137
          %v4157 = vadd.f32 %v4022, %v4137
          %v4158 = vadd.f32 %v4023, %v4137
          %v4159 = vadd.f32 %v4024, %v4137
          %v4160 = vadd.f32 %v4025, %v4137
          %v4161 = vadd.f32 %v4026, %v4137
          %v4162 = vadd.f32 %v4027, %v4137
          %v4163 = vadd.f32 %v4028, %v4137
          %v4164 = vadd.f32 %v4029, %v4137
          %v4165 = vadd.f32 %v4030, %v4137
          %v4166 = vadd.f32 %v4031, %v4137
          %v4167 = vadd.f32 %v4032, %v4137
          %v4168 = vadd.f32 %v4033, %v4137
          %v4169 = vadd.f32 %v4034, %v4137
          %v4170 = vadd.f32 %v4035, %v4137
          %v4171 = vadd.f32 %v4036, %v4137
          %v4172 = vadd.f32 %v4037, %v4137
          %v4173 = vadd.f32 %v4038, %v4137
          %v4174 = vadd.f32 %v4039, %v4137
          %v4175 = vadd.f32 %v4040, %v4137
          %v4176 = vadd.f32 %v4041, %v4137
          %v4177 = vadd.f32 %v4042, %v4137
          %v4178 = vadd.f32 %v4043, %v4137
          %v4179 = vadd.f32 %v4044, %v4137
          %v4180 = vadd.f32 %v4045, %v4137
          %v4181 = vadd.f32 %v4046, %v4137
          %v4182 = vadd.f32 %v4047, %v4137
          %v4183 = vadd.f32 %v4048, %v4137
          %v4184 = vadd.f32 %v4049, %v4137
          %v4185 = vadd.f32 %v4050, %v4137
          %v4186 = vadd.f32 %v4051, %v4137
          %v4187 = vadd.f32 %v4052, %v4137
          %v4188 = vadd.f32 %v4053, %v4137
          %v4189 = vadd.f32 %v4054, %v4137
          %v4190 = vadd.f32 %v4055, %v4137
          %v4191 = vadd.f32 %v4056, %v4137
          %v4192 = vadd.f32 %v4057, %v4137
          %v4193 = vadd.f32 %v4058, %v4137
          %v4194 = vadd.f32 %v4059, %v4137
          %v4195 = vadd.f32 %v4060, %v4137
          %v4196 = vadd.f32 %v4061, %v4137
          %v4197 = vadd.f32 %v4062, %v4137
          %v4198 = vadd.f32 %v4063, %v4137
          %v4199 = vadd.f32 %v4064, %v4137
          %v4200 = vadd.f32 %v4065, %v4137
          %v4201 = vadd.f32 %v4066, %v4137
          %v4202 = vadd.f32 %v4067, %v4137
          %v4203 = vadd.f32 %v4068, %v4137
          %v4204 = vadd.f32 %v4069, %v4137
          %v4205 = vadd.f32 %v4070, %v4137
          %v4206 = vadd.f32 %v4071, %v4137
          %v4207 = vadd.f32 %v4072, %v4137
          %v4208 = vadd.f32 %v4073, %v4137
          %v4209 = vadd.f32 %v4074, %v4137
          %v4210 = vadd.f32 %v4075, %v4137
          %v4211 = vadd.f32 %v4076, %v4137
          %v4212 = vadd.f32 %v4077, %v4137
          %v4213 = vadd.f32 %v4078, %v4137
          %v4214 = vadd.f32 %v4079, %v4137
          %v4215 = vadd.f32 %v4080, %v4137
          %v4216 = vadd.f32 %v4081, %v4137
          %v4217 = vadd.f32 %v4082, %v4137
          %v4218 = vadd.f32 %v4083, %v4137
          %v4219 = vadd.f32 %v4084, %v4137
          %v4220 = vadd.f32 %v4085, %v4137
          %v4221 = vadd.f32 %v4086, %v4137
          %v4222 = vadd.f32 %v4087, %v4137
          %v4223 = vadd.f32 %v4088, %v4137
          %v4224 = vadd.f32 %v4089, %v4137
          %v4225 = vadd.f32 %v4090, %v4137
          %v4226 = vadd.f32 %v4091, %v4137
          %v4227 = vadd.f32 %v4092, %v4137
          %v4228 = vadd.f32 %v4093, %v4137
          %v4229 = vadd.f32 %v4094, %v4137
          %v4230 = vadd.f32 %v4095, %v4137
          %v4231 = vadd.f32 %v4096, %v4137
          %v4232 = vadd.f32 %v4097, %v4137
          %v4233 = vadd.f32 %v4098, %v4137
          %v4234 = vadd.f32 %v4099, %v4137
          %v4235 = vadd.f32 %v4100, %v4137
          %v4236 = vadd.f32 %v4101, %v4137
          %v4237 = vadd.f32 %v4102, %v4137
          %v4238 = vadd.f32 %v4103, %v4137
          %v4239 = vadd.f32 %v4104, %v4137
          %v4240 = vadd.f32 %v4105, %v4137
          %v4241 = vadd.f32 %v4106, %v4137
          %v4242 = vadd.f32 %v4107, %v4137
          %v4243 = vadd.f32 %v4108, %v4137
          %v4244 = vadd.f32 %v4109, %v4137
          %v4245 = vadd.f32 %v4110, %v4137
          %v4246 = vadd.f32 %v4111, %v4137
          %v4247 = vadd.f32 %v4112, %v4137
          %v4248 = vadd.f32 %v4113, %v4137
          %v4249 = vadd.f32 %v4114, %v4137
          %v4250 = vadd.f32 %v4115, %v4137
          %v4251 = vadd.f32 %v4116, %v4137
          %v4252 = vadd.f32 %v4117, %v4137
          %v4253 = vadd.f32 %v4118, %v4137
          %v4254 = vadd.f32 %v4119, %v4137
          %v4255 = vadd.f32 %v4120, %v4137
          %v4256 = vadd.f32 %v4121, %v4137
          %v4257 = vadd.f32 %v4122, %v4137
          %v4258 = vadd.f32 %v4123, %v4137
          %v4259 = vadd.f32 %v4124, %v4137
          %v4260 = vadd.f32 %v4125, %v4137
          %v4261 = vadd.f32 %v4126, %v4137
          %v4262 = vadd.f32 %v4127, %v4137
          %v4263 = vadd.f32 %v4128, %v4137
          %v4264 = vadd.f32 %v4129, %v4137
          %v4265 = vadd.f32 %v4130, %v4137
          %v4266 = vadd.f32 %v4131, %v4137
          %v4267 = vmax.f32 %v4139, 0.0
          %v4268 = vmax.f32 %v4140, 0.0
          %v4269 = vmax.f32 %v4141, 0.0
          %v4270 = vmax.f32 %v4142, 0.0
          %v4271 = vmax.f32 %v4143, 0.0
          %v4272 = vmax.f32 %v4144, 0.0
          %v4273 = vmax.f32 %v4145, 0.0
          %v4274 = vmax.f32 %v4146, 0.0
          %v4275 = vmax.f32 %v4147, 0.0
          %v4276 = vmax.f32 %v4148, 0.0
          %v4277 = vmax.f32 %v4149, 0.0
          %v4278 = vmax.f32 %v4150, 0.0
          %v4279 = vmax.f32 %v4151, 0.0
          %v4280 = vmax.f32 %v4152, 0.0
          %v4281 = vmax.f32 %v4153, 0.0
          %v4282 = vmax.f32 %v4154, 0.0
          %v4283 = vmax.f32 %v4155, 0.0
          %v4284 = vmax.f32 %v4156, 0.0
          %v4285 = vmax.f32 %v4157, 0.0
          %v4286 = vmax.f32 %v4158, 0.0
          %v4287 = vmax.f32 %v4159, 0.0
          %v4288 = vmax.f32 %v4160, 0.0
          %v4289 = vmax.f32 %v4161, 0.0
          %v4290 = vmax.f32 %v4162, 0.0
          %v4291 = vmax.f32 %v4163, 0.0
          %v4292 = vmax.f32 %v4164, 0.0
          %v4293 = vmax.f32 %v4165, 0.0
          %v4294 = vmax.f32 %v4166, 0.0
          %v4295 = vmax.f32 %v4167, 0.0
          %v4296 = vmax.f32 %v4168, 0.0
          %v4297 = vmax.f32 %v4169, 0.0
          %v4298 = vmax.f32 %v4170, 0.0
          %v4299 = vmax.f32 %v4171, 0.0
          %v4300 = vmax.f32 %v4172, 0.0
          %v4301 = vmax.f32 %v4173, 0.0
          %v4302 = vmax.f32 %v4174, 0.0
          %v4303 = vmax.f32 %v4175, 0.0
          %v4304 = vmax.f32 %v4176, 0.0
          %v4305 = vmax.f32 %v4177, 0.0
          %v4306 = vmax.f32 %v4178, 0.0
          %v4307 = vmax.f32 %v4179, 0.0
          %v4308 = vmax.f32 %v4180, 0.0
          %v4309 = vmax.f32 %v4181, 0.0
          %v4310 = vmax.f32 %v4182, 0.0
          %v4311 = vmax.f32 %v4183, 0.0
          %v4312 = vmax.f32 %v4184, 0.0
          %v4313 = vmax.f32 %v4185, 0.0
          %v4314 = vmax.f32 %v4186, 0.0
          %v4315 = vmax.f32 %v4187, 0.0
          %v4316 = vmax.f32 %v4188, 0.0
          %v4317 = vmax.f32 %v4189, 0.0
          %v4318 = vmax.f32 %v4190, 0.0
          %v4319 = vmax.f32 %v4191, 0.0
          %v4320 = vmax.f32 %v4192, 0.0
          %v4321 = vmax.f32 %v4193, 0.0
          %v4322 = vmax.f32 %v4194, 0.0
          %v4323 = vmax.f32 %v4195, 0.0
          %v4324 = vmax.f32 %v4196, 0.0
          %v4325 = vmax.f32 %v4197, 0.0
          %v4326 = vmax.f32 %v4198, 0.0
          %v4327 = vmax.f32 %v4199, 0.0
          %v4328 = vmax.f32 %v4200, 0.0
          %v4329 = vmax.f32 %v4201, 0.0
          %v4330 = vmax.f32 %v4202, 0.0
          %v4331 = vmax.f32 %v4203, 0.0
          %v4332 = vmax.f32 %v4204, 0.0
          %v4333 = vmax.f32 %v4205, 0.0
          %v4334 = vmax.f32 %v4206, 0.0
          %v4335 = vmax.f32 %v4207, 0.0
          %v4336 = vmax.f32 %v4208, 0.0
          %v4337 = vmax.f32 %v4209, 0.0
          %v4338 = vmax.f32 %v4210, 0.0
          %v4339 = vmax.f32 %v4211, 0.0
          %v4340 = vmax.f32 %v4212, 0.0
          %v4341 = vmax.f32 %v4213, 0.0
          %v4342 = vmax.f32 %v4214, 0.0
          %v4343 = vmax.f32 %v4215, 0.0
          %v4344 = vmax.f32 %v4216, 0.0
          %v4345 = vmax.f32 %v4217, 0.0
          %v4346 = vmax.f32 %v4218, 0.0
          %v4347 = vmax.f32 %v4219, 0.0
          %v4348 = vmax.f32 %v4220, 0.0
          %v4349 = vmax.f32 %v4221, 0.0
          %v4350 = vmax.f32 %v4222, 0.0
          %v4351 = vmax.f32 %v4223, 0.0
          %v4352 = vmax.f32 %v4224, 0.0
          %v4353 = vmax.f32 %v4225, 0.0
          %v4354 = vmax.f32 %v4226, 0.0
          %v4355 = vmax.f32 %v4227, 0.0
          %v4356 = vmax.f32 %v4228, 0.0
          %v4357 = vmax.f32 %v4229, 0.0
          %v4358 = vmax.f32 %v4230, 0.0
          %v4359 = vmax.f32 %v4231, 0.0
          %v4360 = vmax.f32 %v4232, 0.0
          %v4361 = vmax.f32 %v4233, 0.0
          %v4362 = vmax.f32 %v4234, 0.0
          %v4363 = vmax.f32 %v4235, 0.0
          %v4364 = vmax.f32 %v4236, 0.0
          %v4365 = vmax.f32 %v4237, 0.0
          %v4366 = vmax.f32 %v4238, 0.0
          %v4367 = vmax.f32 %v4239, 0.0
          %v4368 = vmax.f32 %v4240, 0.0
          %v4369 = vmax.f32 %v4241, 0.0
          %v4370 = vmax.f32 %v4242, 0.0
          %v4371 = vmax.f32 %v4243, 0.0
          %v4372 = vmax.f32 %v4244, 0.0
          %v4373 = vmax.f32 %v4245, 0.0
          %v4374 = vmax.f32 %v4246, 0.0
          %v4375 = vmax.f32 %v4247, 0.0
          %v4376 = vmax.f32 %v4248, 0.0
          %v4377 = vmax.f32 %v4249, 0.0
          %v4378 = vmax.f32 %v4250, 0.0
          %v4379 = vmax.f32 %v4251, 0.0
          %v4380 = vmax.f32 %v4252, 0.0
          %v4381 = vmax.f32 %v4253, 0.0
          %v4382 = vmax.f32 %v4254, 0.0
          %v4383 = vmax.f32 %v4255, 0.0
          %v4384 = vmax.f32 %v4256, 0.0
          %v4385 = vmax.f32 %v4257, 0.0
          %v4386 = vmax.f32 %v4258, 0.0
          %v4387 = vmax.f32 %v4259, 0.0
          %v4388 = vmax.f32 %v4260, 0.0
          %v4389 = vmax.f32 %v4261, 0.0
          %v4390 = vmax.f32 %v4262, 0.0
          %v4391 = vmax.f32 %v4263, 0.0
          %v4392 = vmax.f32 %v4264, 0.0
          %v4393 = vmax.f32 %v4265, 0.0
          %v4394 = vmax.f32 %v4266, 0.0
          %v4395 = vpack.c.bf16 %v4268, %v4267
          %v4396 = vpack.c.bf16 %v4270, %v4269
          %v4397 = vpack.c.bf16 %v4272, %v4271
          %v4398 = vpack.c.bf16 %v4274, %v4273
          %v4399 = vpack.c.bf16 %v4276, %v4275
          %v4400 = vpack.c.bf16 %v4278, %v4277
          %v4401 = vpack.c.bf16 %v4280, %v4279
          %v4402 = vpack.c.bf16 %v4282, %v4281
          %v4403 = vpack.c.bf16 %v4284, %v4283
          %v4404 = vpack.c.bf16 %v4286, %v4285
          %v4405 = vpack.c.bf16 %v4288, %v4287
          %v4406 = vpack.c.bf16 %v4290, %v4289
          %v4407 = vpack.c.bf16 %v4292, %v4291
          %v4408 = vpack.c.bf16 %v4294, %v4293
          %v4409 = vpack.c.bf16 %v4296, %v4295
          %v4410 = vpack.c.bf16 %v4298, %v4297
          %v4411 = vpack.c.bf16 %v4300, %v4299
          %v4412 = vpack.c.bf16 %v4302, %v4301
          %v4413 = vpack.c.bf16 %v4304, %v4303
          %v4414 = vpack.c.bf16 %v4306, %v4305
          %v4415 = vpack.c.bf16 %v4308, %v4307
          %v4416 = vpack.c.bf16 %v4310, %v4309
          %v4417 = vpack.c.bf16 %v4312, %v4311
          %v4418 = vpack.c.bf16 %v4314, %v4313
          %v4419 = vpack.c.bf16 %v4316, %v4315
          %v4420 = vpack.c.bf16 %v4318, %v4317
          %v4421 = vpack.c.bf16 %v4320, %v4319
          %v4422 = vpack.c.bf16 %v4322, %v4321
          %v4423 = vpack.c.bf16 %v4324, %v4323
          %v4424 = vpack.c.bf16 %v4326, %v4325
          %v4425 = vpack.c.bf16 %v4328, %v4327
          %v4426 = vpack.c.bf16 %v4330, %v4329
          %v4427 = vpack.c.bf16 %v4332, %v4331
          %v4428 = vpack.c.bf16 %v4334, %v4333
          %v4429 = vpack.c.bf16 %v4336, %v4335
          %v4430 = vpack.c.bf16 %v4338, %v4337
          %v4431 = vpack.c.bf16 %v4340, %v4339
          %v4432 = vpack.c.bf16 %v4342, %v4341
          %v4433 = vpack.c.bf16 %v4344, %v4343
          %v4434 = vpack.c.bf16 %v4346, %v4345
          %v4435 = vpack.c.bf16 %v4348, %v4347
          %v4436 = vpack.c.bf16 %v4350, %v4349
          %v4437 = vpack.c.bf16 %v4352, %v4351
          %v4438 = vpack.c.bf16 %v4354, %v4353
          %v4439 = vpack.c.bf16 %v4356, %v4355
          %v4440 = vpack.c.bf16 %v4358, %v4357
          %v4441 = vpack.c.bf16 %v4360, %v4359
          %v4442 = vpack.c.bf16 %v4362, %v4361
          %v4443 = vpack.c.bf16 %v4364, %v4363
          %v4444 = vpack.c.bf16 %v4366, %v4365
          %v4445 = vpack.c.bf16 %v4368, %v4367
          %v4446 = vpack.c.bf16 %v4370, %v4369
          %v4447 = vpack.c.bf16 %v4372, %v4371
          %v4448 = vpack.c.bf16 %v4374, %v4373
          %v4449 = vpack.c.bf16 %v4376, %v4375
          %v4450 = vpack.c.bf16 %v4378, %v4377
          %v4451 = vpack.c.bf16 %v4380, %v4379
          %v4452 = vpack.c.bf16 %v4382, %v4381
          %v4453 = vpack.c.bf16 %v4384, %v4383
          %v4454 = vpack.c.bf16 %v4386, %v4385
          %v4455 = vpack.c.bf16 %v4388, %v4387
          %v4456 = vpack.c.bf16 %v4390, %v4389
          %v4457 = vpack.c.bf16 %v4392, %v4391
          %v4458 = vpack.c.bf16 %v4394, %v4393
          %v4459 = vld [vmem:[#allocation14] sm:$0xf]
          %v4460 = vld [vmem:[#allocation14 + $0x4] sm:$0xf]
          %v4461 = vld [vmem:[#allocation14 + $0x8] sm:$0xf]
          %v4462 = vld [vmem:[#allocation14 + $0xc] sm:$0xf]
          %v4463 = vld [vmem:[#allocation14 + $0x10] sm:$0xf]
          %v4464 = vld [vmem:[#allocation14 + $0x14] sm:$0xf]
          %v4465 = vld [vmem:[#allocation14 + $0x18] sm:$0xf]
          %v4466 = vld [vmem:[#allocation14 + $0x1c] sm:$0xf]
          %v4467 = vld [vmem:[#allocation14 + $0x20] sm:$0xf]
          %v4468 = vld [vmem:[#allocation14 + $0x24] sm:$0xf]
          %v4469 = vld [vmem:[#allocation14 + $0x28] sm:$0xf]
          %v4470 = vld [vmem:[#allocation14 + $0x2c] sm:$0xf]
          %v4471 = vld [vmem:[#allocation14 + $0x30] sm:$0xf]
          %v4472 = vld [vmem:[#allocation14 + $0x34] sm:$0xf]
          %v4473 = vld [vmem:[#allocation14 + $0x38] sm:$0xf]
          %v4474 = vld [vmem:[#allocation14 + $0x3c] sm:$0xf]
          %v4475 = vld [vmem:[%s8] sm:$0x1]
          %v4477 = vlaneseq
          %v4478 = vshrl.u32 %v4477, 7
          %v4479 = vsub.s32 0, %v4478
          %v4480 = vrot.slane %v4475, %v4479
          %v4498 = vunpack.c.l.b16 %v4459
          %v4499 = vunpack.c.l.b16 %v4460
          %v4500 = vunpack.c.l.b16 %v4461
          %v4501 = vunpack.c.l.b16 %v4462
          %v4502 = vunpack.c.l.b16 %v4463
          %v4503 = vunpack.c.l.b16 %v4464
          %v4504 = vunpack.c.l.b16 %v4465
          %v4505 = vunpack.c.l.b16 %v4466
          %v4506 = vunpack.c.l.b16 %v4467
          %v4507 = vunpack.c.l.b16 %v4468
          %v4508 = vunpack.c.l.b16 %v4469
          %v4509 = vunpack.c.l.b16 %v4470
          %v4510 = vunpack.c.l.b16 %v4471
          %v4511 = vunpack.c.l.b16 %v4472
          %v4512 = vunpack.c.l.b16 %v4473
          %v4513 = vunpack.c.l.b16 %v4474
          %v4514 = vpack.c.b16 %v4499, %v4498
          %v4515 = vpack.c.b16 %v4501, %v4500
          %v4516 = vpack.c.b16 %v4503, %v4502
          %v4517 = vpack.c.b16 %v4505, %v4504
          %v4518 = vpack.c.b16 %v4507, %v4506
          %v4519 = vpack.c.b16 %v4509, %v4508
          %v4520 = vpack.c.b16 %v4511, %v4510
          %v4521 = vpack.c.b16 %v4513, %v4512
          %4530 = vmatprep.subr.bf16.mxu0 0
          %4531 = vmatpush1.bf16.msra.mxu0 %v4521
          %4532 = vmatprep.subr.bf16.mxu0 0
          %4533 = vmatpush1.bf16.msra.mxu0 %v4520
          %4534 = vmatprep.subr.bf16.mxu0 0
          %4535 = vmatpush1.bf16.msra.mxu0 %v4519
          %4536 = vmatprep.subr.bf16.mxu0 0
          %4537 = vmatpush1.bf16.msra.mxu0 %v4518
          %4538 = vmatprep.subr.bf16.mxu0 0
          %4539 = vmatpush1.bf16.msra.mxu0 %v4517
          %4540 = vmatprep.subr.bf16.mxu0 0
          %4541 = vmatpush1.bf16.msra.mxu0 %v4516
          %4542 = vmatprep.subr.bf16.mxu0 0
          %4543 = vmatpush1.bf16.msra.mxu0 %v4515
          %4544 = vmatprep.subr.bf16.mxu0 0
          %4545 = vmatpush1.bf16.msra.mxu0 %v4514
          %4546 = vmatprep.subr.bf16.mxu0 0
          %4547 = vmatpush2.bf16.msra.mxu0 0
          %4548 = vmatprep.subr.bf16.mxu0 0
          %4549 = vmatpush2.bf16.msra.mxu0 0
          %4550 = vmatprep.subr.bf16.mxu0 0
          %4551 = vmatpush2.bf16.msra.mxu0 0
          %4552 = vmatprep.subr.bf16.mxu0 0
          %4553 = vmatpush2.bf16.msra.mxu0 0
          %4554 = vmatprep.subr.bf16.mxu0 0
          %4555 = vmatpush2.bf16.msra.mxu0 0
          %4556 = vmatprep.subr.bf16.mxu0 0
          %4557 = vmatpush2.bf16.msra.mxu0 0
          %4558 = vmatprep.subr.bf16.mxu0 0
          %4559 = vmatpush2.bf16.msra.mxu0 0
          %4560 = vmatprep.subr.bf16.mxu0 0
          %4561 = vmatpush2.bf16.msra.mxu0 0
          %4562 = vmatprep.mubr.bf16.mxu0 0
          %4563 = vmatmul.mubr.bf16.gmra.mxu0 %v4395
          %v4564 = vpop.f32.mrf.mxu0
          %v4565 = vadd.f32 %v4480, %v4564
          %v4566 = vpop.f32.mrf.mxu0
          %v4567 = vpop.f32.mrf.mxu0
          %v4568 = vadd.f32 %v4480, %v4567
          %v4569 = vpop.f32.mrf.mxu0
          %4570 = vmatprep.mubr.bf16.mxu0 0
          %4571 = vmatmul.mubr.bf16.gmra.mxu0 %v4396
          %v4572 = vpop.f32.mrf.mxu0
          %v4573 = vadd.f32 %v4480, %v4572
          %v4574 = vpop.f32.mrf.mxu0
          %v4575 = vpop.f32.mrf.mxu0
          %v4576 = vadd.f32 %v4480, %v4575
          %v4577 = vpop.f32.mrf.mxu0
          %4578 = vmatprep.mubr.bf16.mxu0 0
          %4579 = vmatmul.mubr.bf16.gmra.mxu0 %v4397
          %v4580 = vpop.f32.mrf.mxu0
          %v4581 = vadd.f32 %v4480, %v4580
          %v4582 = vpop.f32.mrf.mxu0
          %v4583 = vpop.f32.mrf.mxu0
          %v4584 = vadd.f32 %v4480, %v4583
          %v4585 = vpop.f32.mrf.mxu0
          %4586 = vmatprep.mubr.bf16.mxu0 0
          %4587 = vmatmul.mubr.bf16.gmra.mxu0 %v4398
          %v4588 = vpop.f32.mrf.mxu0
          %v4589 = vadd.f32 %v4480, %v4588
          %v4590 = vpop.f32.mrf.mxu0
          %v4591 = vpop.f32.mrf.mxu0
          %v4592 = vadd.f32 %v4480, %v4591
          %v4593 = vpop.f32.mrf.mxu0
          %4594 = vmatprep.mubr.bf16.mxu0 0
          %4595 = vmatmul.mubr.bf16.gmra.mxu0 %v4399
          %v4596 = vpop.f32.mrf.mxu0
          %v4597 = vadd.f32 %v4480, %v4596
          %v4598 = vpop.f32.mrf.mxu0
          %v4599 = vpop.f32.mrf.mxu0
          %v4600 = vadd.f32 %v4480, %v4599
          %v4601 = vpop.f32.mrf.mxu0
          %4602 = vmatprep.mubr.bf16.mxu0 0
          %4603 = vmatmul.mubr.bf16.gmra.mxu0 %v4400
          %v4604 = vpop.f32.mrf.mxu0
          %v4605 = vadd.f32 %v4480, %v4604
          %v4606 = vpop.f32.mrf.mxu0
          %v4607 = vpop.f32.mrf.mxu0
          %v4608 = vadd.f32 %v4480, %v4607
          %v4609 = vpop.f32.mrf.mxu0
          %4610 = vmatprep.mubr.bf16.mxu0 0
          %4611 = vmatmul.mubr.bf16.gmra.mxu0 %v4401
          %v4612 = vpop.f32.mrf.mxu0
          %v4613 = vadd.f32 %v4480, %v4612
          %v4614 = vpop.f32.mrf.mxu0
          %v4615 = vpop.f32.mrf.mxu0
          %v4616 = vadd.f32 %v4480, %v4615
          %v4617 = vpop.f32.mrf.mxu0
          %4618 = vmatprep.mubr.bf16.mxu0 0
          %4619 = vmatmul.mubr.bf16.gmra.mxu0 %v4402
          %v4620 = vpop.f32.mrf.mxu0
          %v4621 = vadd.f32 %v4480, %v4620
          %v4622 = vpop.f32.mrf.mxu0
          %v4623 = vpop.f32.mrf.mxu0
          %v4624 = vadd.f32 %v4480, %v4623
          %v4625 = vpop.f32.mrf.mxu0
          %4626 = vmatprep.mubr.bf16.mxu0 0
          %4627 = vmatmul.mubr.bf16.gmra.mxu0 %v4403
          %v4628 = vpop.f32.mrf.mxu0
          %v4629 = vadd.f32 %v4480, %v4628
          %v4630 = vpop.f32.mrf.mxu0
          %v4631 = vpop.f32.mrf.mxu0
          %v4632 = vadd.f32 %v4480, %v4631
          %v4633 = vpop.f32.mrf.mxu0
          %4634 = vmatprep.mubr.bf16.mxu0 0
          %4635 = vmatmul.mubr.bf16.gmra.mxu0 %v4404
          %v4636 = vpop.f32.mrf.mxu0
          %v4637 = vadd.f32 %v4480, %v4636
          %v4638 = vpop.f32.mrf.mxu0
          %v4639 = vpop.f32.mrf.mxu0
          %v4640 = vadd.f32 %v4480, %v4639
          %v4641 = vpop.f32.mrf.mxu0
          %4642 = vmatprep.mubr.bf16.mxu0 0
          %4643 = vmatmul.mubr.bf16.gmra.mxu0 %v4405
          %v4644 = vpop.f32.mrf.mxu0
          %v4645 = vadd.f32 %v4480, %v4644
          %v4646 = vpop.f32.mrf.mxu0
          %v4647 = vpop.f32.mrf.mxu0
          %v4648 = vadd.f32 %v4480, %v4647
          %v4649 = vpop.f32.mrf.mxu0
          %4650 = vmatprep.mubr.bf16.mxu0 0
          %4651 = vmatmul.mubr.bf16.gmra.mxu0 %v4406
          %v4652 = vpop.f32.mrf.mxu0
          %v4653 = vadd.f32 %v4480, %v4652
          %v4654 = vpop.f32.mrf.mxu0
          %v4655 = vpop.f32.mrf.mxu0
          %v4656 = vadd.f32 %v4480, %v4655
          %v4657 = vpop.f32.mrf.mxu0
          %4658 = vmatprep.mubr.bf16.mxu0 0
          %4659 = vmatmul.mubr.bf16.gmra.mxu0 %v4407
          %v4660 = vpop.f32.mrf.mxu0
          %v4661 = vadd.f32 %v4480, %v4660
          %v4662 = vpop.f32.mrf.mxu0
          %v4663 = vpop.f32.mrf.mxu0
          %v4664 = vadd.f32 %v4480, %v4663
          %v4665 = vpop.f32.mrf.mxu0
          %4666 = vmatprep.mubr.bf16.mxu0 0
          %4667 = vmatmul.mubr.bf16.gmra.mxu0 %v4408
          %v4668 = vpop.f32.mrf.mxu0
          %v4669 = vadd.f32 %v4480, %v4668
          %v4670 = vpop.f32.mrf.mxu0
          %v4671 = vpop.f32.mrf.mxu0
          %v4672 = vadd.f32 %v4480, %v4671
          %v4673 = vpop.f32.mrf.mxu0
          %4674 = vmatprep.mubr.bf16.mxu0 0
          %4675 = vmatmul.mubr.bf16.gmra.mxu0 %v4409
          %v4676 = vpop.f32.mrf.mxu0
          %v4677 = vadd.f32 %v4480, %v4676
          %v4678 = vpop.f32.mrf.mxu0
          %v4679 = vpop.f32.mrf.mxu0
          %v4680 = vadd.f32 %v4480, %v4679
          %v4681 = vpop.f32.mrf.mxu0
          %4682 = vmatprep.mubr.bf16.mxu0 0
          %4683 = vmatmul.mubr.bf16.gmra.mxu0 %v4410
          %v4684 = vpop.f32.mrf.mxu0
          %v4685 = vadd.f32 %v4480, %v4684
          %v4686 = vpop.f32.mrf.mxu0
          %v4687 = vpop.f32.mrf.mxu0
          %v4688 = vadd.f32 %v4480, %v4687
          %v4689 = vpop.f32.mrf.mxu0
          %4690 = vmatprep.mubr.bf16.mxu0 0
          %4691 = vmatmul.mubr.bf16.gmra.mxu0 %v4411
          %v4692 = vpop.f32.mrf.mxu0
          %v4693 = vadd.f32 %v4480, %v4692
          %v4694 = vpop.f32.mrf.mxu0
          %v4695 = vpop.f32.mrf.mxu0
          %v4696 = vadd.f32 %v4480, %v4695
          %v4697 = vpop.f32.mrf.mxu0
          %4698 = vmatprep.mubr.bf16.mxu0 0
          %4699 = vmatmul.mubr.bf16.gmra.mxu0 %v4412
          %v4700 = vpop.f32.mrf.mxu0
          %v4701 = vadd.f32 %v4480, %v4700
          %v4702 = vpop.f32.mrf.mxu0
          %v4703 = vpop.f32.mrf.mxu0
          %v4704 = vadd.f32 %v4480, %v4703
          %v4705 = vpop.f32.mrf.mxu0
          %4706 = vmatprep.mubr.bf16.mxu0 0
          %4707 = vmatmul.mubr.bf16.gmra.mxu0 %v4413
          %v4708 = vpop.f32.mrf.mxu0
          %v4709 = vadd.f32 %v4480, %v4708
          %v4710 = vpop.f32.mrf.mxu0
          %v4711 = vpop.f32.mrf.mxu0
          %v4712 = vadd.f32 %v4480, %v4711
          %v4713 = vpop.f32.mrf.mxu0
          %4714 = vmatprep.mubr.bf16.mxu0 0
          %4715 = vmatmul.mubr.bf16.gmra.mxu0 %v4414
          %v4716 = vpop.f32.mrf.mxu0
          %v4717 = vadd.f32 %v4480, %v4716
          %v4718 = vpop.f32.mrf.mxu0
          %v4719 = vpop.f32.mrf.mxu0
          %v4720 = vadd.f32 %v4480, %v4719
          %v4721 = vpop.f32.mrf.mxu0
          %4722 = vmatprep.mubr.bf16.mxu0 0
          %4723 = vmatmul.mubr.bf16.gmra.mxu0 %v4415
          %v4724 = vpop.f32.mrf.mxu0
          %v4725 = vadd.f32 %v4480, %v4724
          %v4726 = vpop.f32.mrf.mxu0
          %v4727 = vpop.f32.mrf.mxu0
          %v4728 = vadd.f32 %v4480, %v4727
          %v4729 = vpop.f32.mrf.mxu0
          %4730 = vmatprep.mubr.bf16.mxu0 0
          %4731 = vmatmul.mubr.bf16.gmra.mxu0 %v4416
          %v4732 = vpop.f32.mrf.mxu0
          %v4733 = vadd.f32 %v4480, %v4732
          %v4734 = vpop.f32.mrf.mxu0
          %v4735 = vpop.f32.mrf.mxu0
          %v4736 = vadd.f32 %v4480, %v4735
          %v4737 = vpop.f32.mrf.mxu0
          %4738 = vmatprep.mubr.bf16.mxu0 0
          %4739 = vmatmul.mubr.bf16.gmra.mxu0 %v4417
          %v4740 = vpop.f32.mrf.mxu0
          %v4741 = vadd.f32 %v4480, %v4740
          %v4742 = vpop.f32.mrf.mxu0
          %v4743 = vpop.f32.mrf.mxu0
          %v4744 = vadd.f32 %v4480, %v4743
          %v4745 = vpop.f32.mrf.mxu0
          %4746 = vmatprep.mubr.bf16.mxu0 0
          %4747 = vmatmul.mubr.bf16.gmra.mxu0 %v4418
          %v4748 = vpop.f32.mrf.mxu0
          %v4749 = vadd.f32 %v4480, %v4748
          %v4750 = vpop.f32.mrf.mxu0
          %v4751 = vpop.f32.mrf.mxu0
          %v4752 = vadd.f32 %v4480, %v4751
          %v4753 = vpop.f32.mrf.mxu0
          %4754 = vmatprep.mubr.bf16.mxu0 0
          %4755 = vmatmul.mubr.bf16.gmra.mxu0 %v4419
          %v4756 = vpop.f32.mrf.mxu0
          %v4757 = vadd.f32 %v4480, %v4756
          %v4758 = vpop.f32.mrf.mxu0
          %v4759 = vpop.f32.mrf.mxu0
          %v4760 = vadd.f32 %v4480, %v4759
          %v4761 = vpop.f32.mrf.mxu0
          %4762 = vmatprep.mubr.bf16.mxu0 0
          %4763 = vmatmul.mubr.bf16.gmra.mxu0 %v4420
          %v4764 = vpop.f32.mrf.mxu0
          %v4765 = vadd.f32 %v4480, %v4764
          %v4766 = vpop.f32.mrf.mxu0
          %v4767 = vpop.f32.mrf.mxu0
          %v4768 = vadd.f32 %v4480, %v4767
          %v4769 = vpop.f32.mrf.mxu0
          %4770 = vmatprep.mubr.bf16.mxu0 0
          %4771 = vmatmul.mubr.bf16.gmra.mxu0 %v4421
          %v4772 = vpop.f32.mrf.mxu0
          %v4773 = vadd.f32 %v4480, %v4772
          %v4774 = vpop.f32.mrf.mxu0
          %v4775 = vpop.f32.mrf.mxu0
          %v4776 = vadd.f32 %v4480, %v4775
          %v4777 = vpop.f32.mrf.mxu0
          %4778 = vmatprep.mubr.bf16.mxu0 0
          %4779 = vmatmul.mubr.bf16.gmra.mxu0 %v4422
          %v4780 = vpop.f32.mrf.mxu0
          %v4781 = vadd.f32 %v4480, %v4780
          %v4782 = vpop.f32.mrf.mxu0
          %v4783 = vpop.f32.mrf.mxu0
          %v4784 = vadd.f32 %v4480, %v4783
          %v4785 = vpop.f32.mrf.mxu0
          %4786 = vmatprep.mubr.bf16.mxu0 0
          %4787 = vmatmul.mubr.bf16.gmra.mxu0 %v4423
          %v4788 = vpop.f32.mrf.mxu0
          %v4789 = vadd.f32 %v4480, %v4788
          %v4790 = vpop.f32.mrf.mxu0
          %v4791 = vpop.f32.mrf.mxu0
          %v4792 = vadd.f32 %v4480, %v4791
          %v4793 = vpop.f32.mrf.mxu0
          %4794 = vmatprep.mubr.bf16.mxu0 0
          %4795 = vmatmul.mubr.bf16.gmra.mxu0 %v4424
          %v4796 = vpop.f32.mrf.mxu0
          %v4797 = vadd.f32 %v4480, %v4796
          %v4798 = vpop.f32.mrf.mxu0
          %v4799 = vpop.f32.mrf.mxu0
          %v4800 = vadd.f32 %v4480, %v4799
          %v4801 = vpop.f32.mrf.mxu0
          %4802 = vmatprep.mubr.bf16.mxu0 0
          %4803 = vmatmul.mubr.bf16.gmra.mxu0 %v4425
          %v4804 = vpop.f32.mrf.mxu0
          %v4805 = vadd.f32 %v4480, %v4804
          %v4806 = vpop.f32.mrf.mxu0
          %v4807 = vpop.f32.mrf.mxu0
          %v4808 = vadd.f32 %v4480, %v4807
          %v4809 = vpop.f32.mrf.mxu0
          %4810 = vmatprep.mubr.bf16.mxu0 0
          %4811 = vmatmul.mubr.bf16.gmra.mxu0 %v4426
          %v4812 = vpop.f32.mrf.mxu0
          %v4813 = vadd.f32 %v4480, %v4812
          %v4814 = vpop.f32.mrf.mxu0
          %v4815 = vpop.f32.mrf.mxu0
          %v4816 = vadd.f32 %v4480, %v4815
          %v4817 = vpop.f32.mrf.mxu0
          %4818 = vmatprep.mubr.bf16.mxu0 0
          %4819 = vmatmul.mubr.bf16.gmra.mxu0 %v4427
          %v4820 = vpop.f32.mrf.mxu0
          %v4821 = vadd.f32 %v4480, %v4820
          %v4822 = vpop.f32.mrf.mxu0
          %v4823 = vpop.f32.mrf.mxu0
          %v4824 = vadd.f32 %v4480, %v4823
          %v4825 = vpop.f32.mrf.mxu0
          %4826 = vmatprep.mubr.bf16.mxu0 0
          %4827 = vmatmul.mubr.bf16.gmra.mxu0 %v4428
          %v4828 = vpop.f32.mrf.mxu0
          %v4829 = vadd.f32 %v4480, %v4828
          %v4830 = vpop.f32.mrf.mxu0
          %v4831 = vpop.f32.mrf.mxu0
          %v4832 = vadd.f32 %v4480, %v4831
          %v4833 = vpop.f32.mrf.mxu0
          %4834 = vmatprep.mubr.bf16.mxu0 0
          %4835 = vmatmul.mubr.bf16.gmra.mxu0 %v4429
          %v4836 = vpop.f32.mrf.mxu0
          %v4837 = vadd.f32 %v4480, %v4836
          %v4838 = vpop.f32.mrf.mxu0
          %v4839 = vpop.f32.mrf.mxu0
          %v4840 = vadd.f32 %v4480, %v4839
          %v4841 = vpop.f32.mrf.mxu0
          %4842 = vmatprep.mubr.bf16.mxu0 0
          %4843 = vmatmul.mubr.bf16.gmra.mxu0 %v4430
          %v4844 = vpop.f32.mrf.mxu0
          %v4845 = vadd.f32 %v4480, %v4844
          %v4846 = vpop.f32.mrf.mxu0
          %v4847 = vpop.f32.mrf.mxu0
          %v4848 = vadd.f32 %v4480, %v4847
          %v4849 = vpop.f32.mrf.mxu0
          %4850 = vmatprep.mubr.bf16.mxu0 0
          %4851 = vmatmul.mubr.bf16.gmra.mxu0 %v4431
          %v4852 = vpop.f32.mrf.mxu0
          %v4853 = vadd.f32 %v4480, %v4852
          %v4854 = vpop.f32.mrf.mxu0
          %v4855 = vpop.f32.mrf.mxu0
          %v4856 = vadd.f32 %v4480, %v4855
          %v4857 = vpop.f32.mrf.mxu0
          %4858 = vmatprep.mubr.bf16.mxu0 0
          %4859 = vmatmul.mubr.bf16.gmra.mxu0 %v4432
          %v4860 = vpop.f32.mrf.mxu0
          %v4861 = vadd.f32 %v4480, %v4860
          %v4862 = vpop.f32.mrf.mxu0
          %v4863 = vpop.f32.mrf.mxu0
          %v4864 = vadd.f32 %v4480, %v4863
          %v4865 = vpop.f32.mrf.mxu0
          %4866 = vmatprep.mubr.bf16.mxu0 0
          %4867 = vmatmul.mubr.bf16.gmra.mxu0 %v4433
          %v4868 = vpop.f32.mrf.mxu0
          %v4869 = vadd.f32 %v4480, %v4868
          %v4870 = vpop.f32.mrf.mxu0
          %v4871 = vpop.f32.mrf.mxu0
          %v4872 = vadd.f32 %v4480, %v4871
          %v4873 = vpop.f32.mrf.mxu0
          %4874 = vmatprep.mubr.bf16.mxu0 0
          %4875 = vmatmul.mubr.bf16.gmra.mxu0 %v4434
          %v4876 = vpop.f32.mrf.mxu0
          %v4877 = vadd.f32 %v4480, %v4876
          %v4878 = vpop.f32.mrf.mxu0
          %v4879 = vpop.f32.mrf.mxu0
          %v4880 = vadd.f32 %v4480, %v4879
          %v4881 = vpop.f32.mrf.mxu0
          %4882 = vmatprep.mubr.bf16.mxu0 0
          %4883 = vmatmul.mubr.bf16.gmra.mxu0 %v4435
          %v4884 = vpop.f32.mrf.mxu0
          %v4885 = vadd.f32 %v4480, %v4884
          %v4886 = vpop.f32.mrf.mxu0
          %v4887 = vpop.f32.mrf.mxu0
          %v4888 = vadd.f32 %v4480, %v4887
          %v4889 = vpop.f32.mrf.mxu0
          %4890 = vmatprep.mubr.bf16.mxu0 0
          %4891 = vmatmul.mubr.bf16.gmra.mxu0 %v4436
          %v4892 = vpop.f32.mrf.mxu0
          %v4893 = vadd.f32 %v4480, %v4892
          %v4894 = vpop.f32.mrf.mxu0
          %v4895 = vpop.f32.mrf.mxu0
          %v4896 = vadd.f32 %v4480, %v4895
          %v4897 = vpop.f32.mrf.mxu0
          %4898 = vmatprep.mubr.bf16.mxu0 0
          %4899 = vmatmul.mubr.bf16.gmra.mxu0 %v4437
          %v4900 = vpop.f32.mrf.mxu0
          %v4901 = vadd.f32 %v4480, %v4900
          %v4902 = vpop.f32.mrf.mxu0
          %v4903 = vpop.f32.mrf.mxu0
          %v4904 = vadd.f32 %v4480, %v4903
          %v4905 = vpop.f32.mrf.mxu0
          %4906 = vmatprep.mubr.bf16.mxu0 0
          %4907 = vmatmul.mubr.bf16.gmra.mxu0 %v4438
          %v4908 = vpop.f32.mrf.mxu0
          %v4909 = vadd.f32 %v4480, %v4908
          %v4910 = vpop.f32.mrf.mxu0
          %v4911 = vpop.f32.mrf.mxu0
          %v4912 = vadd.f32 %v4480, %v4911
          %v4913 = vpop.f32.mrf.mxu0
          %4914 = vmatprep.mubr.bf16.mxu0 0
          %4915 = vmatmul.mubr.bf16.gmra.mxu0 %v4439
          %v4916 = vpop.f32.mrf.mxu0
          %v4917 = vadd.f32 %v4480, %v4916
          %v4918 = vpop.f32.mrf.mxu0
          %v4919 = vpop.f32.mrf.mxu0
          %v4920 = vadd.f32 %v4480, %v4919
          %v4921 = vpop.f32.mrf.mxu0
          %4922 = vmatprep.mubr.bf16.mxu0 0
          %4923 = vmatmul.mubr.bf16.gmra.mxu0 %v4440
          %v4924 = vpop.f32.mrf.mxu0
          %v4925 = vadd.f32 %v4480, %v4924
          %v4926 = vpop.f32.mrf.mxu0
          %v4927 = vpop.f32.mrf.mxu0
          %v4928 = vadd.f32 %v4480, %v4927
          %v4929 = vpop.f32.mrf.mxu0
          %4930 = vmatprep.mubr.bf16.mxu0 0
          %4931 = vmatmul.mubr.bf16.gmra.mxu0 %v4441
          %v4932 = vpop.f32.mrf.mxu0
          %v4933 = vadd.f32 %v4480, %v4932
          %v4934 = vpop.f32.mrf.mxu0
          %v4935 = vpop.f32.mrf.mxu0
          %v4936 = vadd.f32 %v4480, %v4935
          %v4937 = vpop.f32.mrf.mxu0
          %4938 = vmatprep.mubr.bf16.mxu0 0
          %4939 = vmatmul.mubr.bf16.gmra.mxu0 %v4442
          %v4940 = vpop.f32.mrf.mxu0
          %v4941 = vadd.f32 %v4480, %v4940
          %v4942 = vpop.f32.mrf.mxu0
          %v4943 = vpop.f32.mrf.mxu0
          %v4944 = vadd.f32 %v4480, %v4943
          %v4945 = vpop.f32.mrf.mxu0
          %4946 = vmatprep.mubr.bf16.mxu0 0
          %4947 = vmatmul.mubr.bf16.gmra.mxu0 %v4443
          %v4948 = vpop.f32.mrf.mxu0
          %v4949 = vadd.f32 %v4480, %v4948
          %v4950 = vpop.f32.mrf.mxu0
          %v4951 = vpop.f32.mrf.mxu0
          %v4952 = vadd.f32 %v4480, %v4951
          %v4953 = vpop.f32.mrf.mxu0
          %4954 = vmatprep.mubr.bf16.mxu0 0
          %4955 = vmatmul.mubr.bf16.gmra.mxu0 %v4444
          %v4956 = vpop.f32.mrf.mxu0
          %v4957 = vadd.f32 %v4480, %v4956
          %v4958 = vpop.f32.mrf.mxu0
          %v4959 = vpop.f32.mrf.mxu0
          %v4960 = vadd.f32 %v4480, %v4959
          %v4961 = vpop.f32.mrf.mxu0
          %4962 = vmatprep.mubr.bf16.mxu0 0
          %4963 = vmatmul.mubr.bf16.gmra.mxu0 %v4445
          %v4964 = vpop.f32.mrf.mxu0
          %v4965 = vadd.f32 %v4480, %v4964
          %v4966 = vpop.f32.mrf.mxu0
          %v4967 = vpop.f32.mrf.mxu0
          %v4968 = vadd.f32 %v4480, %v4967
          %v4969 = vpop.f32.mrf.mxu0
          %4970 = vmatprep.mubr.bf16.mxu0 0
          %4971 = vmatmul.mubr.bf16.gmra.mxu0 %v4446
          %v4972 = vpop.f32.mrf.mxu0
          %v4973 = vadd.f32 %v4480, %v4972
          %v4974 = vpop.f32.mrf.mxu0
          %v4975 = vpop.f32.mrf.mxu0
          %v4976 = vadd.f32 %v4480, %v4975
          %v4977 = vpop.f32.mrf.mxu0
          %4978 = vmatprep.mubr.bf16.mxu0 0
          %4979 = vmatmul.mubr.bf16.gmra.mxu0 %v4447
          %v4980 = vpop.f32.mrf.mxu0
          %v4981 = vadd.f32 %v4480, %v4980
          %v4982 = vpop.f32.mrf.mxu0
          %v4983 = vpop.f32.mrf.mxu0
          %v4984 = vadd.f32 %v4480, %v4983
          %v4985 = vpop.f32.mrf.mxu0
          %4986 = vmatprep.mubr.bf16.mxu0 0
          %4987 = vmatmul.mubr.bf16.gmra.mxu0 %v4448
          %v4988 = vpop.f32.mrf.mxu0
          %v4989 = vadd.f32 %v4480, %v4988
          %v4990 = vpop.f32.mrf.mxu0
          %v4991 = vpop.f32.mrf.mxu0
          %v4992 = vadd.f32 %v4480, %v4991
          %v4993 = vpop.f32.mrf.mxu0
          %4994 = vmatprep.mubr.bf16.mxu0 0
          %4995 = vmatmul.mubr.bf16.gmra.mxu0 %v4449
          %v4996 = vpop.f32.mrf.mxu0
          %v4997 = vadd.f32 %v4480, %v4996
          %v4998 = vpop.f32.mrf.mxu0
          %v4999 = vpop.f32.mrf.mxu0
          %v5000 = vadd.f32 %v4480, %v4999
          %v5001 = vpop.f32.mrf.mxu0
          %5002 = vmatprep.mubr.bf16.mxu0 0
          %5003 = vmatmul.mubr.bf16.gmra.mxu0 %v4450
          %v5004 = vpop.f32.mrf.mxu0
          %v5005 = vadd.f32 %v4480, %v5004
          %v5006 = vpop.f32.mrf.mxu0
          %v5007 = vpop.f32.mrf.mxu0
          %v5008 = vadd.f32 %v4480, %v5007
          %v5009 = vpop.f32.mrf.mxu0
          %5010 = vmatprep.mubr.bf16.mxu0 0
          %5011 = vmatmul.mubr.bf16.gmra.mxu0 %v4451
          %v5012 = vpop.f32.mrf.mxu0
          %v5013 = vadd.f32 %v4480, %v5012
          %v5014 = vpop.f32.mrf.mxu0
          %v5015 = vpop.f32.mrf.mxu0
          %v5016 = vadd.f32 %v4480, %v5015
          %v5017 = vpop.f32.mrf.mxu0
          %5018 = vmatprep.mubr.bf16.mxu0 0
          %5019 = vmatmul.mubr.bf16.gmra.mxu0 %v4452
          %v5020 = vpop.f32.mrf.mxu0
          %v5021 = vadd.f32 %v4480, %v5020
          %v5022 = vpop.f32.mrf.mxu0
          %v5023 = vpop.f32.mrf.mxu0
          %v5024 = vadd.f32 %v4480, %v5023
          %v5025 = vpop.f32.mrf.mxu0
          %5026 = vmatprep.mubr.bf16.mxu0 0
          %5027 = vmatmul.mubr.bf16.gmra.mxu0 %v4453
          %v5028 = vpop.f32.mrf.mxu0
          %v5029 = vadd.f32 %v4480, %v5028
          %v5030 = vpop.f32.mrf.mxu0
          %v5031 = vpop.f32.mrf.mxu0
          %v5032 = vadd.f32 %v4480, %v5031
          %v5033 = vpop.f32.mrf.mxu0
          %5034 = vmatprep.mubr.bf16.mxu0 0
          %5035 = vmatmul.mubr.bf16.gmra.mxu0 %v4454
          %v5036 = vpop.f32.mrf.mxu0
          %v5037 = vadd.f32 %v4480, %v5036
          %v5038 = vpop.f32.mrf.mxu0
          %v5039 = vpop.f32.mrf.mxu0
          %v5040 = vadd.f32 %v4480, %v5039
          %v5041 = vpop.f32.mrf.mxu0
          %5042 = vmatprep.mubr.bf16.mxu0 0
          %5043 = vmatmul.mubr.bf16.gmra.mxu0 %v4455
          %v5044 = vpop.f32.mrf.mxu0
          %v5045 = vadd.f32 %v4480, %v5044
          %v5046 = vpop.f32.mrf.mxu0
          %v5047 = vpop.f32.mrf.mxu0
          %v5048 = vadd.f32 %v4480, %v5047
          %v5049 = vpop.f32.mrf.mxu0
          %5050 = vmatprep.mubr.bf16.mxu0 0
          %5051 = vmatmul.mubr.bf16.gmra.mxu0 %v4456
          %v5052 = vpop.f32.mrf.mxu0
          %v5053 = vadd.f32 %v4480, %v5052
          %v5054 = vpop.f32.mrf.mxu0
          %v5055 = vpop.f32.mrf.mxu0
          %v5056 = vadd.f32 %v4480, %v5055
          %v5057 = vpop.f32.mrf.mxu0
          %5058 = vmatprep.mubr.bf16.mxu0 0
          %5059 = vmatmul.mubr.bf16.gmra.mxu0 %v4457
          %v5060 = vpop.f32.mrf.mxu0
          %v5061 = vadd.f32 %v4480, %v5060
          %v5062 = vpop.f32.mrf.mxu0
          %v5063 = vpop.f32.mrf.mxu0
          %v5064 = vadd.f32 %v4480, %v5063
          %v5065 = vpop.f32.mrf.mxu0
          %5066 = vmatprep.mubr.bf16.mxu0 0
          %5067 = vmatmul.mubr.bf16.gmra.mxu0 %v4458
          %v5068 = vpop.f32.mrf.mxu0
          %v5069 = vadd.f32 %v4480, %v5068
          %v5070 = vpop.f32.mrf.mxu0
          %v5071 = vpop.f32.mrf.mxu0
          %v5072 = vadd.f32 %v4480, %v5071
          %v5073 = vpop.f32.mrf.mxu0
          %5074 = vdwg.mxu0
          %5075 = vst [vmem:[%s416] sm:$0xff] %v4565
          %5076 = vst [vmem:[%s416 + $0x8] sm:$0xff] %v4568
          %5077 = vst [vmem:[%s416 + $0x10] sm:$0xff] %v4573
          %5078 = vst [vmem:[%s416 + $0x18] sm:$0xff] %v4576
          %5079 = vst [vmem:[%s416 + $0x20] sm:$0xff] %v4581
          %5080 = vst [vmem:[%s416 + $0x28] sm:$0xff] %v4584
          %5081 = vst [vmem:[%s416 + $0x30] sm:$0xff] %v4589
          %5082 = vst [vmem:[%s416 + $0x38] sm:$0xff] %v4592
          %5083 = vst [vmem:[%s416 + $0x40] sm:$0xff] %v4597
          %5084 = vst [vmem:[%s416 + $0x48] sm:$0xff] %v4600
          %5085 = vst [vmem:[%s416 + $0x50] sm:$0xff] %v4605
          %5086 = vst [vmem:[%s416 + $0x58] sm:$0xff] %v4608
          %5087 = vst [vmem:[%s416 + $0x60] sm:$0xff] %v4613
          %5088 = vst [vmem:[%s416 + $0x68] sm:$0xff] %v4616
          %5089 = vst [vmem:[%s416 + $0x70] sm:$0xff] %v4621
          %5090 = vst [vmem:[%s416 + $0x78] sm:$0xff] %v4624
          %5091 = vst [vmem:[%s416 + $0x80] sm:$0xff] %v4629
          %5092 = vst [vmem:[%s416 + $0x88] sm:$0xff] %v4632
          %5093 = vst [vmem:[%s416 + $0x90] sm:$0xff] %v4637
          %5094 = vst [vmem:[%s416 + $0x98] sm:$0xff] %v4640
          %5095 = vst [vmem:[%s416 + $0xa0] sm:$0xff] %v4645
          %5096 = vst [vmem:[%s416 + $0xa8] sm:$0xff] %v4648
          %5097 = vst [vmem:[%s416 + $0xb0] sm:$0xff] %v4653
          %5098 = vst [vmem:[%s416 + $0xb8] sm:$0xff] %v4656
          %5099 = vst [vmem:[%s416 + $0xc0] sm:$0xff] %v4661
          %5100 = vst [vmem:[%s416 + $0xc8] sm:$0xff] %v4664
          %5101 = vst [vmem:[%s416 + $0xd0] sm:$0xff] %v4669
          %5102 = vst [vmem:[%s416 + $0xd8] sm:$0xff] %v4672
          %5103 = vst [vmem:[%s416 + $0xe0] sm:$0xff] %v4677
          %5104 = vst [vmem:[%s416 + $0xe8] sm:$0xff] %v4680
          %5105 = vst [vmem:[%s416 + $0xf0] sm:$0xff] %v4685
          %5106 = vst [vmem:[%s416 + $0xf8] sm:$0xff] %v4688
          %5107 = vst [vmem:[%s416 + $0x100] sm:$0xff] %v4693
          %5108 = vst [vmem:[%s416 + $0x108] sm:$0xff] %v4696
          %5109 = vst [vmem:[%s416 + $0x110] sm:$0xff] %v4701
          %5110 = vst [vmem:[%s416 + $0x118] sm:$0xff] %v4704
          %5111 = vst [vmem:[%s416 + $0x120] sm:$0xff] %v4709
          %5112 = vst [vmem:[%s416 + $0x128] sm:$0xff] %v4712
          %5113 = vst [vmem:[%s416 + $0x130] sm:$0xff] %v4717
          %5114 = vst [vmem:[%s416 + $0x138] sm:$0xff] %v4720
          %5115 = vst [vmem:[%s416 + $0x140] sm:$0xff] %v4725
          %5116 = vst [vmem:[%s416 + $0x148] sm:$0xff] %v4728
          %5117 = vst [vmem:[%s416 + $0x150] sm:$0xff] %v4733
          %5118 = vst [vmem:[%s416 + $0x158] sm:$0xff] %v4736
          %5119 = vst [vmem:[%s416 + $0x160] sm:$0xff] %v4741
          %5120 = vst [vmem:[%s416 + $0x168] sm:$0xff] %v4744
          %5121 = vst [vmem:[%s416 + $0x170] sm:$0xff] %v4749
          %5122 = vst [vmem:[%s416 + $0x178] sm:$0xff] %v4752
          %5123 = vst [vmem:[%s416 + $0x180] sm:$0xff] %v4757
          %5124 = vst [vmem:[%s416 + $0x188] sm:$0xff] %v4760
          %5125 = vst [vmem:[%s416 + $0x190] sm:$0xff] %v4765
          %5126 = vst [vmem:[%s416 + $0x198] sm:$0xff] %v4768
          %5127 = vst [vmem:[%s416 + $0x1a0] sm:$0xff] %v4773
          %5128 = vst [vmem:[%s416 + $0x1a8] sm:$0xff] %v4776
          %5129 = vst [vmem:[%s416 + $0x1b0] sm:$0xff] %v4781
          %5130 = vst [vmem:[%s416 + $0x1b8] sm:$0xff] %v4784
          %5131 = vst [vmem:[%s416 + $0x1c0] sm:$0xff] %v4789
          %5132 = vst [vmem:[%s416 + $0x1c8] sm:$0xff] %v4792
          %5133 = vst [vmem:[%s416 + $0x1d0] sm:$0xff] %v4797
          %5134 = vst [vmem:[%s416 + $0x1d8] sm:$0xff] %v4800
          %5135 = vst [vmem:[%s416 + $0x1e0] sm:$0xff] %v4805
          %5136 = vst [vmem:[%s416 + $0x1e8] sm:$0xff] %v4808
          %5137 = vst [vmem:[%s416 + $0x1f0] sm:$0xff] %v4813
          %5138 = vst [vmem:[%s416 + $0x1f8] sm:$0xff] %v4816
          %5139 = vst [vmem:[%s416 + $0x200] sm:$0xff] %v4821
          %5140 = vst [vmem:[%s416 + $0x208] sm:$0xff] %v4824
          %5141 = vst [vmem:[%s416 + $0x210] sm:$0xff] %v4829
          %5142 = vst [vmem:[%s416 + $0x218] sm:$0xff] %v4832
          %5143 = vst [vmem:[%s416 + $0x220] sm:$0xff] %v4837
          %5144 = vst [vmem:[%s416 + $0x228] sm:$0xff] %v4840
          %5145 = vst [vmem:[%s416 + $0x230] sm:$0xff] %v4845
          %5146 = vst [vmem:[%s416 + $0x238] sm:$0xff] %v4848
          %5147 = vst [vmem:[%s416 + $0x240] sm:$0xff] %v4853
          %5148 = vst [vmem:[%s416 + $0x248] sm:$0xff] %v4856
          %5149 = vst [vmem:[%s416 + $0x250] sm:$0xff] %v4861
          %5150 = vst [vmem:[%s416 + $0x258] sm:$0xff] %v4864
          %5151 = vst [vmem:[%s416 + $0x260] sm:$0xff] %v4869
          %5152 = vst [vmem:[%s416 + $0x268] sm:$0xff] %v4872
          %5153 = vst [vmem:[%s416 + $0x270] sm:$0xff] %v4877
          %5154 = vst [vmem:[%s416 + $0x278] sm:$0xff] %v4880
          %5155 = vst [vmem:[%s416 + $0x280] sm:$0xff] %v4885
          %5156 = vst [vmem:[%s416 + $0x288] sm:$0xff] %v4888
          %5157 = vst [vmem:[%s416 + $0x290] sm:$0xff] %v4893
          %5158 = vst [vmem:[%s416 + $0x298] sm:$0xff] %v4896
          %5159 = vst [vmem:[%s416 + $0x2a0] sm:$0xff] %v4901
          %5160 = vst [vmem:[%s416 + $0x2a8] sm:$0xff] %v4904
          %5161 = vst [vmem:[%s416 + $0x2b0] sm:$0xff] %v4909
          %5162 = vst [vmem:[%s416 + $0x2b8] sm:$0xff] %v4912
          %5163 = vst [vmem:[%s416 + $0x2c0] sm:$0xff] %v4917
          %5164 = vst [vmem:[%s416 + $0x2c8] sm:$0xff] %v4920
          %5165 = vst [vmem:[%s416 + $0x2d0] sm:$0xff] %v4925
          %5166 = vst [vmem:[%s416 + $0x2d8] sm:$0xff] %v4928
          %5167 = vst [vmem:[%s416 + $0x2e0] sm:$0xff] %v4933
          %5168 = vst [vmem:[%s416 + $0x2e8] sm:$0xff] %v4936
          %5169 = vst [vmem:[%s416 + $0x2f0] sm:$0xff] %v4941
          %5170 = vst [vmem:[%s416 + $0x2f8] sm:$0xff] %v4944
          %5171 = vst [vmem:[%s416 + $0x300] sm:$0xff] %v4949
          %5172 = vst [vmem:[%s416 + $0x308] sm:$0xff] %v4952
          %5173 = vst [vmem:[%s416 + $0x310] sm:$0xff] %v4957
          %5174 = vst [vmem:[%s416 + $0x318] sm:$0xff] %v4960
          %5175 = vst [vmem:[%s416 + $0x320] sm:$0xff] %v4965
          %5176 = vst [vmem:[%s416 + $0x328] sm:$0xff] %v4968
          %5177 = vst [vmem:[%s416 + $0x330] sm:$0xff] %v4973
          %5178 = vst [vmem:[%s416 + $0x338] sm:$0xff] %v4976
          %5179 = vst [vmem:[%s416 + $0x340] sm:$0xff] %v4981
          %5180 = vst [vmem:[%s416 + $0x348] sm:$0xff] %v4984
          %5181 = vst [vmem:[%s416 + $0x350] sm:$0xff] %v4989
          %5182 = vst [vmem:[%s416 + $0x358] sm:$0xff] %v4992
          %5183 = vst [vmem:[%s416 + $0x360] sm:$0xff] %v4997
          %5184 = vst [vmem:[%s416 + $0x368] sm:$0xff] %v5000
          %5185 = vst [vmem:[%s416 + $0x370] sm:$0xff] %v5005
          %5186 = vst [vmem:[%s416 + $0x378] sm:$0xff] %v5008
          %5187 = vst [vmem:[%s416 + $0x380] sm:$0xff] %v5013
          %5188 = vst [vmem:[%s416 + $0x388] sm:$0xff] %v5016
          %5189 = vst [vmem:[%s416 + $0x390] sm:$0xff] %v5021
          %5190 = vst [vmem:[%s416 + $0x398] sm:$0xff] %v5024
          %5191 = vst [vmem:[%s416 + $0x3a0] sm:$0xff] %v5029
          %5192 = vst [vmem:[%s416 + $0x3a8] sm:$0xff] %v5032
          %5193 = vst [vmem:[%s416 + $0x3b0] sm:$0xff] %v5037
          %5194 = vst [vmem:[%s416 + $0x3b8] sm:$0xff] %v5040
          %5195 = vst [vmem:[%s416 + $0x3c0] sm:$0xff] %v5045
          %5196 = vst [vmem:[%s416 + $0x3c8] sm:$0xff] %v5048
          %5197 = vst [vmem:[%s416 + $0x3d0] sm:$0xff] %v5053
          %5198 = vst [vmem:[%s416 + $0x3d8] sm:$0xff] %v5056
          %5199 = vst [vmem:[%s416 + $0x3e0] sm:$0xff] %v5061
          %5200 = vst [vmem:[%s416 + $0x3e8] sm:$0xff] %v5064
          %5201 = vst [vmem:[%s416 + $0x3f0] sm:$0xff] %v5069
          %5202 = vst [vmem:[%s416 + $0x3f8] sm:$0xff] %v5072
        $region100: #{tpu_custom_call.1} parent=55 // pred_fallthru
          _
        %s5203 = sand.u32 %s250, 1
        %s5204 = scalar_lea.sflag [#allocation10], %s5203
        %s5205 = sand.u32 %s250, 1
        %s5206 = smul.addr %s5205, 1024
        %s5207 = scalar_lea.vmem [#allocation16], %s5206
        // Predicated region
        $region101: #{tpu_custom_call.1} parent=55 // pred_check
          %p5208 = pneg %p260
        $region102: #{tpu_custom_call.1} parent=55 // pred_check_branch
          %5210 = sbr.rel (%p5208) target = $region104
        $region103: #{tpu_custom_call.1} parent=55 // pred_region
          %p5211 = scmp.eq.s32.totalorder %s32, 2
          %s5212 = scalar_select %p5211, %s33, 0
          %s5213 = smul.u32 128, %s5212
          %s5215 = ssub.s32 16384, 16384
          %5216 = vsyncadd %s5204, %s5215
          %s5217 = smul.addr %s5213, 128
          %s5218 = scalar_lea.hbm %s9, %s5217
          %s5219 = sshll.u32 %s5207, 4
          %s5220 = int_to_ptr.vmem [resolvable:$true] %s5219
          %5225 = dma.vmem_to_hbm [thread:$0]  %s5220, 16384, %s5218, %s5204, 128, 128, 8
        $region104: #{tpu_custom_call.1} parent=55 // pred_fallthru
          _
      $region56: #{tpu_custom_call.1} parent=5 // pred_fallthru
        _
      %p5226 = scmp.le.s32.totalorder 2, %s23
      // Predicated region
      $region105: #{tpu_custom_call.1} parent=5 // pred_check
        %p5227 = pneg %p5226
      $region106: #{tpu_custom_call.1} parent=5 // pred_check_branch
        %5229 = sbr.rel (%p5227) target = $region108
      $region107: #{tpu_custom_call.1} parent=5 // pred_region
        %s5230 = ssub.s32 %s23, 2
        // Predicated region
        $region109: #{tpu_custom_call.1} parent=107 // pred_check
          %p5231 = pneg %p266
        $region110: #{tpu_custom_call.1} parent=107 // pred_check_branch
          %5233 = sbr.rel (%p5231) target = $region112
        $region111: #{tpu_custom_call.1} parent=107 // pred_region
          %s5234 = sand.u32 %s251, 1
          %s5235 = scalar_lea.sflag [#allocation10], %s5234
          %s5236 = sand.u32 %s251, 1
          %s5237 = smul.addr %s5236, 1024
          %s5238 = scalar_lea.vmem [#allocation16], %s5237
          %5239 = dma.done %s5235, 16384
        $region112: #{tpu_custom_call.1} parent=107 // pred_fallthru
          _
      $region108: #{tpu_custom_call.1} parent=5 // pred_fallthru
        _
    $region6: #{tpu_custom_call.1} parent=1 // loop_footer
      %s27 = sadd.s32 1, %s23
    $region7: #{tpu_custom_call.1} parent=1 // loop_footer_branch
      %22 = sbr.rel target = $region3
    $region8: #{tpu_custom_call.1} parent=1 // loop_exit
      _
    %5240 = vsyncpa [#allocation9], 1
    %s5241 = scalar_lea.sflag [#allocation9], 1
    %5242 = vsyncpa %s5241, 1
    %5243 = vsyncpa [#allocation12], 1
    %5244 = vsyncpa [#allocation15], 1
    %5245 = vsyncpa [#allocation10], 1
    %s5246 = scalar_lea.sflag [#allocation10], 1
    %5247 = vsyncpa %s5246, 1

</llo_original>
